<compile_context>
chip_gen: v7x
topology: tpu7x:2x2x1
jax: 0.10.0
libtpu: 0.0.40
codegen_flags: <defaults>
</compile_context>

<pallas_src>
import functools

import jax
import jax.numpy as jnp
from jax import lax
from jax.experimental import pallas as pl
from jax.experimental.pallas import tpu as pltpu

LANE = 128


def _rup(c, m=LANE):
    return ((c + m - 1) // m) * m


def _vmem_limit_bytes():
    """Per-generation scoped-VMEM limit with a conservative fallback."""
    try:
        info = pltpu.get_tpu_info()
        cap = getattr(info, "vmem_capacity_bytes", None)
        if cap:
            return max(32 << 20, min((int(cap) * 3) // 4, 96 << 20))
    except Exception:
        pass
    return 48 << 20


_VMEM_LIMIT = _vmem_limit_bytes()


def _row_tile(h, row_elems, target_rows):
    """Largest divisor of h with tile*row_elems <= target_rows (>= 1)."""
    best = 1
    for t in range(1, h + 1):
        if h % t == 0 and t * row_elems <= target_rows:
            best = t
    return best


# ------------------------------------------------------------------ kernels --

def conv1_kernel(x_ref, w_ref, scale_ref, bias_ref, o_ref):
    # x_ref: (1, th, W, Cin) f32 (unpadded channels)
    # w_ref: (Cin, C1_p) bf16, scale/bias: (1, C1_p) f32
    # o_ref: (1, th, Wp, C1_p) bf16  -- data lives in cols [1, W+1), zero border
    _, th, w, cin = x_ref.shape
    wp = o_ref.shape[2]
    cout = o_ref.shape[3]
    x = x_ref[0].reshape(th * w, cin).astype(jnp.bfloat16)
    y = jnp.dot(x, w_ref[...], preferred_element_type=jnp.float32)
    y = jnp.maximum(y * scale_ref[...] + bias_ref[...], 0.0)
    y = y.reshape(th, w, cout).astype(o_ref.dtype)
    # zero border columns (conv2's "padding=1" in the W direction), then data
    o_ref[0, :, 0:1, :] = jnp.zeros((th, 1, cout), o_ref.dtype)
    o_ref[0, :, w + 1:wp, :] = jnp.zeros((th, wp - w - 1, cout), o_ref.dtype)
    o_ref[0, :, 1:w + 1, :] = y


def conv2_kernel(c_ref, up_ref, dn_ref, w_ref, scale_ref, bias_ref, o_ref):
    # c_ref : (1, th, Wp, C1_p) bf16  W-padded rows from conv1 (this row tile)
    # up/dn : (1, 1, Wp, C1_p) bf16   clamped neighbor rows (masked in-kernel)
    # w_ref : (9, C1_p, C2_p)  bf16   dense block-diagonal per-tap weights
    # o_ref : (1, th, W, C2_p) bf16
    r = pl.program_id(1)
    nrt = pl.num_programs(1)
    _, th, wp, cin = c_ref.shape
    w_out = o_ref.shape[2]
    cout = o_ref.shape[3]

    center = c_ref[0]                                      # (th, wp, cin)
    zrow = jnp.zeros((1, wp, cin), center.dtype)
    up = jnp.where(r > 0, up_ref[0], zrow)                 # top halo row
    dn = jnp.where(r < nrt - 1, dn_ref[0], zrow)           # bottom halo row
    if th > 1:
        rows_m1 = jnp.concatenate([up, center[:th - 1]], axis=0)
        rows_p1 = jnp.concatenate([center[1:], dn], axis=0)
    else:
        rows_m1, rows_p1 = up, dn

    L = th * wp
    taps = (rows_m1.reshape(L, cin),     # input row y-1
            center.reshape(L, cin),      # input row y
            rows_p1.reshape(L, cin))     # input row y+1

    acc = jnp.zeros((th, w_out, cout), jnp.float32)
    for dx in range(3):
        part = jnp.zeros((L, cout), jnp.float32)
        for dy in range(3):
            part = part + jnp.dot(taps[dy], w_ref[3 * dy + dx],
                                  preferred_element_type=jnp.float32)
        # output col x uses padded col x+dx  ->  one slice per dx (3 total)
        acc = acc + part.reshape(th, wp, cout)[:, dx:dx + w_out, :]

    y = jnp.maximum(acc * scale_ref[...] + bias_ref[...], 0.0)
    o_ref[0] = y.astype(o_ref.dtype)


def conv3_bn_pool_se_kernel(x_ref, w_ref, scale_ref, bias_ref,
                            w1_ref, b1_ref, w2_ref, b2_ref, cmask_ref,
                            o_ref, gate_ref, pool_ref, *, inv_s):
    # conv3 (1x1) + bn3 (no relu), fused global-average-pool accumulator and
    # SE FC1/ReLU/FC2/sigmoid epilogue emitting the gate directly.
    s_idx = pl.program_id(1)
    _, tr, w, cin = x_ref.shape
    cout = o_ref.shape[3]

    x = x_ref[0].reshape(tr * w, cin)
    y = jnp.dot(x, w_ref[...], preferred_element_type=jnp.float32)
    y = y * scale_ref[...] + bias_ref[...]
    o_ref[0] = y.reshape(tr, w, cout).astype(o_ref.dtype)

    @pl.when(s_idx == 0)
    def _():
        pool_ref[...] = jnp.zeros_like(pool_ref)

    pool_ref[...] += jnp.sum(y, axis=0, keepdims=True)

    @pl.when(s_idx == pl.num_programs(1) - 1)
    def _():
        pooled = pool_ref[...] * inv_s                             # (1, cout)
        h = jnp.dot(pooled, w1_ref[...], preferred_element_type=jnp.float32)
        h = jnp.maximum(h + b1_ref[...], 0.0)
        g = jnp.dot(h, w2_ref[...], preferred_element_type=jnp.float32)
        # cmask zeroes the padded channel lanes (sigmoid(0)=0.5 otherwise)
        g = jax.nn.sigmoid(g + b2_ref[...]) * cmask_ref[...]
        gate_ref[...] = g[None]


def se_scale_residual_relu_kernel(x3_ref, res_ref, g_ref, o_ref):
    # x3_ref: (1, tr, W, C2_p) bf16 ; res_ref: (1, tr, W, C2) f32
    # g_ref : (1, 1, C2_p) f32      ; o_ref : (1, tr, W, C2) f32
    c2 = o_ref.shape[3]
    y = x3_ref[0].astype(jnp.float32) * g_ref[0]
    y = y[:, :, :c2] + res_ref[0]
    o_ref[0] = jnp.maximum(y, 0.0)


# ------------------------------------------------------------ pallas wrappers --

def conv1_bn_relu(x, w, scale, bias, *, wp, th):
    N, H, W, Cin = x.shape
    C1_p = w.shape[1]
    return pl.pallas_call(
        conv1_kernel,
        out_shape=jax.ShapeDtypeStruct((N, H, wp, C1_p), jnp.bfloat16),
        grid=(N, H // th),
        in_specs=[
            pl.BlockSpec((1, th, W, Cin), lambda n, r: (n, r, 0, 0)),
            pl.BlockSpec((Cin, C1_p), lambda n, r: (0, 0)),
            pl.BlockSpec((1, C1_p), lambda n, r: (0, 0)),
            pl.BlockSpec((1, C1_p), lambda n, r: (0, 0)),
        ],
        out_specs=pl.BlockSpec((1, th, wp, C1_p), lambda n, r: (n, r, 0, 0)),
        compiler_params=pltpu.CompilerParams(
            dimension_semantics=("parallel", "parallel"),
            vmem_limit_bytes=_VMEM_LIMIT),
        cost_estimate=pl.CostEstimate(
            flops=2 * N * H * W * Cin * C1_p, transcendentals=0,
            bytes_accessed=4 * x.size + 2 * N * H * wp * C1_p + 2 * w.size),
    )(x, w, scale, bias)


def conv2_grouped3x3_bn_relu(x1, w_taps, scale, bias, *, w_out, th):
    N, H, wp, C1_p = x1.shape
    C2_p = w_taps.shape[-1]
    up_map = lambda n, r: (n, jnp.maximum(r * th - 1, 0), 0, 0)
    dn_map = lambda n, r: (n, jnp.minimum(r * th + th, H - 1), 0, 0)
    return pl.pallas_call(
        conv2_kernel,
        out_shape=jax.ShapeDtypeStruct((N, H, w_out, C2_p), jnp.bfloat16),
        grid=(N, H // th),
        in_specs=[
            pl.BlockSpec((1, th, wp, C1_p), lambda n, r: (n, r, 0, 0)),
            pl.BlockSpec((1, 1, wp, C1_p), up_map),
            pl.BlockSpec((1, 1, wp, C1_p), dn_map),
            pl.BlockSpec((9, C1_p, C2_p), lambda n, r: (0, 0, 0)),
            pl.BlockSpec((1, C2_p), lambda n, r: (0, 0)),
            pl.BlockSpec((1, C2_p), lambda n, r: (0, 0)),
        ],
        out_specs=pl.BlockSpec((1, th, w_out, C2_p), lambda n, r: (n, r, 0, 0)),
        compiler_params=pltpu.CompilerParams(
            dimension_semantics=("parallel", "parallel"),
            vmem_limit_bytes=_VMEM_LIMIT),
        cost_estimate=pl.CostEstimate(
            flops=2 * 9 * N * H * w_out * C1_p * C2_p, transcendentals=0,
            bytes_accessed=2 * (x1.size + w_taps.size + N * H * w_out * C2_p)),
    )(x1, x1, x1, w_taps, scale, bias)


def conv3_bn_pool_se(x2, w3, scale, bias, se_w1, se_b1, se_w2, se_b2, cmask,
                     *, th):
    N, H, W, C2_p = x2.shape
    Cr_p = se_w1.shape[1]
    kern = functools.partial(conv3_bn_pool_se_kernel, inv_s=1.0 / (H * W))
    return pl.pallas_call(
        kern,
        out_shape=(jax.ShapeDtypeStruct((N, H, W, C2_p), jnp.bfloat16),
                   jax.ShapeDtypeStruct((N, 1, C2_p), jnp.float32)),
        grid=(N, H // th),
        in_specs=[
            pl.BlockSpec((1, th, W, C2_p), lambda n, r: (n, r, 0, 0)),
            pl.BlockSpec((C2_p, C2_p), lambda n, r: (0, 0)),
            pl.BlockSpec((1, C2_p), lambda n, r: (0, 0)),
            pl.BlockSpec((1, C2_p), lambda n, r: (0, 0)),
            pl.BlockSpec((C2_p, Cr_p), lambda n, r: (0, 0)),
            pl.BlockSpec((1, Cr_p), lambda n, r: (0, 0)),
            pl.BlockSpec((Cr_p, C2_p), lambda n, r: (0, 0)),
            pl.BlockSpec((1, C2_p), lambda n, r: (0, 0)),
            pl.BlockSpec((1, C2_p), lambda n, r: (0, 0)),
        ],
        out_specs=(pl.BlockSpec((1, th, W, C2_p), lambda n, r: (n, r, 0, 0)),
                   pl.BlockSpec((1, 1, C2_p), lambda n, r: (n, 0, 0))),
        scratch_shapes=[pltpu.VMEM((1, C2_p), jnp.float32)],
        compiler_params=pltpu.CompilerParams(
            dimension_semantics=("parallel", "arbitrary"),
            vmem_limit_bytes=_VMEM_LIMIT),
        cost_estimate=pl.CostEstimate(
            flops=2 * N * H * W * C2_p * C2_p, transcendentals=2 * N * C2_p,
            bytes_accessed=2 * (2 * x2.size + w3.size)),
    )(x2, w3, scale, bias, se_w1, se_b1, se_w2, se_b2, cmask)


def se_scale_residual_relu(x3, res, gate, *, c2, th):
    N, H, W, C2_p = x3.shape
    return pl.pallas_call(
        se_scale_residual_relu_kernel,
        out_shape=jax.ShapeDtypeStruct((N, H, W, c2), jnp.float32),
        grid=(N, H // th),
        in_specs=[
            pl.BlockSpec((1, th, W, C2_p), lambda n, r: (n, r, 0, 0)),
            pl.BlockSpec((1, th, W, c2), lambda n, r: (n, r, 0, 0)),
            pl.BlockSpec((1, 1, C2_p), lambda n, r: (n, 0, 0)),
        ],
        out_specs=pl.BlockSpec((1, th, W, c2), lambda n, r: (n, r, 0, 0)),
        compiler_params=pltpu.CompilerParams(
            dimension_semantics=("parallel", "parallel"),
            vmem_limit_bytes=_VMEM_LIMIT),
    )(x3, res, gate)


# --------------------------------------------------------------- full forward --

def se_bottleneck_forward(x_nchw, p, cfg):
    """SEBottleneck.forward with downsample=None, stride=1."""
    N, Cin, H, W = x_nchw.shape
    C2 = cfg["C2"]
    assert Cin == C2, "downsample=None requires inplanes == planes * 4"
    wp = _rup(W + 2, 8)  # padded width (conv2 halo) rounded for free reshapes

    x = jnp.transpose(x_nchw, (0, 2, 3, 1))               # NHWC f32

    th1 = _row_tile(H, W, 1024)
    out1 = conv1_bn_relu(x, p["w1"], p["bn1_scale"], p["bn1_bias"],
                         wp=wp, th=th1)                    # (N,H,Wp,C1_p) bf16

    th2 = _row_tile(H, wp, 512)
    out2 = conv2_grouped3x3_bn_relu(out1, p["w2_dense"], p["bn2_scale"],
                                    p["bn2_bias"], w_out=W, th=th2)

    th3 = _row_tile(H, W, 1024)
    out3, gate = conv3_bn_pool_se(out2, p["w3"], p["bn3_scale"], p["bn3_bias"],
                                  p["se_w1"], p["se_b1"], p["se_w2"],
                                  p["se_b2"], p["cmask"], th=th3)

    thf = _row_tile(H, W, 1024)
    out = se_scale_residual_relu(out3, x, gate, c2=C2, th=thf)  # (N,H,W,C2) f32
    return jnp.transpose(out, (0, 3, 1, 2))                # back to NCHW


# ---------------------------------------------------------------- parameters --

def fold_bn(gamma, beta, mean, var, eps=1e-5):
    scale = gamma / jnp.sqrt(var + eps)
    bias = beta - mean * scale
    return scale, bias


def _pad2(a, r, c):
    return jnp.zeros((r, c), a.dtype).at[:a.shape[0], :a.shape[1]].set(a)


def init_params(key, inplanes, planes, groups, reduction):
    C1, C2 = planes * 2, planes * 4
    Cr = C2 // reduction
    assert C1 % groups == 0 and C2 % groups == 0
    ks = jax.random.split(key, 12)

    def nrm(k, shape, s=0.1):
        return s * jax.random.normal(k, shape, jnp.float32)

    raw = {
        "conv1_w": nrm(ks[0], (C1, inplanes, 1, 1)),
        "conv2_w": nrm(ks[1], (C2, C1 // groups, 3, 3)),
        "conv3_w": nrm(ks[2], (C2, C2, 1, 1)),
        "se_fc1_w": nrm(ks[3], (Cr, C2, 1, 1)),
        "se_fc1_b": nrm(ks[4], (Cr,)),
        "se_fc2_w": nrm(ks[5], (C2, Cr, 1, 1)),
        "se_fc2_b": nrm(ks[6], (C2,)),
    }
    for i, (name, C) in enumerate([("bn1", C1), ("bn2", C2), ("bn3", C2)]):
        kk = jax.random.split(ks[7 + i], 4)
        raw[name] = dict(
            gamma=1.0 + 0.1 * jax.random.normal(kk[0], (C,), jnp.float32),
            beta=0.1 * jax.random.normal(kk[1], (C,), jnp.float32),
            mean=0.1 * jax.random.normal(kk[2], (C,), jnp.float32),
            var=jnp.abs(jax.random.normal(kk[3], (C,), jnp.float32)) + 0.5,
        )

    C1_p, C2_p, Cr_p = _rup(C1), _rup(C2), _rup(Cr)

    p = {}
    # 1x1 convs -> lane-padded matmul weights (bf16 MXU operands).
    # conv1 keeps unpadded input rows (kernel contracts over real Cin).
    p["w1"] = _pad2(raw["conv1_w"][:, :, 0, 0].T, inplanes, C1_p).astype(jnp.bfloat16)
    p["w3"] = _pad2(raw["conv3_w"][:, :, 0, 0].T, C2_p, C2_p).astype(jnp.bfloat16)

    # grouped 3x3 conv -> dense block-diagonal per-tap weights (9, C1_p, C2_p)
    Cin_g, Cout_g = C1 // groups, C2 // groups
    w_dense = jnp.zeros((3, 3, C1_p, C2_p), jnp.float32)
    for g in range(groups):
        blk = raw["conv2_w"][g * Cout_g:(g + 1) * Cout_g]   # (Cout_g,Cin_g,3,3)
        blk = jnp.transpose(blk, (2, 3, 1, 0))              # (3,3,Cin_g,Cout_g)
        w_dense = w_dense.at[:, :, g * Cin_g:(g + 1) * Cin_g,
                             g * Cout_g:(g + 1) * Cout_g].set(blk)
    p["w2_dense"] = w_dense.reshape(9, C1_p, C2_p).astype(jnp.bfloat16)

    # folded BN scale/bias kept in f32; padded lanes get scale=bias=0
    for name, Cp in (("bn1", C1_p), ("bn2", C2_p), ("bn3", C2_p)):
        s, b = fold_bn(**raw[name])
        p[f"{name}_scale"] = _pad2(s[None, :], 1, Cp)
        p[f"{name}_bias"] = _pad2(b[None, :], 1, Cp)

    # SE FC weights (tiny, kept f32) + channel mask zeroing padded gate lanes
    p["se_w1"] = _pad2(raw["se_fc1_w"][:, :, 0, 0].T, C2_p, Cr_p)
    p["se_b1"] = _pad2(raw["se_fc1_b"][None, :], 1, Cr_p)
    p["se_w2"] = _pad2(raw["se_fc2_w"][:, :, 0, 0].T, Cr_p, C2_p)
    p["se_b2"] = _pad2(raw["se_fc2_b"][None, :], 1, C2_p)
    p["cmask"] = jnp.zeros((1, C2_p), jnp.float32).at[0, :C2].set(1.0)

    cfg = dict(inplanes=inplanes, C1=C1, C2=C2, Cr=Cr, groups=groups)
    return raw, p, cfg


# -------------------------------------------------------------- pure-JAX ref --

def reference_forward(x, raw, groups):
    def bn(y, d):
        g, b, m, v = d["gamma"], d["beta"], d["mean"], d["var"]
        return ((y - m[None, :, None, None])
                / jnp.sqrt(v[None, :, None, None] + 1e-5)
                * g[None, :, None, None] + b[None, :, None, None])

    dn = ("NCHW", "OIHW", "NCHW")
    out = lax.conv_general_dilated(x, raw["conv1_w"], (1, 1), "VALID",
                                   dimension_numbers=dn)
    out = jax.nn.relu(bn(out, raw["bn1"]))
    out = lax.conv_general_dilated(out, raw["conv2_w"], (1, 1),
                                   ((1, 1), (1, 1)), dimension_numbers=dn,
                                   feature_group_count=groups)
    out = jax.nn.relu(bn(out, raw["bn2"]))
    out = lax.conv_general_dilated(out, raw["conv3_w"], (1, 1), "VALID",
                                   dimension_numbers=dn)
    out = bn(out, raw["bn3"])
    pooled = jnp.mean(out, axis=(2, 3))
    h = jax.nn.relu(pooled @ raw["se_fc1_w"][:, :, 0, 0].T + raw["se_fc1_b"])
    s = jax.nn.sigmoid(h @ raw["se_fc2_w"][:, :, 0, 0].T + raw["se_fc2_b"])
    out = out * s[:, :, None, None] + x
    return jax.nn.relu(out)


# ---------------------------------------------------------------------- main --

if __name__ == "__main__":
    # inplanes must equal planes*expansion (=planes*4) because downsample=None.
    inplanes, planes, groups, reduction = 16, 4, 2, 4
    N, H, W = 2, 8, 8

    key = jax.random.PRNGKey(0)
    k_x, k_p = jax.random.split(key)
    x = jax.random.normal(k_x, (N, inplanes, H, W), jnp.float32)   # NCHW input

    raw, params, cfg = init_params(k_p, inplanes, planes, groups, reduction)

    fwd = jax.jit(lambda xx: se_bottleneck_forward(xx, params, cfg))
    out = jax.block_until_ready(fwd(x))
    ref = jax.block_until_ready(reference_forward(x, raw, groups))

    assert out.shape == (N, planes * 4, H, W), out.shape
    err = float(jnp.max(jnp.abs(out - ref)))
    # bf16 activations/weights with f32 accumulate -> loosened tolerance
    assert err < 5e-2, err
    print("KERNEL_OK")
</pallas_src>

<mosaic_0001>
module attributes {stable_mosaic.version = 11 : i64} {
  func.func @conv1_kernel(%arg0: i32, %arg1: i32, %arg2: memref<1x8x8x16xf32, #tpu.memory_space<vmem>>, %arg3: memref<16x128xbf16, #tpu.memory_space<vmem>>, %arg4: memref<1x128xf32, #tpu.memory_space<vmem>>, %arg5: memref<1x128xf32, #tpu.memory_space<vmem>>, %arg6: memref<1x8x16x128xbf16, #tpu.memory_space<vmem>>) attributes {dimension_semantics = [#tpu.dimension_semantics<parallel>, #tpu.dimension_semantics<parallel>], iteration_bounds = array<i64: 2, 1>, scalar_prefetch = 0 : i64, scratch_operands = 0 : i64, tpu.core_type = #tpu.core_type<tc>, window_params = [{transform_indices = @transform_0, window_bounds = array<i64: 1, 8, 8, 16>}, {pipeline_mode = #tpu.pipeline_mode<synchronous>, transform_indices = @transform_1, window_bounds = array<i64: 16, 128>}, {pipeline_mode = #tpu.pipeline_mode<synchronous>, transform_indices = @transform_2, window_bounds = array<i64: 1, 128>}, {pipeline_mode = #tpu.pipeline_mode<synchronous>, transform_indices = @transform_3, window_bounds = array<i64: 1, 128>}, {transform_indices = @transform_4, window_bounds = array<i64: 1, 8, 16, 128>}]} {
    %c0 = arith.constant 0 : index
    %c0_0 = arith.constant 0 : index
    %c0_1 = arith.constant 0 : index
    %c0_2 = arith.constant 0 : index
    %0 = vector.load %arg2[%c0, %c0_0, %c0_1, %c0_2] : memref<1x8x8x16xf32, #tpu.memory_space<vmem>>, vector<1x8x8x16xf32>
    %1 = vector.shape_cast %0 : vector<1x8x8x16xf32> to vector<8x8x16xf32>
    %2 = vector.shape_cast %1 : vector<8x8x16xf32> to vector<64x16xf32>
    %3 = arith.truncf %2 : vector<64x16xf32> to vector<64x16xbf16>
    %c0_3 = arith.constant 0 : index
    %c0_4 = arith.constant 0 : index
    %4 = vector.load %arg3[%c0_3, %c0_4] : memref<16x128xbf16, #tpu.memory_space<vmem>>, vector<16x128xbf16>
    %cst = arith.constant dense<0.000000e+00> : vector<64x128xf32>
    %5 = tpu.matmul %3, %4, %cst {dimension_numbers = #tpu.dot_dimension_numbers<[1], [0], [0], [1], [0, 0, 1, 1], [], []>} : vector<64x16xbf16>, vector<16x128xbf16>, vector<64x128xf32> -> vector<64x128xf32>
    %c0_5 = arith.constant 0 : index
    %c0_6 = arith.constant 0 : index
    %6 = vector.load %arg4[%c0_5, %c0_6] : memref<1x128xf32, #tpu.memory_space<vmem>>, vector<1x128xf32>
    %7 = vector.broadcast %6 : vector<1x128xf32> to vector<64x128xf32>
    %8 = arith.mulf %5, %7 : vector<64x128xf32>
    %c0_7 = arith.constant 0 : index
    %c0_8 = arith.constant 0 : index
    %9 = vector.load %arg5[%c0_7, %c0_8] : memref<1x128xf32, #tpu.memory_space<vmem>>, vector<1x128xf32>
    %10 = vector.broadcast %9 : vector<1x128xf32> to vector<64x128xf32>
    %11 = arith.addf %8, %10 : vector<64x128xf32>
    %cst_9 = arith.constant 0.000000e+00 : f32
    %12 = vector.broadcast %cst_9 : f32 to vector<64x128xf32>
    %13 = arith.maximumf %11, %12 : vector<64x128xf32>
    %14 = vector.shape_cast %13 : vector<64x128xf32> to vector<8x8x128xf32>
    %15 = arith.truncf %14 : vector<8x8x128xf32> to vector<8x8x128xbf16>
    %cst_10 = arith.constant 0.000000e+00 : bf16
    %16 = vector.broadcast %cst_10 : bf16 to vector<8x1x128xbf16>
    %c0_11 = arith.constant 0 : index
    %c0_12 = arith.constant 0 : index
    %c0_13 = arith.constant 0 : index
    %c0_14 = arith.constant 0 : index
    %17 = vector.load %arg6[%c0_11, %c0_12, %c0_13, %c0_14] : memref<1x8x16x128xbf16, #tpu.memory_space<vmem>>, vector<1x8x1x128xbf16>
    %18 = vector.shape_cast %17 : vector<1x8x1x128xbf16> to vector<8x1x128xbf16>
    %19 = vector.shape_cast %16 : vector<8x1x128xbf16> to vector<1x8x1x128xbf16>
    tpu.vector_store %arg6[%c0_11, %c0_12, %c0_13, %c0_14], %19 {strides = array<i32>} : memref<1x8x16x128xbf16, #tpu.memory_space<vmem>>, vector<1x8x1x128xbf16>,
    %cst_15 = arith.constant 0.000000e+00 : bf16
    %20 = vector.broadcast %cst_15 : bf16 to vector<8x7x128xbf16>
    %c0_16 = arith.constant 0 : index
    %c0_17 = arith.constant 0 : index
    %c9 = arith.constant 9 : index
    %c0_18 = arith.constant 0 : index
    %21 = vector.load %arg6[%c0_16, %c0_17, %c9, %c0_18] : memref<1x8x16x128xbf16, #tpu.memory_space<vmem>>, vector<1x8x7x128xbf16>
    %22 = vector.shape_cast %21 : vector<1x8x7x128xbf16> to vector<8x7x128xbf16>
    %23 = vector.shape_cast %20 : vector<8x7x128xbf16> to vector<1x8x7x128xbf16>
    tpu.vector_store %arg6[%c0_16, %c0_17, %c9, %c0_18], %23 {strides = array<i32>} : memref<1x8x16x128xbf16, #tpu.memory_space<vmem>>, vector<1x8x7x128xbf16>,
    %c0_19 = arith.constant 0 : index
    %c0_20 = arith.constant 0 : index
    %c1 = arith.constant 1 : index
    %c0_21 = arith.constant 0 : index
    %24 = vector.load %arg6[%c0_19, %c0_20, %c1, %c0_21] : memref<1x8x16x128xbf16, #tpu.memory_space<vmem>>, vector<1x8x8x128xbf16>
    %25 = vector.shape_cast %24 : vector<1x8x8x128xbf16> to vector<8x8x128xbf16>
    %26 = vector.shape_cast %15 : vector<8x8x128xbf16> to vector<1x8x8x128xbf16>
    tpu.vector_store %arg6[%c0_19, %c0_20, %c1, %c0_21], %26 {strides = array<i32>} : memref<1x8x16x128xbf16, #tpu.memory_space<vmem>>, vector<1x8x8x128xbf16>,
    return
  }
  func.func @transform_0(%arg0: i32, %arg1: i32) -> (i32, i32, i32, i32) {
    %c0_i32 = arith.constant 0 : i32
    %c0_i32_0 = arith.constant 0 : i32
    %c0_i32_1 = arith.constant 0 : i32
    return %arg0, %arg1, %c0_i32, %c0_i32_0 : i32, i32, i32, i32
  }
  func.func @transform_1(%arg0: i32, %arg1: i32) -> (i32, i32) {
    %c0_i32 = arith.constant 0 : i32
    %c0_i32_0 = arith.constant 0 : i32
    %c0_i32_1 = arith.constant 0 : i32
    return %c0_i32, %c0_i32_0 : i32, i32
  }
  func.func @transform_2(%arg0: i32, %arg1: i32) -> (i32, i32) {
    %c0_i32 = arith.constant 0 : i32
    %c0_i32_0 = arith.constant 0 : i32
    %c0_i32_1 = arith.constant 0 : i32
    return %c0_i32, %c0_i32_0 : i32, i32
  }
  func.func @transform_3(%arg0: i32, %arg1: i32) -> (i32, i32) {
    %c0_i32 = arith.constant 0 : i32
    %c0_i32_0 = arith.constant 0 : i32
    %c0_i32_1 = arith.constant 0 : i32
    return %c0_i32, %c0_i32_0 : i32, i32
  }
  func.func @transform_4(%arg0: i32, %arg1: i32) -> (i32, i32, i32, i32) {
    %c0_i32 = arith.constant 0 : i32
    %c0_i32_0 = arith.constant 0 : i32
    %c0_i32_1 = arith.constant 0 : i32
    return %arg0, %arg1, %c0_i32, %c0_i32_0 : i32, i32, i32, i32
  }
}

module attributes {stable_mosaic.version = 11 : i64} {
  func.func @se_scale_residual_relu_kernel(%arg0: i32, %arg1: i32, %arg2: memref<1x8x8x128xbf16, #tpu.memory_space<vmem>>, %arg3: memref<1x8x8x16xf32, #tpu.memory_space<vmem>>, %arg4: memref<1x1x128xf32, #tpu.memory_space<vmem>>, %arg5: memref<1x8x8x16xf32, #tpu.memory_space<vmem>>) attributes {dimension_semantics = [#tpu.dimension_semantics<parallel>, #tpu.dimension_semantics<parallel>], iteration_bounds = array<i64: 2, 1>, scalar_prefetch = 0 : i64, scratch_operands = 0 : i64, tpu.core_type = #tpu.core_type<tc>, window_params = [{transform_indices = @transform_0, window_bounds = array<i64: 1, 8, 8, 128>}, {transform_indices = @transform_1, window_bounds = array<i64: 1, 8, 8, 16>}, {transform_indices = @transform_2, window_bounds = array<i64: 1, 1, 128>}, {transform_indices = @transform_3, window_bounds = array<i64: 1, 8, 8, 16>}]} {
    %c0 = arith.constant 0 : index
    %c0_0 = arith.constant 0 : index
    %c0_1 = arith.constant 0 : index
    %c0_2 = arith.constant 0 : index
    %0 = vector.load %arg2[%c0, %c0_0, %c0_1, %c0_2] : memref<1x8x8x128xbf16, #tpu.memory_space<vmem>>, vector<1x8x8x128xbf16>
    %1 = vector.shape_cast %0 : vector<1x8x8x128xbf16> to vector<8x8x128xbf16>
    %2 = arith.extf %1 : vector<8x8x128xbf16> to vector<8x8x128xf32>
    %c0_3 = arith.constant 0 : index
    %c0_4 = arith.constant 0 : index
    %c0_5 = arith.constant 0 : index
    %3 = vector.load %arg4[%c0_3, %c0_4, %c0_5] : memref<1x1x128xf32, #tpu.memory_space<vmem>>, vector<1x1x128xf32>
    %4 = vector.shape_cast %3 : vector<1x1x128xf32> to vector<1x128xf32>
    %5 = vector.shape_cast %4 : vector<1x128xf32> to vector<1x1x128xf32>
    %6 = vector.broadcast %5 : vector<1x1x128xf32> to vector<8x8x128xf32>
    %7 = arith.mulf %2, %6 : vector<8x8x128xf32>
    %8 = vector.extract_strided_slice %7 {offsets = [0, 0, 0], sizes = [8, 8, 16], strides = [1, 1, 1]} : vector<8x8x128xf32> to vector<8x8x16xf32>
    %c0_6 = arith.constant 0 : index
    %c0_7 = arith.constant 0 : index
    %c0_8 = arith.constant 0 : index
    %c0_9 = arith.constant 0 : index
    %9 = vector.load %arg3[%c0_6, %c0_7, %c0_8, %c0_9] : memref<1x8x8x16xf32, #tpu.memory_space<vmem>>, vector<1x8x8x16xf32>
    %10 = vector.shape_cast %9 : vector<1x8x8x16xf32> to vector<8x8x16xf32>
    %11 = arith.addf %8, %10 : vector<8x8x16xf32>
    %cst = arith.constant 0.000000e+00 : f32
    %12 = vector.broadcast %cst : f32 to vector<8x8x16xf32>
    %13 = arith.maximumf %11, %12 : vector<8x8x16xf32>
    %c0_10 = arith.constant 0 : index
    %c0_11 = arith.constant 0 : index
    %c0_12 = arith.constant 0 : index
    %c0_13 = arith.constant 0 : index
    %14 = vector.load %arg5[%c0_10, %c0_11, %c0_12, %c0_13] : memref<1x8x8x16xf32, #tpu.memory_space<vmem>>, vector<1x8x8x16xf32>
    %15 = vector.shape_cast %14 : vector<1x8x8x16xf32> to vector<8x8x16xf32>
    %16 = vector.shape_cast %13 : vector<8x8x16xf32> to vector<1x8x8x16xf32>
    tpu.vector_store %arg5[%c0_10, %c0_11, %c0_12, %c0_13], %16 {strides = array<i32>} : memref<1x8x8x16xf32, #tpu.memory_space<vmem>>, vector<1x8x8x16xf32>,
    return
  }
  func.func @transform_0(%arg0: i32, %arg1: i32) -> (i32, i32, i32, i32) {
    %c0_i32 = arith.constant 0 : i32
    %c0_i32_0 = arith.constant 0 : i32
    %c0_i32_1 = arith.constant 0 : i32
    return %arg0, %arg1, %c0_i32, %c0_i32_0 : i32, i32, i32, i32
  }
  func.func @transform_1(%arg0: i32, %arg1: i32) -> (i32, i32, i32, i32) {
    %c0_i32 = arith.constant 0 : i32
    %c0_i32_0 = arith.constant 0 : i32
    %c0_i32_1 = arith.constant 0 : i32
    return %arg0, %arg1, %c0_i32, %c0_i32_0 : i32, i32, i32, i32
  }
  func.func @transform_2(%arg0: i32, %arg1: i32) -> (i32, i32, i32) {
    %c0_i32 = arith.constant 0 : i32
    %c0_i32_0 = arith.constant 0 : i32
    %c0_i32_1 = arith.constant 0 : i32
    return %arg0, %c0_i32, %c0_i32_0 : i32, i32, i32
  }
  func.func @transform_3(%arg0: i32, %arg1: i32) -> (i32, i32, i32, i32) {
    %c0_i32 = arith.constant 0 : i32
    %c0_i32_0 = arith.constant 0 : i32
    %c0_i32_1 = arith.constant 0 : i32
    return %arg0, %arg1, %c0_i32, %c0_i32_0 : i32, i32, i32, i32
  }
}

module attributes {stable_mosaic.version = 11 : i64} {
  func.func @conv3_bn_pool_se_kernel(%arg0: i32, %arg1: i32, %arg2: memref<1x8x8x128xbf16, #tpu.memory_space<vmem>>, %arg3: memref<128x128xbf16, #tpu.memory_space<vmem>>, %arg4: memref<1x128xf32, #tpu.memory_space<vmem>>, %arg5: memref<1x128xf32, #tpu.memory_space<vmem>>, %arg6: memref<128x128xf32, #tpu.memory_space<vmem>>, %arg7: memref<1x128xf32, #tpu.memory_space<vmem>>, %arg8: memref<128x128xf32, #tpu.memory_space<vmem>>, %arg9: memref<1x128xf32, #tpu.memory_space<vmem>>, %arg10: memref<1x128xf32, #tpu.memory_space<vmem>>, %arg11: memref<1x8x8x128xbf16, #tpu.memory_space<vmem>>, %arg12: memref<1x1x128xf32, #tpu.memory_space<vmem>>, %arg13: memref<1x128xf32, #tpu.memory_space<vmem>>) attributes {dimension_semantics = [#tpu.dimension_semantics<parallel>, #tpu.dimension_semantics<arbitrary>], iteration_bounds = array<i64: 2, 1>, scalar_prefetch = 0 : i64, scratch_operands = 1 : i64, tpu.core_type = #tpu.core_type<tc>, window_params = [{transform_indices = @transform_0, window_bounds = array<i64: 1, 8, 8, 128>}, {pipeline_mode = #tpu.pipeline_mode<synchronous>, transform_indices = @transform_1, window_bounds = array<i64: 128, 128>}, {pipeline_mode = #tpu.pipeline_mode<synchronous>, transform_indices = @transform_2, window_bounds = array<i64: 1, 128>}, {pipeline_mode = #tpu.pipeline_mode<synchronous>, transform_indices = @transform_3, window_bounds = array<i64: 1, 128>}, {pipeline_mode = #tpu.pipeline_mode<synchronous>, transform_indices = @transform_4, window_bounds = array<i64: 128, 128>}, {pipeline_mode = #tpu.pipeline_mode<synchronous>, transform_indices = @transform_5, window_bounds = array<i64: 1, 128>}, {pipeline_mode = #tpu.pipeline_mode<synchronous>, transform_indices = @transform_6, window_bounds = array<i64: 128, 128>}, {pipeline_mode = #tpu.pipeline_mode<synchronous>, transform_indices = @transform_7, window_bounds = array<i64: 1, 128>}, {pipeline_mode = #tpu.pipeline_mode<synchronous>, transform_indices = @transform_8, window_bounds = array<i64: 1, 128>}, {transform_indices = @transform_9, window_bounds = array<i64: 1, 8, 8, 128>}, {transform_indices = @transform_10, window_bounds = array<i64: 1, 1, 128>}]} {
    %c0 = arith.constant 0 : index
    %c0_0 = arith.constant 0 : index
    %c0_1 = arith.constant 0 : index
    %c0_2 = arith.constant 0 : index
    %0 = vector.load %arg2[%c0, %c0_0, %c0_1, %c0_2] : memref<1x8x8x128xbf16, #tpu.memory_space<vmem>>, vector<1x8x8x128xbf16>
    %1 = vector.shape_cast %0 : vector<1x8x8x128xbf16> to vector<8x8x128xbf16>
    %2 = vector.shape_cast %1 : vector<8x8x128xbf16> to vector<64x128xbf16>
    %c0_3 = arith.constant 0 : index
    %c0_4 = arith.constant 0 : index
    %3 = vector.load %arg3[%c0_3, %c0_4] : memref<128x128xbf16, #tpu.memory_space<vmem>>, vector<128x128xbf16>
    %cst = arith.constant dense<0.000000e+00> : vector<64x128xf32>
    %4 = tpu.matmul %2, %3, %cst {dimension_numbers = #tpu.dot_dimension_numbers<[1], [0], [0], [1], [0, 0, 1, 1], [], []>} : vector<64x128xbf16>, vector<128x128xbf16>, vector<64x128xf32> -> vector<64x128xf32>
    %c0_5 = arith.constant 0 : index
    %c0_6 = arith.constant 0 : index
    %5 = vector.load %arg4[%c0_5, %c0_6] : memref<1x128xf32, #tpu.memory_space<vmem>>, vector<1x128xf32>
    %6 = vector.broadcast %5 : vector<1x128xf32> to vector<64x128xf32>
    %7 = arith.mulf %4, %6 : vector<64x128xf32>
    %c0_7 = arith.constant 0 : index
    %c0_8 = arith.constant 0 : index
    %8 = vector.load %arg5[%c0_7, %c0_8] : memref<1x128xf32, #tpu.memory_space<vmem>>, vector<1x128xf32>
    %9 = vector.broadcast %8 : vector<1x128xf32> to vector<64x128xf32>
    %10 = arith.addf %7, %9 : vector<64x128xf32>
    %11 = vector.shape_cast %10 : vector<64x128xf32> to vector<8x8x128xf32>
    %12 = arith.truncf %11 : vector<8x8x128xf32> to vector<8x8x128xbf16>
    %c0_9 = arith.constant 0 : index
    %c0_10 = arith.constant 0 : index
    %c0_11 = arith.constant 0 : index
    %c0_12 = arith.constant 0 : index
    %13 = vector.load %arg11[%c0_9, %c0_10, %c0_11, %c0_12] : memref<1x8x8x128xbf16, #tpu.memory_space<vmem>>, vector<1x8x8x128xbf16>
    %14 = vector.shape_cast %13 : vector<1x8x8x128xbf16> to vector<8x8x128xbf16>
    %15 = vector.shape_cast %12 : vector<8x8x128xbf16> to vector<1x8x8x128xbf16>
    tpu.vector_store %arg11[%c0_9, %c0_10, %c0_11, %c0_12], %15 {strides = array<i32>} : memref<1x8x8x128xbf16, #tpu.memory_space<vmem>>, vector<1x8x8x128xbf16>,
    %c0_i32 = arith.constant 0 : i32
    %16 = arith.cmpi eq, %arg1, %c0_i32 : i32
    %17 = arith.extui %16 : i1 to i32
    %c0_i32_13 = arith.constant 0 : i32
    %18 = arith.cmpi ne, %17, %c0_i32_13 : i32
    scf.if %18 {
      %cst_21 = arith.constant 0.000000e+00 : f32
      %27 = vector.broadcast %cst_21 : f32 to vector<1x128xf32>
      %c0_22 = arith.constant 0 : index
      %c0_23 = arith.constant 0 : index
      %28 = vector.load %arg13[%c0_22, %c0_23] : memref<1x128xf32, #tpu.memory_space<vmem>>, vector<1x128xf32>
      tpu.vector_store %arg13[%c0_22, %c0_23], %27 {strides = array<i32>} : memref<1x128xf32, #tpu.memory_space<vmem>>, vector<1x128xf32>,
    } else {
    }
    %c0_14 = arith.constant 0 : index
    %c0_15 = arith.constant 0 : index
    %19 = vector.load %arg13[%c0_14, %c0_15] : memref<1x128xf32, #tpu.memory_space<vmem>>, vector<1x128xf32>
    %cst_16 = arith.constant dense<0.000000e+00> : vector<128xf32>
    %20 = vector.multi_reduction <add>, %10, %cst_16 [0] : vector<64x128xf32> to vector<128xf32>
    %21 = vector.shape_cast %20 : vector<128xf32> to vector<1x128xf32>
    %22 = arith.addf %19, %21 : vector<1x128xf32>
    %c0_17 = arith.constant 0 : index
    %c0_18 = arith.constant 0 : index
    %23 = vector.load %arg13[%c0_17, %c0_18] : memref<1x128xf32, #tpu.memory_space<vmem>>, vector<1x128xf32>
    tpu.vector_store %arg13[%c0_17, %c0_18], %22 {strides = array<i32>} : memref<1x128xf32, #tpu.memory_space<vmem>>, vector<1x128xf32>,
    %c0_i32_19 = arith.constant 0 : i32
    %24 = arith.cmpi eq, %arg1, %c0_i32_19 : i32
    %25 = arith.extui %24 : i1 to i32
    %c0_i32_20 = arith.constant 0 : i32
    %26 = arith.cmpi ne, %25, %c0_i32_20 : i32
    scf.if %26 {
      %c0_21 = arith.constant 0 : index
      %c0_22 = arith.constant 0 : index
      %27 = vector.load %arg13[%c0_21, %c0_22] : memref<1x128xf32, #tpu.memory_space<vmem>>, vector<1x128xf32>
      %cst_23 = arith.constant 1.562500e-02 : f32
      %28 = vector.broadcast %cst_23 : f32 to vector<1x128xf32>
      %29 = arith.mulf %27, %28 : vector<1x128xf32>
      %c0_24 = arith.constant 0 : index
      %c0_25 = arith.constant 0 : index
      %30 = vector.load %arg6[%c0_24, %c0_25] : memref<128x128xf32, #tpu.memory_space<vmem>>, vector<128x128xf32>
      %cst_26 = arith.constant dense<0.000000e+00> : vector<1x128xf32>
      %31 = tpu.matmul %29, %30, %cst_26 {dimension_numbers = #tpu.dot_dimension_numbers<[1], [0], [0], [1], [0, 0, 1, 1], [], []>} : vector<1x128xf32>, vector<128x128xf32>, vector<1x128xf32> -> vector<1x128xf32>
      %c0_27 = arith.constant 0 : index
      %c0_28 = arith.constant 0 : index
      %32 = vector.load %arg7[%c0_27, %c0_28] : memref<1x128xf32, #tpu.memory_space<vmem>>, vector<1x128xf32>
      %33 = arith.addf %31, %32 : vector<1x128xf32>
      %cst_29 = arith.constant 0.000000e+00 : f32
      %34 = vector.broadcast %cst_29 : f32 to vector<1x128xf32>
      %35 = arith.maximumf %33, %34 : vector<1x128xf32>
      %c0_30 = arith.constant 0 : index
      %c0_31 = arith.constant 0 : index
      %36 = vector.load %arg8[%c0_30, %c0_31] : memref<128x128xf32, #tpu.memory_space<vmem>>, vector<128x128xf32>
      %cst_32 = arith.constant dense<0.000000e+00> : vector<1x128xf32>
      %37 = tpu.matmul %35, %36, %cst_32 {dimension_numbers = #tpu.dot_dimension_numbers<[1], [0], [0], [1], [0, 0, 1, 1], [], []>} : vector<1x128xf32>, vector<128x128xf32>, vector<1x128xf32> -> vector<1x128xf32>
      %c0_33 = arith.constant 0 : index
      %c0_34 = arith.constant 0 : index
      %38 = vector.load %arg9[%c0_33, %c0_34] : memref<1x128xf32, #tpu.memory_space<vmem>>, vector<1x128xf32>
      %39 = arith.addf %37, %38 : vector<1x128xf32>
      %40 = arith.negf %39 : vector<1x128xf32>
      %41 = math.exp %40 : vector<1x128xf32>
      %cst_35 = arith.constant 1.000000e+00 : f32
      %42 = vector.broadcast %cst_35 : f32 to vector<1x128xf32>
      %43 = arith.addf %42, %41 : vector<1x128xf32>
      %44 = arith.divf %42, %43 : vector<1x128xf32>
      %c0_36 = arith.constant 0 : index
      %c0_37 = arith.constant 0 : index
      %45 = vector.load %arg10[%c0_36, %c0_37] : memref<1x128xf32, #tpu.memory_space<vmem>>, vector<1x128xf32>
      %46 = arith.mulf %44, %45 : vector<1x128xf32>
      %47 = vector.shape_cast %46 : vector<1x128xf32> to vector<1x1x128xf32>
      %c0_38 = arith.constant 0 : index
      %c0_39 = arith.constant 0 : index
      %c0_40 = arith.constant 0 : index
      %48 = vector.load %arg12[%c0_38, %c0_39, %c0_40] : memref<1x1x128xf32, #tpu.memory_space<vmem>>, vector<1x1x128xf32>
      tpu.vector_store %arg12[%c0_38, %c0_39, %c0_40], %47 {strides = array<i32>} : memref<1x1x128xf32, #tpu.memory_space<vmem>>, vector<1x1x128xf32>,
    } else {
    }
    return
  }
  func.func @transform_0(%arg0: i32, %arg1: i32) -> (i32, i32, i32, i32) {
    %c0_i32 = arith.constant 0 : i32
    %c0_i32_0 = arith.constant 0 : i32
    %c0_i32_1 = arith.constant 0 : i32
    return %arg0, %arg1, %c0_i32, %c0_i32_0 : i32, i32, i32, i32
  }
  func.func @transform_1(%arg0: i32, %arg1: i32) -> (i32, i32) {
    %c0_i32 = arith.constant 0 : i32
    %c0_i32_0 = arith.constant 0 : i32
    %c0_i32_1 = arith.constant 0 : i32
    return %c0_i32, %c0_i32_0 : i32, i32
  }
  func.func @transform_2(%arg0: i32, %arg1: i32) -> (i32, i32) {
    %c0_i32 = arith.constant 0 : i32
    %c0_i32_0 = arith.constant 0 : i32
    %c0_i32_1 = arith.constant 0 : i32
    return %c0_i32, %c0_i32_0 : i32, i32
  }
  func.func @transform_3(%arg0: i32, %arg1: i32) -> (i32, i32) {
    %c0_i32 = arith.constant 0 : i32
    %c0_i32_0 = arith.constant 0 : i32
    %c0_i32_1 = arith.constant 0 : i32
    return %c0_i32, %c0_i32_0 : i32, i32
  }
  func.func @transform_4(%arg0: i32, %arg1: i32) -> (i32, i32) {
    %c0_i32 = arith.constant 0 : i32
    %c0_i32_0 = arith.constant 0 : i32
    %c0_i32_1 = arith.constant 0 : i32
    return %c0_i32, %c0_i32_0 : i32, i32
  }
  func.func @transform_5(%arg0: i32, %arg1: i32) -> (i32, i32) {
    %c0_i32 = arith.constant 0 : i32
    %c0_i32_0 = arith.constant 0 : i32
    %c0_i32_1 = arith.constant 0 : i32
    return %c0_i32, %c0_i32_0 : i32, i32
  }
  func.func @transform_6(%arg0: i32, %arg1: i32) -> (i32, i32) {
    %c0_i32 = arith.constant 0 : i32
    %c0_i32_0 = arith.constant 0 : i32
    %c0_i32_1 = arith.constant 0 : i32
    return %c0_i32, %c0_i32_0 : i32, i32
  }
  func.func @transform_7(%arg0: i32, %arg1: i32) -> (i32, i32) {
    %c0_i32 = arith.constant 0 : i32
    %c0_i32_0 = arith.constant 0 : i32
    %c0_i32_1 = arith.constant 0 : i32
    return %c0_i32, %c0_i32_0 : i32, i32
  }
  func.func @transform_8(%arg0: i32, %arg1: i32) -> (i32, i32) {
    %c0_i32 = arith.constant 0 : i32
    %c0_i32_0 = arith.constant 0 : i32
    %c0_i32_1 = arith.constant 0 : i32
    return %c0_i32, %c0_i32_0 : i32, i32
  }
  func.func @transform_9(%arg0: i32, %arg1: i32) -> (i32, i32, i32, i32) {
    %c0_i32 = arith.constant 0 : i32
    %c0_i32_0 = arith.constant 0 : i32
    %c0_i32_1 = arith.constant 0 : i32
    return %arg0, %arg1, %c0_i32, %c0_i32_0 : i32, i32, i32, i32
  }
  func.func @transform_10(%arg0: i32, %arg1: i32) -> (i32, i32, i32) {
    %c0_i32 = arith.constant 0 : i32
    %c0_i32_0 = arith.constant 0 : i32
    %c0_i32_1 = arith.constant 0 : i32
    return %arg0, %c0_i32, %c0_i32_0 : i32, i32, i32
  }
}

module attributes {stable_mosaic.version = 11 : i64} {
  func.func @conv2_kernel(%arg0: i32, %arg1: i32, %arg2: memref<1x8x16x128xbf16, #tpu.memory_space<vmem>>, %arg3: memref<1x1x16x128xbf16, #tpu.memory_space<vmem>>, %arg4: memref<1x1x16x128xbf16, #tpu.memory_space<vmem>>, %arg5: memref<9x128x128xbf16, #tpu.memory_space<vmem>>, %arg6: memref<1x128xf32, #tpu.memory_space<vmem>>, %arg7: memref<1x128xf32, #tpu.memory_space<vmem>>, %arg8: memref<1x8x8x128xbf16, #tpu.memory_space<vmem>>) attributes {dimension_semantics = [#tpu.dimension_semantics<parallel>, #tpu.dimension_semantics<parallel>], iteration_bounds = array<i64: 2, 1>, scalar_prefetch = 0 : i64, scratch_operands = 0 : i64, tpu.core_type = #tpu.core_type<tc>, window_params = [{transform_indices = @transform_0, window_bounds = array<i64: 1, 8, 16, 128>}, {transform_indices = @transform_1, window_bounds = array<i64: 1, 1, 16, 128>}, {transform_indices = @transform_2, window_bounds = array<i64: 1, 1, 16, 128>}, {pipeline_mode = #tpu.pipeline_mode<synchronous>, transform_indices = @transform_3, window_bounds = array<i64: 9, 128, 128>}, {pipeline_mode = #tpu.pipeline_mode<synchronous>, transform_indices = @transform_4, window_bounds = array<i64: 1, 128>}, {pipeline_mode = #tpu.pipeline_mode<synchronous>, transform_indices = @transform_5, window_bounds = array<i64: 1, 128>}, {transform_indices = @transform_6, window_bounds = array<i64: 1, 8, 8, 128>}]} {
    %c0 = arith.constant 0 : index
    %c0_0 = arith.constant 0 : index
    %c0_1 = arith.constant 0 : index
    %c0_2 = arith.constant 0 : index
    %0 = vector.load %arg2[%c0, %c0_0, %c0_1, %c0_2] : memref<1x8x16x128xbf16, #tpu.memory_space<vmem>>, vector<1x8x16x128xbf16>
    %1 = vector.shape_cast %0 : vector<1x8x16x128xbf16> to vector<8x16x128xbf16>
    %cst = arith.constant 0.000000e+00 : bf16
    %2 = vector.broadcast %cst : bf16 to vector<1x16x128xbf16>
    %c0_i32 = arith.constant 0 : i32
    %3 = arith.cmpi sgt, %arg1, %c0_i32 : i32
    %c0_3 = arith.constant 0 : index
    %c0_4 = arith.constant 0 : index
    %c0_5 = arith.constant 0 : index
    %c0_6 = arith.constant 0 : index
    %4 = vector.load %arg3[%c0_3, %c0_4, %c0_5, %c0_6] : memref<1x1x16x128xbf16, #tpu.memory_space<vmem>>, vector<1x1x16x128xbf16>
    %5 = vector.shape_cast %4 : vector<1x1x16x128xbf16> to vector<1x16x128xbf16>
    %6 = arith.select %3, %5, %2 : vector<1x16x128xbf16>
    %c0_i32_7 = arith.constant 0 : i32
    %7 = arith.cmpi slt, %arg1, %c0_i32_7 : i32
    %c0_8 = arith.constant 0 : index
    %c0_9 = arith.constant 0 : index
    %c0_10 = arith.constant 0 : index
    %c0_11 = arith.constant 0 : index
    %8 = vector.load %arg4[%c0_8, %c0_9, %c0_10, %c0_11] : memref<1x1x16x128xbf16, #tpu.memory_space<vmem>>, vector<1x1x16x128xbf16>
    %9 = vector.shape_cast %8 : vector<1x1x16x128xbf16> to vector<1x16x128xbf16>
    %10 = arith.select %7, %9, %2 : vector<1x16x128xbf16>
    %11 = vector.extract_strided_slice %1 {offsets = [0, 0, 0], sizes = [7, 16, 128], strides = [1, 1, 1]} : vector<8x16x128xbf16> to vector<7x16x128xbf16>
    %12 = tpu.concatenate %6, %11 in 0 : vector<1x16x128xbf16>, vector<7x16x128xbf16> -> vector<8x16x128xbf16>
    %13 = vector.extract_strided_slice %1 {offsets = [1, 0, 0], sizes = [7, 16, 128], strides = [1, 1, 1]} : vector<8x16x128xbf16> to vector<7x16x128xbf16>
    %14 = tpu.concatenate %13, %10 in 0 : vector<7x16x128xbf16>, vector<1x16x128xbf16> -> vector<8x16x128xbf16>
    %15 = vector.shape_cast %12 : vector<8x16x128xbf16> to vector<128x128xbf16>
    %16 = vector.shape_cast %1 : vector<8x16x128xbf16> to vector<128x128xbf16>
    %17 = vector.shape_cast %14 : vector<8x16x128xbf16> to vector<128x128xbf16>
    %cst_12 = arith.constant 0.000000e+00 : f32
    %18 = vector.broadcast %cst_12 : f32 to vector<8x8x128xf32>
    %cst_13 = arith.constant 0.000000e+00 : f32
    %19 = vector.broadcast %cst_13 : f32 to vector<128x128xf32>
    %c0_14 = arith.constant 0 : index
    %c0_15 = arith.constant 0 : index
    %c0_16 = arith.constant 0 : index
    %20 = vector.load %arg5[%c0_14, %c0_15, %c0_16] : memref<9x128x128xbf16, #tpu.memory_space<vmem>>, vector<1x128x128xbf16>
    %21 = vector.shape_cast %20 : vector<1x128x128xbf16> to vector<128x128xbf16>
    %cst_17 = arith.constant dense<0.000000e+00> : vector<128x128xf32>
    %22 = tpu.matmul %15, %21, %cst_17 {dimension_numbers = #tpu.dot_dimension_numbers<[1], [0], [0], [1], [0, 0, 1, 1], [], []>} : vector<128x128xbf16>, vector<128x128xbf16>, vector<128x128xf32> -> vector<128x128xf32>
    %23 = arith.addf %19, %22 : vector<128x128xf32>
    %c3 = arith.constant 3 : index
    %c0_18 = arith.constant 0 : index
    %c0_19 = arith.constant 0 : index
    %24 = vector.load %arg5[%c3, %c0_18, %c0_19] : memref<9x128x128xbf16, #tpu.memory_space<vmem>>, vector<1x128x128xbf16>
    %25 = vector.shape_cast %24 : vector<1x128x128xbf16> to vector<128x128xbf16>
    %cst_20 = arith.constant dense<0.000000e+00> : vector<128x128xf32>
    %26 = tpu.matmul %16, %25, %cst_20 {dimension_numbers = #tpu.dot_dimension_numbers<[1], [0], [0], [1], [0, 0, 1, 1], [], []>} : vector<128x128xbf16>, vector<128x128xbf16>, vector<128x128xf32> -> vector<128x128xf32>
    %27 = arith.addf %23, %26 : vector<128x128xf32>
    %c6 = arith.constant 6 : index
    %c0_21 = arith.constant 0 : index
    %c0_22 = arith.constant 0 : index
    %28 = vector.load %arg5[%c6, %c0_21, %c0_22] : memref<9x128x128xbf16, #tpu.memory_space<vmem>>, vector<1x128x128xbf16>
    %29 = vector.shape_cast %28 : vector<1x128x128xbf16> to vector<128x128xbf16>
    %cst_23 = arith.constant dense<0.000000e+00> : vector<128x128xf32>
    %30 = tpu.matmul %17, %29, %cst_23 {dimension_numbers = #tpu.dot_dimension_numbers<[1], [0], [0], [1], [0, 0, 1, 1], [], []>} : vector<128x128xbf16>, vector<128x128xbf16>, vector<128x128xf32> -> vector<128x128xf32>
    %31 = arith.addf %27, %30 : vector<128x128xf32>
    %32 = vector.shape_cast %31 : vector<128x128xf32> to vector<8x16x128xf32>
    %33 = vector.extract_strided_slice %32 {offsets = [0, 0, 0], sizes = [8, 8, 128], strides = [1, 1, 1]} : vector<8x16x128xf32> to vector<8x8x128xf32>
    %34 = arith.addf %18, %33 : vector<8x8x128xf32>
    %cst_24 = arith.constant 0.000000e+00 : f32
    %35 = vector.broadcast %cst_24 : f32 to vector<128x128xf32>
    %c1 = arith.constant 1 : index
    %c0_25 = arith.constant 0 : index
    %c0_26 = arith.constant 0 : index
    %36 = vector.load %arg5[%c1, %c0_25, %c0_26] : memref<9x128x128xbf16, #tpu.memory_space<vmem>>, vector<1x128x128xbf16>
    %37 = vector.shape_cast %36 : vector<1x128x128xbf16> to vector<128x128xbf16>
    %cst_27 = arith.constant dense<0.000000e+00> : vector<128x128xf32>
    %38 = tpu.matmul %15, %37, %cst_27 {dimension_numbers = #tpu.dot_dimension_numbers<[1], [0], [0], [1], [0, 0, 1, 1], [], []>} : vector<128x128xbf16>, vector<128x128xbf16>, vector<128x128xf32> -> vector<128x128xf32>
    %39 = arith.addf %35, %38 : vector<128x128xf32>
    %c4 = arith.constant 4 : index
    %c0_28 = arith.constant 0 : index
    %c0_29 = arith.constant 0 : index
    %40 = vector.load %arg5[%c4, %c0_28, %c0_29] : memref<9x128x128xbf16, #tpu.memory_space<vmem>>, vector<1x128x128xbf16>
    %41 = vector.shape_cast %40 : vector<1x128x128xbf16> to vector<128x128xbf16>
    %cst_30 = arith.constant dense<0.000000e+00> : vector<128x128xf32>
    %42 = tpu.matmul %16, %41, %cst_30 {dimension_numbers = #tpu.dot_dimension_numbers<[1], [0], [0], [1], [0, 0, 1, 1], [], []>} : vector<128x128xbf16>, vector<128x128xbf16>, vector<128x128xf32> -> vector<128x128xf32>
    %43 = arith.addf %39, %42 : vector<128x128xf32>
    %c7 = arith.constant 7 : index
    %c0_31 = arith.constant 0 : index
    %c0_32 = arith.constant 0 : index
    %44 = vector.load %arg5[%c7, %c0_31, %c0_32] : memref<9x128x128xbf16, #tpu.memory_space<vmem>>, vector<1x128x128xbf16>
    %45 = vector.shape_cast %44 : vector<1x128x128xbf16> to vector<128x128xbf16>
    %cst_33 = arith.constant dense<0.000000e+00> : vector<128x128xf32>
    %46 = tpu.matmul %17, %45, %cst_33 {dimension_numbers = #tpu.dot_dimension_numbers<[1], [0], [0], [1], [0, 0, 1, 1], [], []>} : vector<128x128xbf16>, vector<128x128xbf16>, vector<128x128xf32> -> vector<128x128xf32>
    %47 = arith.addf %43, %46 : vector<128x128xf32>
    %48 = vector.shape_cast %47 : vector<128x128xf32> to vector<8x16x128xf32>
    %49 = vector.extract_strided_slice %48 {offsets = [0, 1, 0], sizes = [8, 8, 128], strides = [1, 1, 1]} : vector<8x16x128xf32> to vector<8x8x128xf32>
    %50 = arith.addf %34, %49 : vector<8x8x128xf32>
    %cst_34 = arith.constant 0.000000e+00 : f32
    %51 = vector.broadcast %cst_34 : f32 to vector<128x128xf32>
    %c2 = arith.constant 2 : index
    %c0_35 = arith.constant 0 : index
    %c0_36 = arith.constant 0 : index
    %52 = vector.load %arg5[%c2, %c0_35, %c0_36] : memref<9x128x128xbf16, #tpu.memory_space<vmem>>, vector<1x128x128xbf16>
    %53 = vector.shape_cast %52 : vector<1x128x128xbf16> to vector<128x128xbf16>
    %cst_37 = arith.constant dense<0.000000e+00> : vector<128x128xf32>
    %54 = tpu.matmul %15, %53, %cst_37 {dimension_numbers = #tpu.dot_dimension_numbers<[1], [0], [0], [1], [0, 0, 1, 1], [], []>} : vector<128x128xbf16>, vector<128x128xbf16>, vector<128x128xf32> -> vector<128x128xf32>
    %55 = arith.addf %51, %54 : vector<128x128xf32>
    %c5 = arith.constant 5 : index
    %c0_38 = arith.constant 0 : index
    %c0_39 = arith.constant 0 : index
    %56 = vector.load %arg5[%c5, %c0_38, %c0_39] : memref<9x128x128xbf16, #tpu.memory_space<vmem>>, vector<1x128x128xbf16>
    %57 = vector.shape_cast %56 : vector<1x128x128xbf16> to vector<128x128xbf16>
    %cst_40 = arith.constant dense<0.000000e+00> : vector<128x128xf32>
    %58 = tpu.matmul %16, %57, %cst_40 {dimension_numbers = #tpu.dot_dimension_numbers<[1], [0], [0], [1], [0, 0, 1, 1], [], []>} : vector<128x128xbf16>, vector<128x128xbf16>, vector<128x128xf32> -> vector<128x128xf32>
    %59 = arith.addf %55, %58 : vector<128x128xf32>
    %c8 = arith.constant 8 : index
    %c0_41 = arith.constant 0 : index
    %c0_42 = arith.constant 0 : index
    %60 = vector.load %arg5[%c8, %c0_41, %c0_42] : memref<9x128x128xbf16, #tpu.memory_space<vmem>>, vector<1x128x128xbf16>
    %61 = vector.shape_cast %60 : vector<1x128x128xbf16> to vector<128x128xbf16>
    %cst_43 = arith.constant dense<0.000000e+00> : vector<128x128xf32>
    %62 = tpu.matmul %17, %61, %cst_43 {dimension_numbers = #tpu.dot_dimension_numbers<[1], [0], [0], [1], [0, 0, 1, 1], [], []>} : vector<128x128xbf16>, vector<128x128xbf16>, vector<128x128xf32> -> vector<128x128xf32>
    %63 = arith.addf %59, %62 : vector<128x128xf32>
    %64 = vector.shape_cast %63 : vector<128x128xf32> to vector<8x16x128xf32>
    %65 = vector.extract_strided_slice %64 {offsets = [0, 2, 0], sizes = [8, 8, 128], strides = [1, 1, 1]} : vector<8x16x128xf32> to vector<8x8x128xf32>
    %66 = arith.addf %50, %65 : vector<8x8x128xf32>
    %c0_44 = arith.constant 0 : index
    %c0_45 = arith.constant 0 : index
    %67 = vector.load %arg6[%c0_44, %c0_45] : memref<1x128xf32, #tpu.memory_space<vmem>>, vector<1x128xf32>
    %68 = vector.shape_cast %67 : vector<1x128xf32> to vector<1x1x128xf32>
    %69 = vector.broadcast %68 : vector<1x1x128xf32> to vector<8x8x128xf32>
    %70 = arith.mulf %66, %69 : vector<8x8x128xf32>
    %c0_46 = arith.constant 0 : index
    %c0_47 = arith.constant 0 : index
    %71 = vector.load %arg7[%c0_46, %c0_47] : memref<1x128xf32, #tpu.memory_space<vmem>>, vector<1x128xf32>
    %72 = vector.shape_cast %71 : vector<1x128xf32> to vector<1x1x128xf32>
    %73 = vector.broadcast %72 : vector<1x1x128xf32> to vector<8x8x128xf32>
    %74 = arith.addf %70, %73 : vector<8x8x128xf32>
    %cst_48 = arith.constant 0.000000e+00 : f32
    %75 = vector.broadcast %cst_48 : f32 to vector<8x8x128xf32>
    %76 = arith.maximumf %74, %75 : vector<8x8x128xf32>
    %77 = arith.truncf %76 : vector<8x8x128xf32> to vector<8x8x128xbf16>
    %c0_49 = arith.constant 0 : index
    %c0_50 = arith.constant 0 : index
    %c0_51 = arith.constant 0 : index
    %c0_52 = arith.constant 0 : index
    %78 = vector.load %arg8[%c0_49, %c0_50, %c0_51, %c0_52] : memref<1x8x8x128xbf16, #tpu.memory_space<vmem>>, vector<1x8x8x128xbf16>
    %79 = vector.shape_cast %78 : vector<1x8x8x128xbf16> to vector<8x8x128xbf16>
    %80 = vector.shape_cast %77 : vector<8x8x128xbf16> to vector<1x8x8x128xbf16>
    tpu.vector_store %arg8[%c0_49, %c0_50, %c0_51, %c0_52], %80 {strides = array<i32>} : memref<1x8x8x128xbf16, #tpu.memory_space<vmem>>, vector<1x8x8x128xbf16>,
    return
  }
  func.func @transform_0(%arg0: i32, %arg1: i32) -> (i32, i32, i32, i32) {
    %c0_i32 = arith.constant 0 : i32
    %c0_i32_0 = arith.constant 0 : i32
    %c0_i32_1 = arith.constant 0 : i32
    return %arg0, %arg1, %c0_i32, %c0_i32_0 : i32, i32, i32, i32
  }
  func.func @transform_1(%arg0: i32, %arg1: i32) -> (i32, i32, i32, i32) {
    %c8_i32 = arith.constant 8 : i32
    %0 = arith.muli %arg1, %c8_i32 : i32
    %c1_i32 = arith.constant 1 : i32
    %1 = arith.subi %0, %c1_i32 : i32
    %c0_i32 = arith.constant 0 : i32
    %2 = arith.maxsi %1, %c0_i32 : i32
    %c0_i32_0 = arith.constant 0 : i32
    %c0_i32_1 = arith.constant 0 : i32
    %c0_i32_2 = arith.constant 0 : i32
    return %arg0, %2, %c0_i32_0, %c0_i32_1 : i32, i32, i32, i32
  }
  func.func @transform_2(%arg0: i32, %arg1: i32) -> (i32, i32, i32, i32) {
    %c8_i32 = arith.constant 8 : i32
    %0 = arith.muli %arg1, %c8_i32 : i32
    %c8_i32_0 = arith.constant 8 : i32
    %1 = arith.addi %0, %c8_i32_0 : i32
    %c7_i32 = arith.constant 7 : i32
    %2 = arith.minsi %1, %c7_i32 : i32
    %c0_i32 = arith.constant 0 : i32
    %c0_i32_1 = arith.constant 0 : i32
    %c0_i32_2 = arith.constant 0 : i32
    return %arg0, %2, %c0_i32, %c0_i32_1 : i32, i32, i32, i32
  }
  func.func @transform_3(%arg0: i32, %arg1: i32) -> (i32, i32, i32) {
    %c0_i32 = arith.constant 0 : i32
    %c0_i32_0 = arith.constant 0 : i32
    %c0_i32_1 = arith.constant 0 : i32
    %c0_i32_2 = arith.constant 0 : i32
    return %c0_i32, %c0_i32_0, %c0_i32_1 : i32, i32, i32
  }
  func.func @transform_4(%arg0: i32, %arg1: i32) -> (i32, i32) {
    %c0_i32 = arith.constant 0 : i32
    %c0_i32_0 = arith.constant 0 : i32
    %c0_i32_1 = arith.constant 0 : i32
    return %c0_i32, %c0_i32_0 : i32, i32
  }
  func.func @transform_5(%arg0: i32, %arg1: i32) -> (i32, i32) {
    %c0_i32 = arith.constant 0 : i32
    %c0_i32_0 = arith.constant 0 : i32
    %c0_i32_1 = arith.constant 0 : i32
    return %c0_i32, %c0_i32_0 : i32, i32
  }
  func.func @transform_6(%arg0: i32, %arg1: i32) -> (i32, i32, i32, i32) {
    %c0_i32 = arith.constant 0 : i32
    %c0_i32_0 = arith.constant 0 : i32
    %c0_i32_1 = arith.constant 0 : i32
    return %arg0, %arg1, %c0_i32, %c0_i32_0 : i32, i32, i32, i32
  }
}

</mosaic_0001>

<llo_original>
// kernel: _lambda_.7
$region0: #{_lambda_.7}
  #allocation0 [shape = 'u32[]', space=smem, size = 0x4, offset = 0x4, fixed_abs, tag = 'smem constant byte address 0x4 - core index']
  #allocation1 [shape = 'u32[144,128]{1,0:T(1,128)}', space=vmem, size = 0x12000, scoped, tag = 'internal scratch']
  %s0 = inlined_call_operand.vmem [shape: bf16[2,8,8,128], index: 0, kind: input, shape index: {}]
  %s1 = inlined_call_operand.vmem [shape: f32[2,8,8,16], index: 1, kind: input, shape index: {}]
  %s2 = inlined_call_operand.vmem [shape: f32[2,1,128], index: 2, kind: input, shape index: {}]
  %s3 = inlined_call_operand.hbm [shape: f32[2,8,8,16], index: 3, kind: output, shape index: {}]
  %s4 = sld [smem:[#allocation0]]
  $region45: #{_lambda_.7} parent=0
    _
  %s6 = ssub.s32 1, %s4
  %s7 = scalar_select 0, %s6, %s4
  $region1: #{_lambda_.7} parent=0
    #allocation2 [shape = 'u8[65536]{0}', space=vmem, size = 0x10000, scoped, tag = 'output window, operand 0']
    #allocation3 [shape = 's32[2]{0}', space=sflag, size = 0x8, scoped, tag = 'scoped memory for _lambda_.7']
    %8 = vsyncpa [#allocation3], 0
    %s9 = scalar_lea.sflag [#allocation3], 1
    %10 = vsyncpa %s9, 0
    loop: start=0, step=1, limit=4
    $region2: #{_lambda_.7} parent=1 // loop_pre_header
      _
    $region3: #{_lambda_.7} parent=1 // loop_header
      %s12 = sphi 0, %s16
      %p13 = scmp.ge.s32.totalorder %s12, 4
      %s19 = sphi 0, %s31
      %s20 = sphi 0, %s27
      %s21 = sphi 0, %s19
      %s22 = sphi 0, %s20
      %s23 = sphi 0, %s21
      %s24 = sphi 0, %s22
      %s36 = sphi 0, %s38
      %s39 = sphi 0, %s36
      %s40 = sphi 0, %s39
      %s56 = sphi 0, %s40
      %s64 = sphi 0, %s66
      %s67 = sphi 0, %s64
      %s68 = sphi 0, %s67
      %s84 = sphi 0, %s68
      %s90 = sphi 0, %s92
      %s93 = sphi 0, %s90
      %s94 = sphi 0, %s93
      %s110 = sphi 0, %s94
      %s118 = sphi 0, %s120
      %s121 = sphi 0, %s118
      %s122 = sphi 0, %s121
      %s138 = sphi 0, %s122
    $region4: #{_lambda_.7} parent=1 // loop_header_branch
      %15 = sbr.rel (%p13) target = $region8
    $region5: #{_lambda_.7} parent=1 // loop_body
      %s17 = ssub.s32 %s12, 1
      %s18 = ssub.s32 %s12, 2
      %s25 = sadd.s32 1, %s20
      %p26 = scmp.ge.s32.totalorder %s25, 1
      %s27 = scalar_select %p26, 0, %s25
      %s28 = sadd.s32 1, %s19
      %s29 = scalar_select %p26, %s28, %s19
      %p30 = scmp.ge.s32.totalorder %s29, 2
      %s31 = scalar_select %p30, 0, %s29
      %s32 = ssub.s32 %s19, %s31
      %s33 = ssub.s32 %s20, %s27
      %s34 = sor.u32 %s32, %s33
      %p35 = scmp.eq.s32.totalorder %s34, 0
      %s37 = sadd.s32 %s36, 1
      %s38 = scalar_select %p35, %s36, %s37
      %p41 = pneg %p35
      %p42 = scmp.eq.s32.totalorder %s12, 1
      %p43 = por %p41, %p42
      %p44 = scmp.ne.s32.totalorder %s36, %s39
      %p45 = scmp.eq.s32.totalorder %s12, 0
      %p46 = por %p44, %p45
      %p47 = scmp.ne.s32.totalorder %s36, %s39
      %p48 = scmp.eq.s32.totalorder %s17, 1
      %p49 = por %p47, %p48
      %p50 = scmp.ne.s32.totalorder %s39, %s40
      %p51 = scmp.eq.s32.totalorder %s17, 0
      %p52 = por %p50, %p51
      %p53 = scmp.ne.s32.totalorder %s39, %s40
      %p54 = scmp.eq.s32.totalorder %s18, 1
      %p55 = por %p53, %p54
      %p57 = scmp.ne.s32.totalorder %s40, %s56
      %p58 = scmp.eq.s32.totalorder %s18, 0
      %p59 = por %p57, %p58
      %s60 = ssub.s32 %s19, %s31
      %s61 = ssub.s32 %s20, %s27
      %s62 = sor.u32 %s60, %s61
      %p63 = scmp.eq.s32.totalorder %s62, 0
      %s65 = sadd.s32 %s64, 1
      %s66 = scalar_select %p63, %s64, %s65
      %p69 = pneg %p63
      %p70 = scmp.eq.s32.totalorder %s12, 1
      %p71 = por %p69, %p70
      %p72 = scmp.ne.s32.totalorder %s64, %s67
      %p73 = scmp.eq.s32.totalorder %s12, 0
      %p74 = por %p72, %p73
      %p75 = scmp.ne.s32.totalorder %s64, %s67
      %p76 = scmp.eq.s32.totalorder %s17, 1
      %p77 = por %p75, %p76
      %p78 = scmp.ne.s32.totalorder %s67, %s68
      %p79 = scmp.eq.s32.totalorder %s17, 0
      %p80 = por %p78, %p79
      %p81 = scmp.ne.s32.totalorder %s67, %s68
      %p82 = scmp.eq.s32.totalorder %s18, 1
      %p83 = por %p81, %p82
      %p85 = scmp.ne.s32.totalorder %s68, %s84
      %p86 = scmp.eq.s32.totalorder %s18, 0
      %p87 = por %p85, %p86
      %s88 = ssub.s32 %s19, %s31
      %p89 = scmp.eq.s32.totalorder %s88, 0
      %s91 = sadd.s32 %s90, 1
      %s92 = scalar_select %p89, %s90, %s91
      %p95 = pneg %p89
      %p96 = scmp.eq.s32.totalorder %s12, 1
      %p97 = por %p95, %p96
      %p98 = scmp.ne.s32.totalorder %s90, %s93
      %p99 = scmp.eq.s32.totalorder %s12, 0
      %p100 = por %p98, %p99
      %p101 = scmp.ne.s32.totalorder %s90, %s93
      %p102 = scmp.eq.s32.totalorder %s17, 1
      %p103 = por %p101, %p102
      %p104 = scmp.ne.s32.totalorder %s93, %s94
      %p105 = scmp.eq.s32.totalorder %s17, 0
      %p106 = por %p104, %p105
      %p107 = scmp.ne.s32.totalorder %s93, %s94
      %p108 = scmp.eq.s32.totalorder %s18, 1
      %p109 = por %p107, %p108
      %p111 = scmp.ne.s32.totalorder %s94, %s110
      %p112 = scmp.eq.s32.totalorder %s18, 0
      %p113 = por %p111, %p112
      %s114 = ssub.s32 %s19, %s31
      %s115 = ssub.s32 %s20, %s27
      %s116 = sor.u32 %s114, %s115
      %p117 = scmp.eq.s32.totalorder %s116, 0
      %s119 = sadd.s32 %s118, 1
      %s120 = scalar_select %p117, %s118, %s119
      %p123 = pneg %p117
      %p124 = scmp.eq.s32.totalorder %s12, 1
      %p125 = por %p123, %p124
      %p126 = scmp.ne.s32.totalorder %s118, %s121
      %p127 = scmp.eq.s32.totalorder %s12, 0
      %p128 = por %p126, %p127
      %p129 = scmp.ne.s32.totalorder %s118, %s121
      %p130 = scmp.eq.s32.totalorder %s17, 1
      %p131 = por %p129, %p130
      %p132 = scmp.ne.s32.totalorder %s121, %s122
      %p133 = scmp.eq.s32.totalorder %s17, 0
      %p134 = por %p132, %p133
      %p135 = scmp.ne.s32.totalorder %s121, %s122
      %p136 = scmp.eq.s32.totalorder %s18, 1
      %p137 = por %p135, %p136
      %p139 = scmp.ne.s32.totalorder %s122, %s138
      %p140 = scmp.eq.s32.totalorder %s18, 0
      %p141 = por %p139, %p140
      %p142 = scmp.le.s32.totalorder 1, %s12
      %p143 = scmp.lt.s32.totalorder %s12, 3
      %p144 = pnand %p142, %p143
      %p145 = pneg %p144
      // Predicated region
      $region9: #{_lambda_.7} parent=5 // pred_check
        _
      $region10: #{_lambda_.7} parent=5 // pred_check_branch
        %147 = sbr.rel (%p144) target = $region12
      $region11: #{_lambda_.7} parent=5 // pred_region
        %s148 = ssub.s32 %s12, 1
      $region12: #{_lambda_.7} parent=5 // pred_fallthru
        _
      %p149 = scmp.lt.s32.totalorder %s12, 2
      // Predicated region
      $region13: #{_lambda_.7} parent=5 // pred_check
        %p150 = pneg %p149
      $region14: #{_lambda_.7} parent=5 // pred_check_branch
        %152 = sbr.rel (%p150) target = $region16
      $region15: #{_lambda_.7} parent=5 // pred_region
        // Predicated region
        $region17: #{_lambda_.7} parent=15 // pred_check
          %p153 = pneg %p46
        $region18: #{_lambda_.7} parent=15 // pred_check_branch
          %155 = sbr.rel (%p153) target = $region20
        $region19: #{_lambda_.7} parent=15 // pred_region
          %s156 = smul.u32 8, %s20
          %p157 = scmp.lt.s32.totalorder %s19, 1
          %s158 = scalar_select %p157, %s19, 1
          %p159 = scmp.lt.s32.totalorder %s156, 7
          %s160 = scalar_select %p159, %s156, 7
          %s161 = smul.addr %s158, 8
          %s162 = sadd.s32 %s160, %s161
          %s163 = smul.addr %s162, 4
          %s164 = scalar_lea.vmem %s0, %s163
          %s165 = smul.u32 8, %s20
        $region20: #{_lambda_.7} parent=15 // pred_fallthru
          _
        // Predicated region
        $region21: #{_lambda_.7} parent=15 // pred_check
          %p166 = pneg %p74
        $region22: #{_lambda_.7} parent=15 // pred_check_branch
          %168 = sbr.rel (%p166) target = $region24
        $region23: #{_lambda_.7} parent=15 // pred_region
          %s169 = smul.u32 8, %s20
          %p170 = scmp.lt.s32.totalorder %s19, 1
          %s171 = scalar_select %p170, %s19, 1
          %p172 = scmp.lt.s32.totalorder %s169, 7
          %s173 = scalar_select %p172, %s169, 7
          %s174 = smul.addr %s171, 8
          %s175 = sadd.s32 %s173, %s174
          %s176 = smul.addr %s175, 8
          %s177 = scalar_lea.vmem %s1, %s176
          %s178 = smul.u32 8, %s20
        $region24: #{_lambda_.7} parent=15 // pred_fallthru
          _
        // Predicated region
        $region25: #{_lambda_.7} parent=15 // pred_check
          %p179 = pneg %p100
        $region26: #{_lambda_.7} parent=15 // pred_check_branch
          %181 = sbr.rel (%p179) target = $region28
        $region27: #{_lambda_.7} parent=15 // pred_region
          %p182 = scmp.lt.s32.totalorder %s19, 1
          %s183 = scalar_select %p182, %s19, 1
          %s184 = scalar_lea.vmem %s2, %s183
        $region28: #{_lambda_.7} parent=15 // pred_fallthru
          _
      $region16: #{_lambda_.7} parent=5 // pred_fallthru
        _
      %p185 = scmp.le.s32.totalorder 1, %s12
      %p186 = scmp.lt.s32.totalorder %s12, 3
      %p187 = pnand %p185, %p186
      %p188 = pneg %p187
      // Predicated region
      $region29: #{_lambda_.7} parent=5 // pred_check
        _
      $region30: #{_lambda_.7} parent=5 // pred_check_branch
        %190 = sbr.rel (%p187) target = $region32
      $region31: #{_lambda_.7} parent=5 // pred_region
        %s191 = ssub.s32 %s12, 1
        %s192 = smul.u32 8, %s22
        %p193 = scmp.lt.s32.totalorder %s21, 1
        %s194 = scalar_select %p193, %s21, 1
        %p195 = scmp.lt.s32.totalorder %s192, 7
        %s196 = scalar_select %p195, %s192, 7
        %s197 = smul.addr %s194, 8
        %s198 = sadd.s32 %s196, %s197
        %s199 = smul.addr %s198, 4
        %s200 = scalar_lea.vmem %s0, %s199
        %p201 = pneg %p52
        %p202 = pneg %p49
        %s203 = smul.u32 8, %s22
        %p204 = scmp.lt.s32.totalorder %s21, 1
        %s205 = scalar_select %p204, %s21, 1
        %p206 = scmp.lt.s32.totalorder %s203, 7
        %s207 = scalar_select %p206, %s203, 7
        %s208 = smul.addr %s205, 8
        %s209 = sadd.s32 %s207, %s208
        %s210 = smul.addr %s209, 8
        %s211 = scalar_lea.vmem %s1, %s210
        %p212 = pneg %p80
        %p213 = pneg %p77
        %p214 = scmp.lt.s32.totalorder %s21, 1
        %s215 = scalar_select %p214, %s21, 1
        %s216 = scalar_lea.vmem %s2, %s215
        %p217 = pneg %p106
        %p218 = pneg %p103
        %p219 = pneg %p134
        %p220 = pneg %p131
        %s221 = sand.u32 %s121, 1
        %s222 = scalar_lea.sflag [#allocation3], %s221
        %s223 = sand.u32 %s121, 1
        %s224 = smul.addr %s223, 64
        %s225 = scalar_lea.vmem [#allocation2], %s224
        %s226 = smul.u32 8, %s22
        %p227 = scmp.lt.s32.totalorder %s21, 1
        %s228 = scalar_select %p227, %s21, 1
        %p229 = scmp.lt.s32.totalorder %s226, 7
        %s230 = scalar_select %p229, %s226, 7
        %s231 = smul.addr %s228, 8
        %s232 = sadd.s32 %s230, %s231
        %s233 = smul.addr %s232, 4
        %s234 = scalar_lea.vmem %s0, %s233
        %s235 = smul.u32 8, %s22
        %s236 = smul.u32 8, %s22
        %p237 = scmp.lt.s32.totalorder %s21, 1
        %s238 = scalar_select %p237, %s21, 1
        %p239 = scmp.lt.s32.totalorder %s236, 7
        %s240 = scalar_select %p239, %s236, 7
        %s241 = smul.addr %s238, 8
        %s242 = sadd.s32 %s240, %s241
        %s243 = smul.addr %s242, 8
        %s244 = scalar_lea.vmem %s1, %s243
        %s245 = smul.u32 8, %s22
        %p246 = scmp.lt.s32.totalorder %s21, 1
        %s247 = scalar_select %p246, %s21, 1
        %s248 = scalar_lea.vmem %s2, %s247
        %s249 = smul.u32 8, %s22
        %v250 = vld [vmem:[%s234] sm:$0xf]
        %v251 = vld [vmem:[%s234 + $0x4] sm:$0xf]
        %v252 = vld [vmem:[%s234 + $0x8] sm:$0xf]
        %v253 = vld [vmem:[%s234 + $0xc] sm:$0xf]
        %v254 = vld [vmem:[%s234 + $0x10] sm:$0xf]
        %v255 = vld [vmem:[%s234 + $0x14] sm:$0xf]
        %v256 = vld [vmem:[%s234 + $0x18] sm:$0xf]
        %v257 = vld [vmem:[%s234 + $0x1c] sm:$0xf]
        %v258 = vunpack.c.l.bf16 %v250
        %v259 = vunpack.c.l.bf16 %v251
        %v260 = vunpack.c.l.bf16 %v252
        %v261 = vunpack.c.l.bf16 %v253
        %v262 = vunpack.c.l.bf16 %v254
        %v263 = vunpack.c.l.bf16 %v255
        %v264 = vunpack.c.l.bf16 %v256
        %v265 = vunpack.c.l.bf16 %v257
        %v266 = vld [vmem:[%s248] sm:$0x1]
        %v268 = vlaneseq
        %v269 = vshrl.u32 %v268, 7
        %v270 = vsub.s32 0, %v269
        %v271 = vrot.slane %v266, %v270
        %v273 = vmul.f32 %v258, %v271
        %v274 = vmul.f32 %v259, %v271
        %v275 = vmul.f32 %v260, %v271
        %v276 = vmul.f32 %v261, %v271
        %v277 = vmul.f32 %v262, %v271
        %v278 = vmul.f32 %v263, %v271
        %v279 = vmul.f32 %v264, %v271
        %v280 = vmul.f32 %v265, %v271
        %v281 = vld [vmem:[%s244] sm:$0xff]
        %v282 = vld [vmem:[%s244 + $0x8] sm:$0xff]
        %v283 = vld [vmem:[%s244 + $0x10] sm:$0xff]
        %v284 = vld [vmem:[%s244 + $0x18] sm:$0xff]
        %v285 = vld [vmem:[%s244 + $0x20] sm:$0xff]
        %v286 = vld [vmem:[%s244 + $0x28] sm:$0xff]
        %v287 = vld [vmem:[%s244 + $0x30] sm:$0xff]
        %v288 = vld [vmem:[%s244 + $0x38] sm:$0xff]
        %v289 = vadd.f32 %v273, %v281
        %v290 = vadd.f32 %v274, %v282
        %v291 = vadd.f32 %v275, %v283
        %v292 = vadd.f32 %v276, %v284
        %v293 = vadd.f32 %v277, %v285
        %v294 = vadd.f32 %v278, %v286
        %v295 = vadd.f32 %v279, %v287
        %v296 = vadd.f32 %v280, %v288
        %v297 = vmax.f32 %v289, 0.0
        %v298 = vmax.f32 %v290, 0.0
        %v299 = vmax.f32 %v291, 0.0
        %v300 = vmax.f32 %v292, 0.0
        %v301 = vmax.f32 %v293, 0.0
        %v302 = vmax.f32 %v294, 0.0
        %v303 = vmax.f32 %v295, 0.0
        %v304 = vmax.f32 %v296, 0.0
        %vm305 = vcmask 130048
        %306 = vst.msk [vmem:[%s225] sm:$0xff] %vm305, %v297
        %307 = vst.msk [vmem:[%s225 + $0x8] sm:$0xff] %vm305, %v298
        %308 = vst.msk [vmem:[%s225 + $0x10] sm:$0xff] %vm305, %v299
        %309 = vst.msk [vmem:[%s225 + $0x18] sm:$0xff] %vm305, %v300
        %310 = vst.msk [vmem:[%s225 + $0x20] sm:$0xff] %vm305, %v301
        %311 = vst.msk [vmem:[%s225 + $0x28] sm:$0xff] %vm305, %v302
        %312 = vst.msk [vmem:[%s225 + $0x30] sm:$0xff] %vm305, %v303
        %313 = vst.msk [vmem:[%s225 + $0x38] sm:$0xff] %vm305, %v304
        %s314 = sand.u32 %s121, 1
        %s315 = scalar_lea.sflag [#allocation3], %s314
        %s316 = sand.u32 %s121, 1
        %s317 = smul.addr %s316, 64
        %s318 = scalar_lea.vmem [#allocation2], %s317
        // Predicated region
        $region33: #{_lambda_.7} parent=31 // pred_check
          %p319 = pneg %p131
        $region34: #{_lambda_.7} parent=31 // pred_check_branch
          %321 = sbr.rel (%p319) target = $region36
        $region35: #{_lambda_.7} parent=31 // pred_region
          %s322 = smul.u32 8, %s22
          %s324 = ssub.s32 1024, 1024
          %325 = vsyncadd %s315, %s324
          %s326 = smul.addr %s21, 8
          %s327 = sadd.s32 %s322, %s326
          %s328 = smul.addr %s327, 128
          %s329 = scalar_lea.hbm %s3, %s328
          %s330 = sshll.u32 %s318, 4
          %s331 = int_to_ptr.vmem [resolvable:$true] %s330
          %336 = dma.vmem_to_hbm [thread:$0]  %s331, 1024, %s329, %s315, 128, 128, 8
        $region36: #{_lambda_.7} parent=31 // pred_fallthru
          _
      $region32: #{_lambda_.7} parent=5 // pred_fallthru
        _
      %p337 = scmp.le.s32.totalorder 2, %s12
      // Predicated region
      $region37: #{_lambda_.7} parent=5 // pred_check
        %p338 = pneg %p337
      $region38: #{_lambda_.7} parent=5 // pred_check_branch
        %340 = sbr.rel (%p338) target = $region40
      $region39: #{_lambda_.7} parent=5 // pred_region
        %s341 = ssub.s32 %s12, 2
        // Predicated region
        $region41: #{_lambda_.7} parent=39 // pred_check
          %p342 = pneg %p137
        $region42: #{_lambda_.7} parent=39 // pred_check_branch
          %344 = sbr.rel (%p342) target = $region44
        $region43: #{_lambda_.7} parent=39 // pred_region
          %s345 = sand.u32 %s122, 1
          %s346 = scalar_lea.sflag [#allocation3], %s345
          %s347 = sand.u32 %s122, 1
          %s348 = smul.addr %s347, 64
          %s349 = scalar_lea.vmem [#allocation2], %s348
          %350 = dma.done %s346, 1024
        $region44: #{_lambda_.7} parent=39 // pred_fallthru
          _
      $region40: #{_lambda_.7} parent=5 // pred_fallthru
        _
    $region6: #{_lambda_.7} parent=1 // loop_footer
      %s16 = sadd.s32 1, %s12
    $region7: #{_lambda_.7} parent=1 // loop_footer_branch
      %11 = sbr.rel target = $region3
    $region8: #{_lambda_.7} parent=1 // loop_exit
      _
    %351 = vsyncpa [#allocation3], 1
    %s352 = scalar_lea.sflag [#allocation3], 1
    %353 = vsyncpa %s352, 1

// kernel: _lambda_.4
$region0: #{_lambda_.4}
  #allocation0 [shape = 'u32[]', space=smem, size = 0x4, offset = 0x4, fixed_abs, tag = 'smem constant byte address 0x4 - core index']
  #allocation1 [shape = 'u32[144,128]{1,0:T(1,128)}', space=vmem, size = 0x12000, scoped, tag = 'internal scratch']
  %s0 = inlined_call_operand.hbm [shape: f32[2,8,8,16], index: 0, kind: input, shape index: {}]
  %s1 = inlined_call_operand.vmem [shape: bf16[16,128], index: 1, kind: input, shape index: {}]
  %s2 = inlined_call_operand.vmem [shape: f32[1,128], index: 2, kind: input, shape index: {}]
  %s3 = inlined_call_operand.vmem [shape: f32[1,128], index: 3, kind: input, shape index: {}]
  %s4 = inlined_call_operand.vmem [shape: bf16[2,8,16,128], index: 4, kind: output, shape index: {}]
  %s5 = sld [smem:[#allocation0]]
  $region53: #{_lambda_.4} parent=0
    _
  %s7 = ssub.s32 1, %s5
  %s8 = scalar_select 0, %s7, %s5
  $region1: #{_lambda_.4} parent=0
    #allocation2 [shape = 'u8[65536]{0}', space=vmem, size = 0x10000, scoped, tag = 'input window, operand 0']
    #allocation3 [shape = 's32[2]{0}', space=sflag, size = 0x8, scoped, tag = 'scoped memory for _lambda_.4']
    %9 = vsyncpa [#allocation3], 0
    %s10 = scalar_lea.sflag [#allocation3], 1
    %11 = vsyncpa %s10, 0
    loop: start=0, step=1, limit=4
    $region2: #{_lambda_.4} parent=1 // loop_pre_header
      _
    $region3: #{_lambda_.4} parent=1 // loop_header
      %s13 = sphi 0, %s17
      %p14 = scmp.ge.s32.totalorder %s13, 4
      %s20 = sphi 0, %s32
      %s21 = sphi 0, %s28
      %s22 = sphi 0, %s20
      %s23 = sphi 0, %s21
      %s24 = sphi 0, %s22
      %s25 = sphi 0, %s23
      %s37 = sphi 0, %s39
      %s40 = sphi 0, %s37
      %s41 = sphi 0, %s40
      %s57 = sphi 0, %s41
      %s61 = sphi 0, %s61
      %s63 = sphi 0, %s61
      %s64 = sphi 0, %s63
      %s78 = sphi 0, %s64
      %s82 = sphi 0, %s82
      %s84 = sphi 0, %s82
      %s85 = sphi 0, %s84
      %s99 = sphi 0, %s85
      %s103 = sphi 0, %s103
      %s105 = sphi 0, %s103
      %s106 = sphi 0, %s105
      %s120 = sphi 0, %s106
      %s128 = sphi 0, %s130
      %s131 = sphi 0, %s128
      %s132 = sphi 0, %s131
      %s148 = sphi 0, %s132
    $region4: #{_lambda_.4} parent=1 // loop_header_branch
      %16 = sbr.rel (%p14) target = $region8
    $region5: #{_lambda_.4} parent=1 // loop_body
      %s18 = ssub.s32 %s13, 1
      %s19 = ssub.s32 %s13, 2
      %s26 = sadd.s32 1, %s21
      %p27 = scmp.ge.s32.totalorder %s26, 1
      %s28 = scalar_select %p27, 0, %s26
      %s29 = sadd.s32 1, %s20
      %s30 = scalar_select %p27, %s29, %s20
      %p31 = scmp.ge.s32.totalorder %s30, 2
      %s32 = scalar_select %p31, 0, %s30
      %s33 = ssub.s32 %s20, %s32
      %s34 = ssub.s32 %s21, %s28
      %s35 = sor.u32 %s33, %s34
      %p36 = scmp.eq.s32.totalorder %s35, 0
      %s38 = sadd.s32 %s37, 1
      %s39 = scalar_select %p36, %s37, %s38
      %p42 = pneg %p36
      %p43 = scmp.eq.s32.totalorder %s13, 1
      %p44 = por %p42, %p43
      %p45 = scmp.ne.s32.totalorder %s37, %s40
      %p46 = scmp.eq.s32.totalorder %s13, 0
      %p47 = por %p45, %p46
      %p48 = scmp.ne.s32.totalorder %s37, %s40
      %p49 = scmp.eq.s32.totalorder %s18, 1
      %p50 = por %p48, %p49
      %p51 = scmp.ne.s32.totalorder %s40, %s41
      %p52 = scmp.eq.s32.totalorder %s18, 0
      %p53 = por %p51, %p52
      %p54 = scmp.ne.s32.totalorder %s40, %s41
      %p55 = scmp.eq.s32.totalorder %s19, 1
      %p56 = por %p54, %p55
      %p58 = scmp.ne.s32.totalorder %s41, %s57
      %p59 = scmp.eq.s32.totalorder %s19, 0
      %p60 = por %p58, %p59
      %s62 = sadd.s32 %s61, 1
      %p65 = scmp.eq.s32.totalorder %s13, 1
      %p66 = scmp.ne.s32.totalorder %s61, %s63
      %p67 = scmp.eq.s32.totalorder %s13, 0
      %p68 = por %p66, %p67
      %p69 = scmp.ne.s32.totalorder %s61, %s63
      %p70 = scmp.eq.s32.totalorder %s18, 1
      %p71 = por %p69, %p70
      %p72 = scmp.ne.s32.totalorder %s63, %s64
      %p73 = scmp.eq.s32.totalorder %s18, 0
      %p74 = por %p72, %p73
      %p75 = scmp.ne.s32.totalorder %s63, %s64
      %p76 = scmp.eq.s32.totalorder %s19, 1
      %p77 = por %p75, %p76
      %p79 = scmp.ne.s32.totalorder %s64, %s78
      %p80 = scmp.eq.s32.totalorder %s19, 0
      %p81 = por %p79, %p80
      %s83 = sadd.s32 %s82, 1
      %p86 = scmp.eq.s32.totalorder %s13, 1
      %p87 = scmp.ne.s32.totalorder %s82, %s84
      %p88 = scmp.eq.s32.totalorder %s13, 0
      %p89 = por %p87, %p88
      %p90 = scmp.ne.s32.totalorder %s82, %s84
      %p91 = scmp.eq.s32.totalorder %s18, 1
      %p92 = por %p90, %p91
      %p93 = scmp.ne.s32.totalorder %s84, %s85
      %p94 = scmp.eq.s32.totalorder %s18, 0
      %p95 = por %p93, %p94
      %p96 = scmp.ne.s32.totalorder %s84, %s85
      %p97 = scmp.eq.s32.totalorder %s19, 1
      %p98 = por %p96, %p97
      %p100 = scmp.ne.s32.totalorder %s85, %s99
      %p101 = scmp.eq.s32.totalorder %s19, 0
      %p102 = por %p100, %p101
      %s104 = sadd.s32 %s103, 1
      %p107 = scmp.eq.s32.totalorder %s13, 1
      %p108 = scmp.ne.s32.totalorder %s103, %s105
      %p109 = scmp.eq.s32.totalorder %s13, 0
      %p110 = por %p108, %p109
      %p111 = scmp.ne.s32.totalorder %s103, %s105
      %p112 = scmp.eq.s32.totalorder %s18, 1
      %p113 = por %p111, %p112
      %p114 = scmp.ne.s32.totalorder %s105, %s106
      %p115 = scmp.eq.s32.totalorder %s18, 0
      %p116 = por %p114, %p115
      %p117 = scmp.ne.s32.totalorder %s105, %s106
      %p118 = scmp.eq.s32.totalorder %s19, 1
      %p119 = por %p117, %p118
      %p121 = scmp.ne.s32.totalorder %s106, %s120
      %p122 = scmp.eq.s32.totalorder %s19, 0
      %p123 = por %p121, %p122
      %s124 = ssub.s32 %s20, %s32
      %s125 = ssub.s32 %s21, %s28
      %s126 = sor.u32 %s124, %s125
      %p127 = scmp.eq.s32.totalorder %s126, 0
      %s129 = sadd.s32 %s128, 1
      %s130 = scalar_select %p127, %s128, %s129
      %p133 = pneg %p127
      %p134 = scmp.eq.s32.totalorder %s13, 1
      %p135 = por %p133, %p134
      %p136 = scmp.ne.s32.totalorder %s128, %s131
      %p137 = scmp.eq.s32.totalorder %s13, 0
      %p138 = por %p136, %p137
      %p139 = scmp.ne.s32.totalorder %s128, %s131
      %p140 = scmp.eq.s32.totalorder %s18, 1
      %p141 = por %p139, %p140
      %p142 = scmp.ne.s32.totalorder %s131, %s132
      %p143 = scmp.eq.s32.totalorder %s18, 0
      %p144 = por %p142, %p143
      %p145 = scmp.ne.s32.totalorder %s131, %s132
      %p146 = scmp.eq.s32.totalorder %s19, 1
      %p147 = por %p145, %p146
      %p149 = scmp.ne.s32.totalorder %s132, %s148
      %p150 = scmp.eq.s32.totalorder %s19, 0
      %p151 = por %p149, %p150
      %p152 = scmp.le.s32.totalorder 1, %s13
      %p153 = scmp.lt.s32.totalorder %s13, 3
      %p154 = pnand %p152, %p153
      %p155 = pneg %p154
      // Predicated region
      $region9: #{_lambda_.4} parent=5 // pred_check
        _
      $region10: #{_lambda_.4} parent=5 // pred_check_branch
        %157 = sbr.rel (%p154) target = $region12
      $region11: #{_lambda_.4} parent=5 // pred_region
        %s158 = ssub.s32 %s13, 1
        // Predicated region
        $region13: #{_lambda_.4} parent=11 // pred_check
          %p159 = pneg %p74
        $region14: #{_lambda_.4} parent=11 // pred_check_branch
          %161 = sbr.rel (%p159) target = $region16
        $region15: #{_lambda_.4} parent=11 // pred_region
          _
        $region16: #{_lambda_.4} parent=11 // pred_fallthru
          _
        // Predicated region
        $region17: #{_lambda_.4} parent=11 // pred_check
          %p162 = pneg %p95
        $region18: #{_lambda_.4} parent=11 // pred_check_branch
          %164 = sbr.rel (%p162) target = $region20
        $region19: #{_lambda_.4} parent=11 // pred_region
          _
        $region20: #{_lambda_.4} parent=11 // pred_fallthru
          _
        // Predicated region
        $region21: #{_lambda_.4} parent=11 // pred_check
          %p165 = pneg %p116
        $region22: #{_lambda_.4} parent=11 // pred_check_branch
          %167 = sbr.rel (%p165) target = $region24
        $region23: #{_lambda_.4} parent=11 // pred_region
          _
        $region24: #{_lambda_.4} parent=11 // pred_fallthru
          _
      $region12: #{_lambda_.4} parent=5 // pred_fallthru
        _
      %p168 = scmp.lt.s32.totalorder %s13, 2
      // Predicated region
      $region25: #{_lambda_.4} parent=5 // pred_check
        %p169 = pneg %p168
      $region26: #{_lambda_.4} parent=5 // pred_check_branch
        %171 = sbr.rel (%p169) target = $region28
      $region27: #{_lambda_.4} parent=5 // pred_region
        // Predicated region
        $region29: #{_lambda_.4} parent=27 // pred_check
          %p172 = pneg %p47
        $region30: #{_lambda_.4} parent=27 // pred_check_branch
          %174 = sbr.rel (%p172) target = $region32
        $region31: #{_lambda_.4} parent=27 // pred_region
          %s175 = sand.u32 %s37, 1
          %s176 = scalar_lea.sflag [#allocation3], %s175
          %s177 = sand.u32 %s37, 1
          %s178 = smul.addr %s177, 64
          %s179 = scalar_lea.vmem [#allocation2], %s178
          %s180 = smul.u32 8, %s21
          %s182 = ssub.s32 1024, 1024
          %183 = vsyncadd %s176, %s182
          %s184 = smul.addr %s20, 8
          %s185 = sadd.s32 %s180, %s184
          %s186 = smul.addr %s185, 128
          %s187 = scalar_lea.hbm %s0, %s186
          %s188 = sshll.u32 %s179, 4
          %s189 = int_to_ptr.vmem [resolvable:$true] %s188
          %194 = dma.hbm_to_vmem [thread:$0]  %s187, 1024, %s189, %s176, 128, 128, 8
        $region32: #{_lambda_.4} parent=27 // pred_fallthru
          _
      $region28: #{_lambda_.4} parent=5 // pred_fallthru
        _
      %p195 = scmp.le.s32.totalorder 1, %s13
      %p196 = scmp.lt.s32.totalorder %s13, 3
      %p197 = pnand %p195, %p196
      %p198 = pneg %p197
      // Predicated region
      $region33: #{_lambda_.4} parent=5 // pred_check
        _
      $region34: #{_lambda_.4} parent=5 // pred_check_branch
        %200 = sbr.rel (%p197) target = $region36
      $region35: #{_lambda_.4} parent=5 // pred_region
        %s201 = ssub.s32 %s13, 1
        %s202 = sand.u32 %s40, 1
        %s203 = scalar_lea.sflag [#allocation3], %s202
        %s204 = sand.u32 %s40, 1
        %s205 = smul.addr %s204, 64
        %s206 = scalar_lea.vmem [#allocation2], %s205
        // Predicated region
        $region37: #{_lambda_.4} parent=35 // pred_check
          %p207 = pneg %p53
        $region38: #{_lambda_.4} parent=35 // pred_check_branch
          %209 = sbr.rel (%p207) target = $region40
        $region39: #{_lambda_.4} parent=35 // pred_region
          %210 = dma.done %s203, 1024
        $region40: #{_lambda_.4} parent=35 // pred_fallthru
          _
        %s211 = sand.u32 %s40, 1
        %s212 = scalar_lea.sflag [#allocation3], %s211
        %s213 = sand.u32 %s40, 1
        %s214 = smul.addr %s213, 64
        %s215 = scalar_lea.vmem [#allocation2], %s214
        %p216 = pneg %p53
        %p217 = pneg %p50
        %p218 = pneg %p74
        %p219 = pneg %p71
        %p220 = pneg %p95
        %p221 = pneg %p92
        %p222 = pneg %p116
        %p223 = pneg %p113
        %p224 = pneg %p144
        %p225 = pneg %p141
        %s226 = smul.u32 8, %s23
        %p227 = scmp.lt.s32.totalorder %s22, 1
        %s228 = scalar_select %p227, %s22, 1
        %p229 = scmp.lt.s32.totalorder %s226, 7
        %s230 = scalar_select %p229, %s226, 7
        %s231 = smul.addr %s230, 2
        %s232 = smul.addr %s228, 16
        %s233 = sadd.s32 %s231, %s232
        %s234 = smul.addr %s233, 4
        %s235 = scalar_lea.vmem %s4, %s234
        %s236 = smul.u32 8, %s23
        %s237 = smul.u32 8, %s23
        %p238 = scmp.lt.s32.totalorder %s22, 1
        %s239 = scalar_select %p238, %s22, 1
        %p240 = scmp.lt.s32.totalorder %s237, 7
        %s241 = scalar_select %p240, %s237, 7
        %s242 = smul.addr %s241, 2
        %s243 = smul.addr %s239, 16
        %s244 = sadd.s32 %s242, %s243
        %s245 = smul.addr %s244, 4
        %s246 = scalar_lea.vmem %s4, %s245
        %s247 = smul.u32 8, %s23
        %v249 = vld [vmem:[%s206] sm:$0xff]
        %v250 = vld [vmem:[%s206 + $0x8] sm:$0xff]
        %v251 = vld [vmem:[%s206 + $0x10] sm:$0xff]
        %v252 = vld [vmem:[%s206 + $0x18] sm:$0xff]
        %v253 = vld [vmem:[%s206 + $0x20] sm:$0xff]
        %v254 = vld [vmem:[%s206 + $0x28] sm:$0xff]
        %v255 = vld [vmem:[%s206 + $0x30] sm:$0xff]
        %v256 = vld [vmem:[%s206 + $0x38] sm:$0xff]
        %v257 = vpack.c.bf16 %v250, %v249
        %v258 = vpack.c.bf16 %v252, %v251
        %v259 = vpack.c.bf16 %v254, %v253
        %v260 = vpack.c.bf16 %v256, %v255
        %v261 = vld [vmem:[%s1] sm:$0xf]
        %v262 = vld [vmem:[%s1 + $0x4] sm:$0xf]
        %v265 = vunpack.c.l.b16 %v261
        %v266 = vunpack.c.l.b16 %v262
        %v267 = vpack.c.b16 %v266, %v265
        %vm269 = vcmask 130048
        %v271 = vsel %vm269, %v257, 0
        %v274 = vsel %vm269, %v258, 0
        %v277 = vsel %vm269, %v259, 0
        %v280 = vsel %vm269, %v260, 0
        %282 = vmatprep.subr.bf16.mxu0 0
        %283 = vmatpush1.bf16.msra.mxu0 %v267
        %284 = vmatprep.subr.bf16.mxu0 0
        %285 = vmatpush1.bf16.msra.mxu0 0
        %286 = vmatprep.subr.bf16.mxu0 0
        %287 = vmatpush1.bf16.msra.mxu0 0
        %288 = vmatprep.subr.bf16.mxu0 0
        %289 = vmatpush1.bf16.msra.mxu0 0
        %290 = vmatprep.subr.bf16.mxu0 0
        %291 = vmatpush1.bf16.msra.mxu0 0
        %292 = vmatprep.subr.bf16.mxu0 0
        %293 = vmatpush1.bf16.msra.mxu0 0
        %294 = vmatprep.subr.bf16.mxu0 0
        %295 = vmatpush1.bf16.msra.mxu0 0
        %296 = vmatprep.subr.bf16.mxu0 0
        %297 = vmatpush1.bf16.msra.mxu0 0
        %298 = vmatprep.subr.bf16.mxu0 0
        %299 = vmatpush1.bf16.msra.mxu0 0
        %300 = vmatprep.subr.bf16.mxu0 0
        %301 = vmatpush1.bf16.msra.mxu0 0
        %302 = vmatprep.subr.bf16.mxu0 0
        %303 = vmatpush1.bf16.msra.mxu0 0
        %304 = vmatprep.subr.bf16.mxu0 0
        %305 = vmatpush1.bf16.msra.mxu0 0
        %306 = vmatprep.subr.bf16.mxu0 0
        %307 = vmatpush1.bf16.msra.mxu0 0
        %308 = vmatprep.subr.bf16.mxu0 0
        %309 = vmatpush1.bf16.msra.mxu0 0
        %310 = vmatprep.subr.bf16.mxu0 0
        %311 = vmatpush1.bf16.msra.mxu0 0
        %312 = vmatprep.subr.bf16.mxu0 0
        %313 = vmatpush1.bf16.msra.mxu0 0
        %314 = vmatprep.mubr.bf16.mxu0 0
        %315 = vmatmul.mubr.bf16.gmra.mrb[0].mxu0 %v271
        %v316 = vpop.f32.mrb[0].mxu0
        %v317 = vadd.f32 0.0, %v316
        %v318 = vpop.f32.mrb[0].mxu0
        %v319 = vpop.f32.mrb[0].mxu0
        %v320 = vadd.f32 0.0, %v319
        %v321 = vpop.f32.mrb[0].mxu0
        %322 = vmatprep.mubr.bf16.mxu0 0
        %323 = vmatmul.mubr.bf16.gmra.mrb[0].mxu0 %v274
        %v324 = vpop.f32.mrb[0].mxu0
        %v325 = vadd.f32 0.0, %v324
        %v326 = vpop.f32.mrb[0].mxu0
        %v327 = vpop.f32.mrb[0].mxu0
        %v328 = vadd.f32 0.0, %v327
        %v329 = vpop.f32.mrb[0].mxu0
        %330 = vmatprep.mubr.bf16.mxu0 0
        %331 = vmatmul.mubr.bf16.gmra.mrb[0].mxu0 %v277
        %v332 = vpop.f32.mrb[0].mxu0
        %v333 = vadd.f32 0.0, %v332
        %v334 = vpop.f32.mrb[0].mxu0
        %v335 = vpop.f32.mrb[0].mxu0
        %v336 = vadd.f32 0.0, %v335
        %v337 = vpop.f32.mrb[0].mxu0
        %338 = vmatprep.mubr.bf16.mxu0 0
        %339 = vmatmul.mubr.bf16.gmra.mrb[0].mxu0 %v280
        %v340 = vpop.f32.mrb[0].mxu0
        %v341 = vadd.f32 0.0, %v340
        %v342 = vpop.f32.mrb[0].mxu0
        %v343 = vpop.f32.mrb[0].mxu0
        %v344 = vadd.f32 0.0, %v343
        %v345 = vpop.f32.mrb[0].mxu0
        %346 = vdwg.mxu0
        %v347 = vld [vmem:[%s2] sm:$0x1]
        %v349 = vlaneseq
        %v350 = vshrl.u32 %v349, 7
        %v351 = vsub.s32 0, %v350
        %v352 = vrot.slane %v347, %v351
        %v354 = vmul.f32 %v317, %v352
        %v355 = vmul.f32 %v320, %v352
        %v356 = vmul.f32 %v325, %v352
        %v357 = vmul.f32 %v328, %v352
        %v358 = vmul.f32 %v333, %v352
        %v359 = vmul.f32 %v336, %v352
        %v360 = vmul.f32 %v341, %v352
        %v361 = vmul.f32 %v344, %v352
        %v362 = vld [vmem:[%s3] sm:$0x1]
        %v364 = vlaneseq
        %v365 = vshrl.u32 %v364, 7
        %v366 = vsub.s32 0, %v365
        %v367 = vrot.slane %v362, %v366
        %v369 = vadd.f32 %v354, %v367
        %v370 = vadd.f32 %v355, %v367
        %v371 = vadd.f32 %v356, %v367
        %v372 = vadd.f32 %v357, %v367
        %v373 = vadd.f32 %v358, %v367
        %v374 = vadd.f32 %v359, %v367
        %v375 = vadd.f32 %v360, %v367
        %v376 = vadd.f32 %v361, %v367
        %v377 = vmax.f32 %v369, 0.0
        %v378 = vmax.f32 %v370, 0.0
        %v379 = vmax.f32 %v371, 0.0
        %v380 = vmax.f32 %v372, 0.0
        %v381 = vmax.f32 %v373, 0.0
        %v382 = vmax.f32 %v374, 0.0
        %v383 = vmax.f32 %v375, 0.0
        %v384 = vmax.f32 %v376, 0.0
        %v385 = vpack.c.bf16 %v377, %v377
        %v386 = vpack.c.bf16 %v378, %v378
        %v387 = vpack.c.bf16 %v379, %v379
        %v388 = vpack.c.bf16 %v380, %v380
        %v389 = vpack.c.bf16 %v381, %v381
        %v390 = vpack.c.bf16 %v382, %v382
        %v391 = vpack.c.bf16 %v383, %v383
        %v392 = vpack.c.bf16 %v384, %v384
        %vm393 = vcmask 1040384
        %vm394 = vsmask.f32 256
        %vm395 = vmand %vm393, %vm394
        %v396 = vld [vmem:[%s246] sm:$0x1]
        %v397 = vsel %vm395, 0, %v396
        %398 = vst [vmem:[%s246] sm:$0x1] %v397
        %v399 = vld [vmem:[%s246 + $0x8] sm:$0x1]
        %v400 = vsel %vm395, 0, %v399
        %401 = vst [vmem:[%s246 + $0x8] sm:$0x1] %v400
        %v402 = vld [vmem:[%s246 + $0x10] sm:$0x1]
        %v403 = vsel %vm395, 0, %v402
        %404 = vst [vmem:[%s246 + $0x10] sm:$0x1] %v403
        %v405 = vld [vmem:[%s246 + $0x18] sm:$0x1]
        %v406 = vsel %vm395, 0, %v405
        %407 = vst [vmem:[%s246 + $0x18] sm:$0x1] %v406
        %v408 = vld [vmem:[%s246 + $0x20] sm:$0x1]
        %v409 = vsel %vm395, 0, %v408
        %410 = vst [vmem:[%s246 + $0x20] sm:$0x1] %v409
        %v411 = vld [vmem:[%s246 + $0x28] sm:$0x1]
        %v412 = vsel %vm395, 0, %v411
        %413 = vst [vmem:[%s246 + $0x28] sm:$0x1] %v412
        %v414 = vld [vmem:[%s246 + $0x30] sm:$0x1]
        %v415 = vsel %vm395, 0, %v414
        %416 = vst [vmem:[%s246 + $0x30] sm:$0x1] %v415
        %v417 = vld [vmem:[%s246 + $0x38] sm:$0x1]
        %v418 = vsel %vm395, 0, %v417
        %419 = vst [vmem:[%s246 + $0x38] sm:$0x1] %v418
        %vm420 = vcmask 1043456
        %vm421 = vsmask.f32 7938
        %vm422 = vmand %vm420, %vm421
        %v423 = vld [vmem:[%s246 + $0x4] sm:$0xf]
        %v424 = vsel %vm422, 0, %v423
        %425 = vst [vmem:[%s246 + $0x4] sm:$0xf] %v424
        %v426 = vld [vmem:[%s246 + $0xc] sm:$0xf]
        %v427 = vsel %vm422, 0, %v426
        %428 = vst [vmem:[%s246 + $0xc] sm:$0xf] %v427
        %v429 = vld [vmem:[%s246 + $0x14] sm:$0xf]
        %v430 = vsel %vm422, 0, %v429
        %431 = vst [vmem:[%s246 + $0x14] sm:$0xf] %v430
        %v432 = vld [vmem:[%s246 + $0x1c] sm:$0xf]
        %v433 = vsel %vm422, 0, %v432
        %434 = vst [vmem:[%s246 + $0x1c] sm:$0xf] %v433
        %v435 = vld [vmem:[%s246 + $0x24] sm:$0xf]
        %v436 = vsel %vm422, 0, %v435
        %437 = vst [vmem:[%s246 + $0x24] sm:$0xf] %v436
        %v438 = vld [vmem:[%s246 + $0x2c] sm:$0xf]
        %v439 = vsel %vm422, 0, %v438
        %440 = vst [vmem:[%s246 + $0x2c] sm:$0xf] %v439
        %v441 = vld [vmem:[%s246 + $0x34] sm:$0xf]
        %v442 = vsel %vm422, 0, %v441
        %443 = vst [vmem:[%s246 + $0x34] sm:$0xf] %v442
        %v444 = vld [vmem:[%s246 + $0x3c] sm:$0xf]
        %v445 = vsel %vm422, 0, %v444
        %446 = vst [vmem:[%s246 + $0x3c] sm:$0xf] %v445
        %v455 = vunpack.c.l.b16 %v385
        %v456 = vunpack.c.l.b16 %v386
        %v457 = vunpack.c.l.b16 %v387
        %v458 = vunpack.c.l.b16 %v388
        %v459 = vunpack.c.l.b16 %v389
        %v460 = vunpack.c.l.b16 %v390
        %v461 = vunpack.c.l.b16 %v391
        %v462 = vunpack.c.l.b16 %v392
        %v463 = vpack.c.b16 %v455, %v455
        %v464 = vpack.c.b16 %v456, %v456
        %v465 = vpack.c.b16 %v457, %v457
        %v466 = vpack.c.b16 %v458, %v458
        %v467 = vpack.c.b16 %v459, %v459
        %v468 = vpack.c.b16 %v460, %v460
        %v469 = vpack.c.b16 %v461, %v461
        %v470 = vpack.c.b16 %v462, %v462
        %v472 = vshrl.u32 %v463, 16
        %v474 = vrot.slane %v472, 7
        %v475 = vshll.u32 %v463, 16
        %v477 = vor.u32 %v474, %v475
        %v478 = vrot.slane %v474, 4
        %v480 = vshrl.u32 %v464, 16
        %v482 = vrot.slane %v480, 7
        %v483 = vshll.u32 %v464, 16
        %v485 = vor.u32 %v482, %v483
        %v486 = vrot.slane %v482, 4
        %v488 = vshrl.u32 %v465, 16
        %v490 = vrot.slane %v488, 7
        %v491 = vshll.u32 %v465, 16
        %v493 = vor.u32 %v490, %v491
        %v494 = vrot.slane %v490, 4
        %v496 = vshrl.u32 %v466, 16
        %v498 = vrot.slane %v496, 7
        %v499 = vshll.u32 %v466, 16
        %v501 = vor.u32 %v498, %v499
        %v502 = vrot.slane %v498, 4
        %v504 = vshrl.u32 %v467, 16
        %v506 = vrot.slane %v504, 7
        %v507 = vshll.u32 %v467, 16
        %v509 = vor.u32 %v506, %v507
        %v510 = vrot.slane %v506, 4
        %v512 = vshrl.u32 %v468, 16
        %v514 = vrot.slane %v512, 7
        %v515 = vshll.u32 %v468, 16
        %v517 = vor.u32 %v514, %v515
        %v518 = vrot.slane %v514, 4
        %v520 = vshrl.u32 %v469, 16
        %v522 = vrot.slane %v520, 7
        %v523 = vshll.u32 %v469, 16
        %v525 = vor.u32 %v522, %v523
        %v526 = vrot.slane %v522, 4
        %v528 = vshrl.u32 %v470, 16
        %v530 = vrot.slane %v528, 7
        %v531 = vshll.u32 %v470, 16
        %v533 = vor.u32 %v530, %v531
        %v534 = vrot.slane %v530, 4
        %v551 = vld [vmem:[%s246] sm:$0xf]
        %v552 = vsel %vm422, %v477, %v551
        %553 = vst [vmem:[%s246] sm:$0xf] %v552
        %v554 = vld [vmem:[%s246 + $0x4] sm:$0x1]
        %v555 = vsel %vm395, %v478, %v554
        %556 = vst [vmem:[%s246 + $0x4] sm:$0x1] %v555
        %v557 = vld [vmem:[%s246 + $0x8] sm:$0xf]
        %v558 = vsel %vm422, %v485, %v557
        %559 = vst [vmem:[%s246 + $0x8] sm:$0xf] %v558
        %v560 = vld [vmem:[%s246 + $0xc] sm:$0x1]
        %v561 = vsel %vm395, %v486, %v560
        %562 = vst [vmem:[%s246 + $0xc] sm:$0x1] %v561
        %v563 = vld [vmem:[%s246 + $0x10] sm:$0xf]
        %v564 = vsel %vm422, %v493, %v563
        %565 = vst [vmem:[%s246 + $0x10] sm:$0xf] %v564
        %v566 = vld [vmem:[%s246 + $0x14] sm:$0x1]
        %v567 = vsel %vm395, %v494, %v566
        %568 = vst [vmem:[%s246 + $0x14] sm:$0x1] %v567
        %v569 = vld [vmem:[%s246 + $0x18] sm:$0xf]
        %v570 = vsel %vm422, %v501, %v569
        %571 = vst [vmem:[%s246 + $0x18] sm:$0xf] %v570
        %v572 = vld [vmem:[%s246 + $0x1c] sm:$0x1]
        %v573 = vsel %vm395, %v502, %v572
        %574 = vst [vmem:[%s246 + $0x1c] sm:$0x1] %v573
        %v575 = vld [vmem:[%s246 + $0x20] sm:$0xf]
        %v576 = vsel %vm422, %v509, %v575
        %577 = vst [vmem:[%s246 + $0x20] sm:$0xf] %v576
        %v578 = vld [vmem:[%s246 + $0x24] sm:$0x1]
        %v579 = vsel %vm395, %v510, %v578
        %580 = vst [vmem:[%s246 + $0x24] sm:$0x1] %v579
        %v581 = vld [vmem:[%s246 + $0x28] sm:$0xf]
        %v582 = vsel %vm422, %v517, %v581
        %583 = vst [vmem:[%s246 + $0x28] sm:$0xf] %v582
        %v584 = vld [vmem:[%s246 + $0x2c] sm:$0x1]
        %v585 = vsel %vm395, %v518, %v584
        %586 = vst [vmem:[%s246 + $0x2c] sm:$0x1] %v585
        %v587 = vld [vmem:[%s246 + $0x30] sm:$0xf]
        %v588 = vsel %vm422, %v525, %v587
        %589 = vst [vmem:[%s246 + $0x30] sm:$0xf] %v588
        %v590 = vld [vmem:[%s246 + $0x34] sm:$0x1]
        %v591 = vsel %vm395, %v526, %v590
        %592 = vst [vmem:[%s246 + $0x34] sm:$0x1] %v591
        %v593 = vld [vmem:[%s246 + $0x38] sm:$0xf]
        %v594 = vsel %vm422, %v533, %v593
        %595 = vst [vmem:[%s246 + $0x38] sm:$0xf] %v594
        %v596 = vld [vmem:[%s246 + $0x3c] sm:$0x1]
        %v597 = vsel %vm395, %v534, %v596
        %598 = vst [vmem:[%s246 + $0x3c] sm:$0x1] %v597
        %s599 = smul.u32 8, %s23
        %p600 = scmp.lt.s32.totalorder %s22, 1
        %s601 = scalar_select %p600, %s22, 1
        %p602 = scmp.lt.s32.totalorder %s599, 7
        %s603 = scalar_select %p602, %s599, 7
        %s604 = smul.addr %s603, 2
        %s605 = smul.addr %s601, 16
        %s606 = sadd.s32 %s604, %s605
        %s607 = smul.addr %s606, 4
        %s608 = scalar_lea.vmem %s4, %s607
        // Predicated region
        $region41: #{_lambda_.4} parent=35 // pred_check
          %p609 = pneg %p141
        $region42: #{_lambda_.4} parent=35 // pred_check_branch
          %611 = sbr.rel (%p609) target = $region44
        $region43: #{_lambda_.4} parent=35 // pred_region
          %s612 = smul.u32 8, %s23
        $region44: #{_lambda_.4} parent=35 // pred_fallthru
          _
      $region36: #{_lambda_.4} parent=5 // pred_fallthru
        _
      %p613 = scmp.le.s32.totalorder 2, %s13
      // Predicated region
      $region45: #{_lambda_.4} parent=5 // pred_check
        %p614 = pneg %p613
      $region46: #{_lambda_.4} parent=5 // pred_check_branch
        %616 = sbr.rel (%p614) target = $region48
      $region47: #{_lambda_.4} parent=5 // pred_region
        %s617 = ssub.s32 %s13, 2
        // Predicated region
        $region49: #{_lambda_.4} parent=47 // pred_check
          %p618 = pneg %p147
        $region50: #{_lambda_.4} parent=47 // pred_check_branch
          %620 = sbr.rel (%p618) target = $region52
        $region51: #{_lambda_.4} parent=47 // pred_region
          %s621 = smul.u32 8, %s25
          %p622 = scmp.lt.s32.totalorder %s24, 1
          %s623 = scalar_select %p622, %s24, 1
          %p624 = scmp.lt.s32.totalorder %s621, 7
          %s625 = scalar_select %p624, %s621, 7
          %s626 = smul.addr %s625, 2
          %s627 = smul.addr %s623, 16
          %s628 = sadd.s32 %s626, %s627
          %s629 = smul.addr %s628, 4
          %s630 = scalar_lea.vmem %s4, %s629
        $region52: #{_lambda_.4} parent=47 // pred_fallthru
          _
      $region48: #{_lambda_.4} parent=5 // pred_fallthru
        _
    $region6: #{_lambda_.4} parent=1 // loop_footer
      %s17 = sadd.s32 1, %s13
    $region7: #{_lambda_.4} parent=1 // loop_footer_branch
      %12 = sbr.rel target = $region3
    $region8: #{_lambda_.4} parent=1 // loop_exit
      _
    %631 = vsyncpa [#allocation3], 1
    %s632 = scalar_lea.sflag [#allocation3], 1
    %633 = vsyncpa %s632, 1

// kernel: _lambda_.6
$region0: #{_lambda_.6}
  #allocation0 [shape = 'u32[]', space=smem, size = 0x4, offset = 0x4, fixed_abs, tag = 'smem constant byte address 0x4 - core index']
  #allocation1 [shape = 'u32[144,128]{1,0:T(1,128)}', space=vmem, size = 0x12000, scoped, tag = 'internal scratch']
  #allocation2 [shape = 'f32[1,128]{1,0:T(1,128)}', space=vmem, size = 0x200, scoped, tag = 'scratch operand']
  %s0 = inlined_call_operand.vmem [shape: bf16[2,8,8,128], index: 0, kind: input, shape index: {}]
  %s1 = inlined_call_operand.vmem [shape: bf16[128,128], index: 1, kind: input, shape index: {}]
  %s2 = inlined_call_operand.vmem [shape: f32[1,128], index: 2, kind: input, shape index: {}]
  %s3 = inlined_call_operand.vmem [shape: f32[1,128], index: 3, kind: input, shape index: {}]
  %s4 = inlined_call_operand.vmem [shape: f32[128,128], index: 4, kind: input, shape index: {}]
  %s5 = inlined_call_operand.vmem [shape: f32[1,128], index: 5, kind: input, shape index: {}]
  %s6 = inlined_call_operand.vmem [shape: f32[128,128], index: 6, kind: input, shape index: {}]
  %s7 = inlined_call_operand.vmem [shape: f32[1,128], index: 7, kind: input, shape index: {}]
  %s8 = inlined_call_operand.vmem [shape: f32[1,128], index: 8, kind: input, shape index: {}]
  %s9 = inlined_call_operand.vmem [shape: bf16[2,8,8,128], index: 9, kind: output, shape index: {0}]
  %s10 = inlined_call_operand.vmem [shape: f32[2,1,128], index: 10, kind: output, shape index: {1}]
  %11 = xla_tuple %s9, %s10
  %s12 = sld [smem:[#allocation0]]
  $region85: #{_lambda_.6} parent=0
    _
  %s14 = ssub.s32 1, %s12
  %s15 = scalar_select 0, %s14, %s12
  loop: start=0, step=1, limit=4
  $region2: #{_lambda_.6} parent=0 // loop_pre_header
    _
  $region3: #{_lambda_.6} parent=0 // loop_header
    %s17 = sphi 0, %s21
    %p18 = scmp.ge.s32.totalorder %s17, 4
    %s24 = sphi 0, %s36
    %s25 = sphi 0, %s32
    %s26 = sphi 0, %s24
    %s27 = sphi 0, %s25
    %s28 = sphi 0, %s26
    %s29 = sphi 0, %s27
    %s41 = sphi 0, %s43
    %s44 = sphi 0, %s41
    %s45 = sphi 0, %s44
    %s61 = sphi 0, %s45
    %s65 = sphi 0, %s65
    %s67 = sphi 0, %s65
    %s68 = sphi 0, %s67
    %s82 = sphi 0, %s68
    %s86 = sphi 0, %s86
    %s88 = sphi 0, %s86
    %s89 = sphi 0, %s88
    %s103 = sphi 0, %s89
    %s107 = sphi 0, %s107
    %s109 = sphi 0, %s107
    %s110 = sphi 0, %s109
    %s124 = sphi 0, %s110
    %s128 = sphi 0, %s128
    %s130 = sphi 0, %s128
    %s131 = sphi 0, %s130
    %s145 = sphi 0, %s131
    %s149 = sphi 0, %s149
    %s151 = sphi 0, %s149
    %s152 = sphi 0, %s151
    %s166 = sphi 0, %s152
    %s170 = sphi 0, %s170
    %s172 = sphi 0, %s170
    %s173 = sphi 0, %s172
    %s187 = sphi 0, %s173
    %s191 = sphi 0, %s191
    %s193 = sphi 0, %s191
    %s194 = sphi 0, %s193
    %s208 = sphi 0, %s194
    %s212 = sphi 0, %s212
    %s214 = sphi 0, %s212
    %s215 = sphi 0, %s214
    %s229 = sphi 0, %s215
    %s237 = sphi 0, %s239
    %s240 = sphi 0, %s237
    %s241 = sphi 0, %s240
    %s257 = sphi 0, %s241
    %s263 = sphi 0, %s265
    %s266 = sphi 0, %s263
    %s267 = sphi 0, %s266
    %s283 = sphi 0, %s267
  $region4: #{_lambda_.6} parent=0 // loop_header_branch
    %20 = sbr.rel (%p18) target = $region8
  $region5: #{_lambda_.6} parent=0 // loop_body
    %s22 = ssub.s32 %s17, 1
    %s23 = ssub.s32 %s17, 2
    %s30 = sadd.s32 1, %s25
    %p31 = scmp.ge.s32.totalorder %s30, 1
    %s32 = scalar_select %p31, 0, %s30
    %s33 = sadd.s32 1, %s24
    %s34 = scalar_select %p31, %s33, %s24
    %p35 = scmp.ge.s32.totalorder %s34, 2
    %s36 = scalar_select %p35, 0, %s34
    %s37 = ssub.s32 %s24, %s36
    %s38 = ssub.s32 %s25, %s32
    %s39 = sor.u32 %s37, %s38
    %p40 = scmp.eq.s32.totalorder %s39, 0
    %s42 = sadd.s32 %s41, 1
    %s43 = scalar_select %p40, %s41, %s42
    %p46 = pneg %p40
    %p47 = scmp.eq.s32.totalorder %s17, 1
    %p48 = por %p46, %p47
    %p49 = scmp.ne.s32.totalorder %s41, %s44
    %p50 = scmp.eq.s32.totalorder %s17, 0
    %p51 = por %p49, %p50
    %p52 = scmp.ne.s32.totalorder %s41, %s44
    %p53 = scmp.eq.s32.totalorder %s22, 1
    %p54 = por %p52, %p53
    %p55 = scmp.ne.s32.totalorder %s44, %s45
    %p56 = scmp.eq.s32.totalorder %s22, 0
    %p57 = por %p55, %p56
    %p58 = scmp.ne.s32.totalorder %s44, %s45
    %p59 = scmp.eq.s32.totalorder %s23, 1
    %p60 = por %p58, %p59
    %p62 = scmp.ne.s32.totalorder %s45, %s61
    %p63 = scmp.eq.s32.totalorder %s23, 0
    %p64 = por %p62, %p63
    %s66 = sadd.s32 %s65, 1
    %p69 = scmp.eq.s32.totalorder %s17, 1
    %p70 = scmp.ne.s32.totalorder %s65, %s67
    %p71 = scmp.eq.s32.totalorder %s17, 0
    %p72 = por %p70, %p71
    %p73 = scmp.ne.s32.totalorder %s65, %s67
    %p74 = scmp.eq.s32.totalorder %s22, 1
    %p75 = por %p73, %p74
    %p76 = scmp.ne.s32.totalorder %s67, %s68
    %p77 = scmp.eq.s32.totalorder %s22, 0
    %p78 = por %p76, %p77
    %p79 = scmp.ne.s32.totalorder %s67, %s68
    %p80 = scmp.eq.s32.totalorder %s23, 1
    %p81 = por %p79, %p80
    %p83 = scmp.ne.s32.totalorder %s68, %s82
    %p84 = scmp.eq.s32.totalorder %s23, 0
    %p85 = por %p83, %p84
    %s87 = sadd.s32 %s86, 1
    %p90 = scmp.eq.s32.totalorder %s17, 1
    %p91 = scmp.ne.s32.totalorder %s86, %s88
    %p92 = scmp.eq.s32.totalorder %s17, 0
    %p93 = por %p91, %p92
    %p94 = scmp.ne.s32.totalorder %s86, %s88
    %p95 = scmp.eq.s32.totalorder %s22, 1
    %p96 = por %p94, %p95
    %p97 = scmp.ne.s32.totalorder %s88, %s89
    %p98 = scmp.eq.s32.totalorder %s22, 0
    %p99 = por %p97, %p98
    %p100 = scmp.ne.s32.totalorder %s88, %s89
    %p101 = scmp.eq.s32.totalorder %s23, 1
    %p102 = por %p100, %p101
    %p104 = scmp.ne.s32.totalorder %s89, %s103
    %p105 = scmp.eq.s32.totalorder %s23, 0
    %p106 = por %p104, %p105
    %s108 = sadd.s32 %s107, 1
    %p111 = scmp.eq.s32.totalorder %s17, 1
    %p112 = scmp.ne.s32.totalorder %s107, %s109
    %p113 = scmp.eq.s32.totalorder %s17, 0
    %p114 = por %p112, %p113
    %p115 = scmp.ne.s32.totalorder %s107, %s109
    %p116 = scmp.eq.s32.totalorder %s22, 1
    %p117 = por %p115, %p116
    %p118 = scmp.ne.s32.totalorder %s109, %s110
    %p119 = scmp.eq.s32.totalorder %s22, 0
    %p120 = por %p118, %p119
    %p121 = scmp.ne.s32.totalorder %s109, %s110
    %p122 = scmp.eq.s32.totalorder %s23, 1
    %p123 = por %p121, %p122
    %p125 = scmp.ne.s32.totalorder %s110, %s124
    %p126 = scmp.eq.s32.totalorder %s23, 0
    %p127 = por %p125, %p126
    %s129 = sadd.s32 %s128, 1
    %p132 = scmp.eq.s32.totalorder %s17, 1
    %p133 = scmp.ne.s32.totalorder %s128, %s130
    %p134 = scmp.eq.s32.totalorder %s17, 0
    %p135 = por %p133, %p134
    %p136 = scmp.ne.s32.totalorder %s128, %s130
    %p137 = scmp.eq.s32.totalorder %s22, 1
    %p138 = por %p136, %p137
    %p139 = scmp.ne.s32.totalorder %s130, %s131
    %p140 = scmp.eq.s32.totalorder %s22, 0
    %p141 = por %p139, %p140
    %p142 = scmp.ne.s32.totalorder %s130, %s131
    %p143 = scmp.eq.s32.totalorder %s23, 1
    %p144 = por %p142, %p143
    %p146 = scmp.ne.s32.totalorder %s131, %s145
    %p147 = scmp.eq.s32.totalorder %s23, 0
    %p148 = por %p146, %p147
    %s150 = sadd.s32 %s149, 1
    %p153 = scmp.eq.s32.totalorder %s17, 1
    %p154 = scmp.ne.s32.totalorder %s149, %s151
    %p155 = scmp.eq.s32.totalorder %s17, 0
    %p156 = por %p154, %p155
    %p157 = scmp.ne.s32.totalorder %s149, %s151
    %p158 = scmp.eq.s32.totalorder %s22, 1
    %p159 = por %p157, %p158
    %p160 = scmp.ne.s32.totalorder %s151, %s152
    %p161 = scmp.eq.s32.totalorder %s22, 0
    %p162 = por %p160, %p161
    %p163 = scmp.ne.s32.totalorder %s151, %s152
    %p164 = scmp.eq.s32.totalorder %s23, 1
    %p165 = por %p163, %p164
    %p167 = scmp.ne.s32.totalorder %s152, %s166
    %p168 = scmp.eq.s32.totalorder %s23, 0
    %p169 = por %p167, %p168
    %s171 = sadd.s32 %s170, 1
    %p174 = scmp.eq.s32.totalorder %s17, 1
    %p175 = scmp.ne.s32.totalorder %s170, %s172
    %p176 = scmp.eq.s32.totalorder %s17, 0
    %p177 = por %p175, %p176
    %p178 = scmp.ne.s32.totalorder %s170, %s172
    %p179 = scmp.eq.s32.totalorder %s22, 1
    %p180 = por %p178, %p179
    %p181 = scmp.ne.s32.totalorder %s172, %s173
    %p182 = scmp.eq.s32.totalorder %s22, 0
    %p183 = por %p181, %p182
    %p184 = scmp.ne.s32.totalorder %s172, %s173
    %p185 = scmp.eq.s32.totalorder %s23, 1
    %p186 = por %p184, %p185
    %p188 = scmp.ne.s32.totalorder %s173, %s187
    %p189 = scmp.eq.s32.totalorder %s23, 0
    %p190 = por %p188, %p189
    %s192 = sadd.s32 %s191, 1
    %p195 = scmp.eq.s32.totalorder %s17, 1
    %p196 = scmp.ne.s32.totalorder %s191, %s193
    %p197 = scmp.eq.s32.totalorder %s17, 0
    %p198 = por %p196, %p197
    %p199 = scmp.ne.s32.totalorder %s191, %s193
    %p200 = scmp.eq.s32.totalorder %s22, 1
    %p201 = por %p199, %p200
    %p202 = scmp.ne.s32.totalorder %s193, %s194
    %p203 = scmp.eq.s32.totalorder %s22, 0
    %p204 = por %p202, %p203
    %p205 = scmp.ne.s32.totalorder %s193, %s194
    %p206 = scmp.eq.s32.totalorder %s23, 1
    %p207 = por %p205, %p206
    %p209 = scmp.ne.s32.totalorder %s194, %s208
    %p210 = scmp.eq.s32.totalorder %s23, 0
    %p211 = por %p209, %p210
    %s213 = sadd.s32 %s212, 1
    %p216 = scmp.eq.s32.totalorder %s17, 1
    %p217 = scmp.ne.s32.totalorder %s212, %s214
    %p218 = scmp.eq.s32.totalorder %s17, 0
    %p219 = por %p217, %p218
    %p220 = scmp.ne.s32.totalorder %s212, %s214
    %p221 = scmp.eq.s32.totalorder %s22, 1
    %p222 = por %p220, %p221
    %p223 = scmp.ne.s32.totalorder %s214, %s215
    %p224 = scmp.eq.s32.totalorder %s22, 0
    %p225 = por %p223, %p224
    %p226 = scmp.ne.s32.totalorder %s214, %s215
    %p227 = scmp.eq.s32.totalorder %s23, 1
    %p228 = por %p226, %p227
    %p230 = scmp.ne.s32.totalorder %s215, %s229
    %p231 = scmp.eq.s32.totalorder %s23, 0
    %p232 = por %p230, %p231
    %s233 = ssub.s32 %s24, %s36
    %s234 = ssub.s32 %s25, %s32
    %s235 = sor.u32 %s233, %s234
    %p236 = scmp.eq.s32.totalorder %s235, 0
    %s238 = sadd.s32 %s237, 1
    %s239 = scalar_select %p236, %s237, %s238
    %p242 = pneg %p236
    %p243 = scmp.eq.s32.totalorder %s17, 1
    %p244 = por %p242, %p243
    %p245 = scmp.ne.s32.totalorder %s237, %s240
    %p246 = scmp.eq.s32.totalorder %s17, 0
    %p247 = por %p245, %p246
    %p248 = scmp.ne.s32.totalorder %s237, %s240
    %p249 = scmp.eq.s32.totalorder %s22, 1
    %p250 = por %p248, %p249
    %p251 = scmp.ne.s32.totalorder %s240, %s241
    %p252 = scmp.eq.s32.totalorder %s22, 0
    %p253 = por %p251, %p252
    %p254 = scmp.ne.s32.totalorder %s240, %s241
    %p255 = scmp.eq.s32.totalorder %s23, 1
    %p256 = por %p254, %p255
    %p258 = scmp.ne.s32.totalorder %s241, %s257
    %p259 = scmp.eq.s32.totalorder %s23, 0
    %p260 = por %p258, %p259
    %s261 = ssub.s32 %s24, %s36
    %p262 = scmp.eq.s32.totalorder %s261, 0
    %s264 = sadd.s32 %s263, 1
    %s265 = scalar_select %p262, %s263, %s264
    %p268 = pneg %p262
    %p269 = scmp.eq.s32.totalorder %s17, 1
    %p270 = por %p268, %p269
    %p271 = scmp.ne.s32.totalorder %s263, %s266
    %p272 = scmp.eq.s32.totalorder %s17, 0
    %p273 = por %p271, %p272
    %p274 = scmp.ne.s32.totalorder %s263, %s266
    %p275 = scmp.eq.s32.totalorder %s22, 1
    %p276 = por %p274, %p275
    %p277 = scmp.ne.s32.totalorder %s266, %s267
    %p278 = scmp.eq.s32.totalorder %s22, 0
    %p279 = por %p277, %p278
    %p280 = scmp.ne.s32.totalorder %s266, %s267
    %p281 = scmp.eq.s32.totalorder %s23, 1
    %p282 = por %p280, %p281
    %p284 = scmp.ne.s32.totalorder %s267, %s283
    %p285 = scmp.eq.s32.totalorder %s23, 0
    %p286 = por %p284, %p285
    %p287 = scmp.le.s32.totalorder 1, %s17
    %p288 = scmp.lt.s32.totalorder %s17, 3
    %p289 = pnand %p287, %p288
    %p290 = pneg %p289
    // Predicated region
    $region9: #{_lambda_.6} parent=5 // pred_check
      _
    $region10: #{_lambda_.6} parent=5 // pred_check_branch
      %292 = sbr.rel (%p289) target = $region12
    $region11: #{_lambda_.6} parent=5 // pred_region
      %s293 = ssub.s32 %s17, 1
      // Predicated region
      $region13: #{_lambda_.6} parent=11 // pred_check
        %p294 = pneg %p78
      $region14: #{_lambda_.6} parent=11 // pred_check_branch
        %296 = sbr.rel (%p294) target = $region16
      $region15: #{_lambda_.6} parent=11 // pred_region
        _
      $region16: #{_lambda_.6} parent=11 // pred_fallthru
        _
      // Predicated region
      $region17: #{_lambda_.6} parent=11 // pred_check
        %p297 = pneg %p99
      $region18: #{_lambda_.6} parent=11 // pred_check_branch
        %299 = sbr.rel (%p297) target = $region20
      $region19: #{_lambda_.6} parent=11 // pred_region
        _
      $region20: #{_lambda_.6} parent=11 // pred_fallthru
        _
      // Predicated region
      $region21: #{_lambda_.6} parent=11 // pred_check
        %p300 = pneg %p120
      $region22: #{_lambda_.6} parent=11 // pred_check_branch
        %302 = sbr.rel (%p300) target = $region24
      $region23: #{_lambda_.6} parent=11 // pred_region
        _
      $region24: #{_lambda_.6} parent=11 // pred_fallthru
        _
      // Predicated region
      $region25: #{_lambda_.6} parent=11 // pred_check
        %p303 = pneg %p141
      $region26: #{_lambda_.6} parent=11 // pred_check_branch
        %305 = sbr.rel (%p303) target = $region28
      $region27: #{_lambda_.6} parent=11 // pred_region
        _
      $region28: #{_lambda_.6} parent=11 // pred_fallthru
        _
      // Predicated region
      $region29: #{_lambda_.6} parent=11 // pred_check
        %p306 = pneg %p162
      $region30: #{_lambda_.6} parent=11 // pred_check_branch
        %308 = sbr.rel (%p306) target = $region32
      $region31: #{_lambda_.6} parent=11 // pred_region
        _
      $region32: #{_lambda_.6} parent=11 // pred_fallthru
        _
      // Predicated region
      $region33: #{_lambda_.6} parent=11 // pred_check
        %p309 = pneg %p183
      $region34: #{_lambda_.6} parent=11 // pred_check_branch
        %311 = sbr.rel (%p309) target = $region36
      $region35: #{_lambda_.6} parent=11 // pred_region
        _
      $region36: #{_lambda_.6} parent=11 // pred_fallthru
        _
      // Predicated region
      $region37: #{_lambda_.6} parent=11 // pred_check
        %p312 = pneg %p204
      $region38: #{_lambda_.6} parent=11 // pred_check_branch
        %314 = sbr.rel (%p312) target = $region40
      $region39: #{_lambda_.6} parent=11 // pred_region
        _
      $region40: #{_lambda_.6} parent=11 // pred_fallthru
        _
      // Predicated region
      $region41: #{_lambda_.6} parent=11 // pred_check
        %p315 = pneg %p225
      $region42: #{_lambda_.6} parent=11 // pred_check_branch
        %317 = sbr.rel (%p315) target = $region44
      $region43: #{_lambda_.6} parent=11 // pred_region
        _
      $region44: #{_lambda_.6} parent=11 // pred_fallthru
        _
    $region12: #{_lambda_.6} parent=5 // pred_fallthru
      _
    %p318 = scmp.lt.s32.totalorder %s17, 2
    // Predicated region
    $region45: #{_lambda_.6} parent=5 // pred_check
      %p319 = pneg %p318
    $region46: #{_lambda_.6} parent=5 // pred_check_branch
      %321 = sbr.rel (%p319) target = $region48
    $region47: #{_lambda_.6} parent=5 // pred_region
      // Predicated region
      $region49: #{_lambda_.6} parent=47 // pred_check
        %p322 = pneg %p51
      $region50: #{_lambda_.6} parent=47 // pred_check_branch
        %324 = sbr.rel (%p322) target = $region52
      $region51: #{_lambda_.6} parent=47 // pred_region
        %s325 = smul.u32 8, %s25
        %p326 = scmp.lt.s32.totalorder %s24, 1
        %s327 = scalar_select %p326, %s24, 1
        %p328 = scmp.lt.s32.totalorder %s325, 7
        %s329 = scalar_select %p328, %s325, 7
        %s330 = smul.addr %s327, 8
        %s331 = sadd.s32 %s329, %s330
        %s332 = smul.addr %s331, 4
        %s333 = scalar_lea.vmem %s0, %s332
        %s334 = smul.u32 8, %s25
      $region52: #{_lambda_.6} parent=47 // pred_fallthru
        _
    $region48: #{_lambda_.6} parent=5 // pred_fallthru
      _
    %p335 = scmp.le.s32.totalorder 1, %s17
    %p336 = scmp.lt.s32.totalorder %s17, 3
    %p337 = pnand %p335, %p336
    %p338 = pneg %p337
    // Predicated region
    $region53: #{_lambda_.6} parent=5 // pred_check
      _
    $region54: #{_lambda_.6} parent=5 // pred_check_branch
      %340 = sbr.rel (%p337) target = $region56
    $region55: #{_lambda_.6} parent=5 // pred_region
      %s341 = ssub.s32 %s17, 1
      %s342 = smul.u32 8, %s27
      %p343 = scmp.lt.s32.totalorder %s26, 1
      %s344 = scalar_select %p343, %s26, 1
      %p345 = scmp.lt.s32.totalorder %s342, 7
      %s346 = scalar_select %p345, %s342, 7
      %s347 = smul.addr %s344, 8
      %s348 = sadd.s32 %s346, %s347
      %s349 = smul.addr %s348, 4
      %s350 = scalar_lea.vmem %s0, %s349
      %p351 = pneg %p57
      %p352 = pneg %p54
      %p353 = pneg %p78
      %p354 = pneg %p75
      %p355 = pneg %p99
      %p356 = pneg %p96
      %p357 = pneg %p120
      %p358 = pneg %p117
      %p359 = pneg %p141
      %p360 = pneg %p138
      %p361 = pneg %p162
      %p362 = pneg %p159
      %p363 = pneg %p183
      %p364 = pneg %p180
      %p365 = pneg %p204
      %p366 = pneg %p201
      %p367 = pneg %p225
      %p368 = pneg %p222
      %p369 = pneg %p253
      %p370 = pneg %p250
      %s371 = smul.u32 8, %s27
      %p372 = scmp.lt.s32.totalorder %s26, 1
      %s373 = scalar_select %p372, %s26, 1
      %p374 = scmp.lt.s32.totalorder %s371, 7
      %s375 = scalar_select %p374, %s371, 7
      %s376 = smul.addr %s373, 8
      %s377 = sadd.s32 %s375, %s376
      %s378 = smul.addr %s377, 4
      %s379 = scalar_lea.vmem %s9, %s378
      %p380 = pneg %p279
      %p381 = pneg %p276
      %p382 = scmp.lt.s32.totalorder %s26, 1
      %s383 = scalar_select %p382, %s26, 1
      %s384 = scalar_lea.vmem %s10, %s383
      %s385 = smul.u32 8, %s27
      %p386 = scmp.lt.s32.totalorder %s26, 1
      %s387 = scalar_select %p386, %s26, 1
      %p388 = scmp.lt.s32.totalorder %s385, 7
      %s389 = scalar_select %p388, %s385, 7
      %s390 = smul.addr %s387, 8
      %s391 = sadd.s32 %s389, %s390
      %s392 = smul.addr %s391, 4
      %s393 = scalar_lea.vmem %s0, %s392
      %s394 = smul.u32 8, %s27
      %s395 = smul.u32 8, %s27
      %p396 = scmp.lt.s32.totalorder %s26, 1
      %s397 = scalar_select %p396, %s26, 1
      %p398 = scmp.lt.s32.totalorder %s395, 7
      %s399 = scalar_select %p398, %s395, 7
      %s400 = smul.addr %s397, 8
      %s401 = sadd.s32 %s399, %s400
      %s402 = smul.addr %s401, 4
      %s403 = scalar_lea.vmem %s9, %s402
      %s404 = smul.u32 8, %s27
      %p405 = scmp.lt.s32.totalorder %s26, 1
      %s406 = scalar_select %p405, %s26, 1
      %s407 = scalar_lea.vmem %s10, %s406
      %v409 = vld [vmem:[%s393] sm:$0xf]
      %v410 = vld [vmem:[%s393 + $0x4] sm:$0xf]
      %v411 = vld [vmem:[%s393 + $0x8] sm:$0xf]
      %v412 = vld [vmem:[%s393 + $0xc] sm:$0xf]
      %v413 = vld [vmem:[%s393 + $0x10] sm:$0xf]
      %v414 = vld [vmem:[%s393 + $0x14] sm:$0xf]
      %v415 = vld [vmem:[%s393 + $0x18] sm:$0xf]
      %v416 = vld [vmem:[%s393 + $0x1c] sm:$0xf]
      %v417 = vld [vmem:[%s1] sm:$0xf]
      %v418 = vld [vmem:[%s1 + $0x4] sm:$0xf]
      %v419 = vld [vmem:[%s1 + $0x8] sm:$0xf]
      %v420 = vld [vmem:[%s1 + $0xc] sm:$0xf]
      %v421 = vld [vmem:[%s1 + $0x10] sm:$0xf]
      %v422 = vld [vmem:[%s1 + $0x14] sm:$0xf]
      %v423 = vld [vmem:[%s1 + $0x18] sm:$0xf]
      %v424 = vld [vmem:[%s1 + $0x1c] sm:$0xf]
      %v425 = vld [vmem:[%s1 + $0x20] sm:$0xf]
      %v426 = vld [vmem:[%s1 + $0x24] sm:$0xf]
      %v427 = vld [vmem:[%s1 + $0x28] sm:$0xf]
      %v428 = vld [vmem:[%s1 + $0x2c] sm:$0xf]
      %v429 = vld [vmem:[%s1 + $0x30] sm:$0xf]
      %v430 = vld [vmem:[%s1 + $0x34] sm:$0xf]
      %v431 = vld [vmem:[%s1 + $0x38] sm:$0xf]
      %v432 = vld [vmem:[%s1 + $0x3c] sm:$0xf]
      %v441 = vunpack.c.l.b16 %v409
      %v442 = vunpack.c.l.b16 %v410
      %v443 = vunpack.c.l.b16 %v411
      %v444 = vunpack.c.l.b16 %v412
      %v445 = vunpack.c.l.b16 %v413
      %v446 = vunpack.c.l.b16 %v414
      %v447 = vunpack.c.l.b16 %v415
      %v448 = vunpack.c.l.b16 %v416
      %v449 = vpack.c.b16 %v442, %v441
      %v450 = vpack.c.b16 %v444, %v443
      %v451 = vpack.c.b16 %v446, %v445
      %v452 = vpack.c.b16 %v448, %v447
      %v473 = vunpack.c.l.b16 %v417
      %v474 = vunpack.c.l.b16 %v418
      %v475 = vunpack.c.l.b16 %v419
      %v476 = vunpack.c.l.b16 %v420
      %v477 = vunpack.c.l.b16 %v421
      %v478 = vunpack.c.l.b16 %v422
      %v479 = vunpack.c.l.b16 %v423
      %v480 = vunpack.c.l.b16 %v424
      %v481 = vunpack.c.l.b16 %v425
      %v482 = vunpack.c.l.b16 %v426
      %v483 = vunpack.c.l.b16 %v427
      %v484 = vunpack.c.l.b16 %v428
      %v485 = vunpack.c.l.b16 %v429
      %v486 = vunpack.c.l.b16 %v430
      %v487 = vunpack.c.l.b16 %v431
      %v488 = vunpack.c.l.b16 %v432
      %v489 = vpack.c.b16 %v474, %v473
      %v490 = vpack.c.b16 %v476, %v475
      %v491 = vpack.c.b16 %v478, %v477
      %v492 = vpack.c.b16 %v480, %v479
      %v493 = vpack.c.b16 %v482, %v481
      %v494 = vpack.c.b16 %v484, %v483
      %v495 = vpack.c.b16 %v486, %v485
      %v496 = vpack.c.b16 %v488, %v487
      %505 = vmatprep.subr.bf16.mxu0 0
      %506 = vmatpush1.bf16.msra.mxu0 %v489
      %507 = vmatprep.subr.bf16.mxu0 0
      %508 = vmatpush1.bf16.msra.mxu0 %v490
      %509 = vmatprep.subr.bf16.mxu0 0
      %510 = vmatpush1.bf16.msra.mxu0 %v491
      %511 = vmatprep.subr.bf16.mxu0 0
      %512 = vmatpush1.bf16.msra.mxu0 %v492
      %513 = vmatprep.subr.bf16.mxu0 0
      %514 = vmatpush1.bf16.msra.mxu0 %v493
      %515 = vmatprep.subr.bf16.mxu0 0
      %516 = vmatpush1.bf16.msra.mxu0 %v494
      %517 = vmatprep.subr.bf16.mxu0 0
      %518 = vmatpush1.bf16.msra.mxu0 %v495
      %519 = vmatprep.subr.bf16.mxu0 0
      %520 = vmatpush1.bf16.msra.mxu0 %v496
      %521 = vmatprep.subr.bf16.mxu0 0
      %522 = vmatpush1.bf16.msra.mxu0 0
      %523 = vmatprep.subr.bf16.mxu0 0
      %524 = vmatpush1.bf16.msra.mxu0 0
      %525 = vmatprep.subr.bf16.mxu0 0
      %526 = vmatpush1.bf16.msra.mxu0 0
      %527 = vmatprep.subr.bf16.mxu0 0
      %528 = vmatpush1.bf16.msra.mxu0 0
      %529 = vmatprep.subr.bf16.mxu0 0
      %530 = vmatpush1.bf16.msra.mxu0 0
      %531 = vmatprep.subr.bf16.mxu0 0
      %532 = vmatpush1.bf16.msra.mxu0 0
      %533 = vmatprep.subr.bf16.mxu0 0
      %534 = vmatpush1.bf16.msra.mxu0 0
      %535 = vmatprep.subr.bf16.mxu0 0
      %536 = vmatpush1.bf16.msra.mxu0 0
      %537 = vmatprep.mubr.bf16.mxu0 0
      %538 = vmatmul.mubr.bf16.gmra.mrb[0].mxu0 %v449
      %v539 = vpop.f32.mrb[0].mxu0
      %v540 = vadd.f32 0.0, %v539
      %v541 = vpop.f32.mrb[0].mxu0
      %v542 = vpop.f32.mrb[0].mxu0
      %v543 = vadd.f32 0.0, %v542
      %v544 = vpop.f32.mrb[0].mxu0
      %545 = vmatprep.mubr.bf16.mxu0 0
      %546 = vmatmul.mubr.bf16.gmra.mrb[0].mxu0 %v450
      %v547 = vpop.f32.mrb[0].mxu0
      %v548 = vadd.f32 0.0, %v547
      %v549 = vpop.f32.mrb[0].mxu0
      %v550 = vpop.f32.mrb[0].mxu0
      %v551 = vadd.f32 0.0, %v550
      %v552 = vpop.f32.mrb[0].mxu0
      %553 = vmatprep.mubr.bf16.mxu0 0
      %554 = vmatmul.mubr.bf16.gmra.mrb[0].mxu0 %v451
      %v555 = vpop.f32.mrb[0].mxu0
      %v556 = vadd.f32 0.0, %v555
      %v557 = vpop.f32.mrb[0].mxu0
      %v558 = vpop.f32.mrb[0].mxu0
      %v559 = vadd.f32 0.0, %v558
      %v560 = vpop.f32.mrb[0].mxu0
      %561 = vmatprep.mubr.bf16.mxu0 0
      %562 = vmatmul.mubr.bf16.gmra.mrb[0].mxu0 %v452
      %v563 = vpop.f32.mrb[0].mxu0
      %v564 = vadd.f32 0.0, %v563
      %v565 = vpop.f32.mrb[0].mxu0
      %v566 = vpop.f32.mrb[0].mxu0
      %v567 = vadd.f32 0.0, %v566
      %v568 = vpop.f32.mrb[0].mxu0
      %569 = vdwg.mxu0
      %v570 = vld [vmem:[%s2] sm:$0x1]
      %v572 = vlaneseq
      %v573 = vshrl.u32 %v572, 7
      %v574 = vsub.s32 0, %v573
      %v575 = vrot.slane %v570, %v574
      %v577 = vmul.f32 %v540, %v575
      %v578 = vmul.f32 %v543, %v575
      %v579 = vmul.f32 %v548, %v575
      %v580 = vmul.f32 %v551, %v575
      %v581 = vmul.f32 %v556, %v575
      %v582 = vmul.f32 %v559, %v575
      %v583 = vmul.f32 %v564, %v575
      %v584 = vmul.f32 %v567, %v575
      %v585 = vld [vmem:[%s3] sm:$0x1]
      %v587 = vlaneseq
      %v588 = vshrl.u32 %v587, 7
      %v589 = vsub.s32 0, %v588
      %v590 = vrot.slane %v585, %v589
      %v592 = vadd.f32 %v577, %v590
      %v593 = vadd.f32 %v578, %v590
      %v594 = vadd.f32 %v579, %v590
      %v595 = vadd.f32 %v580, %v590
      %v596 = vadd.f32 %v581, %v590
      %v597 = vadd.f32 %v582, %v590
      %v598 = vadd.f32 %v583, %v590
      %v599 = vadd.f32 %v584, %v590
      %v600 = vpack.c.bf16 %v592, %v592
      %v601 = vpack.c.bf16 %v593, %v593
      %v602 = vpack.c.bf16 %v594, %v594
      %v603 = vpack.c.bf16 %v595, %v595
      %v604 = vpack.c.bf16 %v596, %v596
      %v605 = vpack.c.bf16 %v597, %v597
      %v606 = vpack.c.bf16 %v598, %v598
      %v607 = vpack.c.bf16 %v599, %v599
      %608 = vst [vmem:[%s403] sm:$0xf] %v600
      %609 = vst [vmem:[%s403 + $0x4] sm:$0xf] %v601
      %610 = vst [vmem:[%s403 + $0x8] sm:$0xf] %v602
      %611 = vst [vmem:[%s403 + $0xc] sm:$0xf] %v603
      %612 = vst [vmem:[%s403 + $0x10] sm:$0xf] %v604
      %613 = vst [vmem:[%s403 + $0x14] sm:$0xf] %v605
      %614 = vst [vmem:[%s403 + $0x18] sm:$0xf] %v606
      %615 = vst [vmem:[%s403 + $0x1c] sm:$0xf] %v607
      %p616 = scmp.eq.s32.totalorder %s27, 0
      // Predicated region
      $region57: #{_lambda_.6} parent=55 // pred_check
        %p617 = pneg %p616
      $region58: #{_lambda_.6} parent=55 // pred_check_branch
        %619 = sbr.rel (%p617) target = $region60
      $region59: #{_lambda_.6} parent=55 // pred_region
        %620 = vst [vmem:[#allocation2] sm:$0x1] 0.0
      $region60: #{_lambda_.6} parent=55 // pred_fallthru
        _
      %v621 = vld [vmem:[#allocation2] sm:$0x1]
      %v622 = vadd.f32 %v592, %v593
      %v623 = vadd.f32 %v622, %v594
      %v624 = vadd.f32 %v623, %v595
      %v625 = vadd.f32 %v624, %v596
      %v626 = vadd.f32 %v625, %v597
      %v627 = vadd.f32 %v626, %v598
      %v628 = vadd.f32 %v627, %v599
      %v629 = vrot.slane %v628, 4
      %v630 = vadd.f32 %v628, %v629
      %v631 = vrot.slane %v630, 2
      %v632 = vadd.f32 %v630, %v631
      %v633 = vrot.slane %v632, 1
      %v634 = vadd.f32 %v632, %v633
      %v635 = vadd.f32 %v621, %v634
      %636 = vst [vmem:[#allocation2] sm:$0x1] %v635
      // Predicated region
      $region61: #{_lambda_.6} parent=55 // pred_check
        %p637 = pneg %p616
      $region62: #{_lambda_.6} parent=55 // pred_check_branch
        %639 = sbr.rel (%p637) target = $region64
      $region63: #{_lambda_.6} parent=55 // pred_region
        %v640 = vld [vmem:[#allocation2] sm:$0x1]
        %v641 = vmul.f32 %v640, 0.015625
        %v642 = vld [vmem:[%s4] sm:$0xff]
        %v643 = vld [vmem:[%s4 + $0x8] sm:$0xff]
        %v644 = vld [vmem:[%s4 + $0x10] sm:$0xff]
        %v645 = vld [vmem:[%s4 + $0x18] sm:$0xff]
        %v646 = vld [vmem:[%s4 + $0x20] sm:$0xff]
        %v647 = vld [vmem:[%s4 + $0x28] sm:$0xff]
        %v648 = vld [vmem:[%s4 + $0x30] sm:$0xff]
        %v649 = vld [vmem:[%s4 + $0x38] sm:$0xff]
        %v650 = vld [vmem:[%s4 + $0x40] sm:$0xff]
        %v651 = vld [vmem:[%s4 + $0x48] sm:$0xff]
        %v652 = vld [vmem:[%s4 + $0x50] sm:$0xff]
        %v653 = vld [vmem:[%s4 + $0x58] sm:$0xff]
        %v654 = vld [vmem:[%s4 + $0x60] sm:$0xff]
        %v655 = vld [vmem:[%s4 + $0x68] sm:$0xff]
        %v656 = vld [vmem:[%s4 + $0x70] sm:$0xff]
        %v657 = vld [vmem:[%s4 + $0x78] sm:$0xff]
        %v658 = vld [vmem:[%s5] sm:$0x1]
        %659 = vmatprep.subr.mxu0 0.0
        %660 = vmatpush1.msra.mxu0 %v642
        %661 = vmatprep.subr.mxu0 0.0
        %662 = vmatpush1.msra.mxu0 %v643
        %663 = vmatprep.subr.mxu0 0.0
        %664 = vmatpush1.msra.mxu0 %v644
        %665 = vmatprep.subr.mxu0 0.0
        %666 = vmatpush1.msra.mxu0 %v645
        %667 = vmatprep.subr.mxu0 0.0
        %668 = vmatpush1.msra.mxu0 %v646
        %669 = vmatprep.subr.mxu0 0.0
        %670 = vmatpush1.msra.mxu0 %v647
        %671 = vmatprep.subr.mxu0 0.0
        %672 = vmatpush1.msra.mxu0 %v648
        %673 = vmatprep.subr.mxu0 0.0
        %674 = vmatpush1.msra.mxu0 %v649
        %675 = vmatprep.subr.mxu0 0.0
        %676 = vmatpush1.msra.mxu0 %v650
        %677 = vmatprep.subr.mxu0 0.0
        %678 = vmatpush1.msra.mxu0 %v651
        %679 = vmatprep.subr.mxu0 0.0
        %680 = vmatpush1.msra.mxu0 %v652
        %681 = vmatprep.subr.mxu0 0.0
        %682 = vmatpush1.msra.mxu0 %v653
        %683 = vmatprep.subr.mxu0 0.0
        %684 = vmatpush1.msra.mxu0 %v654
        %685 = vmatprep.subr.mxu0 0.0
        %686 = vmatpush1.msra.mxu0 %v655
        %687 = vmatprep.subr.mxu0 0.0
        %688 = vmatpush1.msra.mxu0 %v656
        %689 = vmatprep.subr.mxu0 0.0
        %690 = vmatpush1.msra.mxu0 %v657
        %691 = vmatprep.subr.mxu0 0.0
        %692 = vmatpush1.msra.mxu0 0.0
        %693 = vmatprep.subr.mxu0 0.0
        %694 = vmatpush1.msra.mxu0 0.0
        %695 = vmatprep.subr.mxu0 0.0
        %696 = vmatpush1.msra.mxu0 0.0
        %697 = vmatprep.subr.mxu0 0.0
        %698 = vmatpush1.msra.mxu0 0.0
        %699 = vmatprep.subr.mxu0 0.0
        %700 = vmatpush1.msra.mxu0 0.0
        %701 = vmatprep.subr.mxu0 0.0
        %702 = vmatpush1.msra.mxu0 0.0
        %703 = vmatprep.subr.mxu0 0.0
        %704 = vmatpush1.msra.mxu0 0.0
        %705 = vmatprep.subr.mxu0 0.0
        %706 = vmatpush1.msra.mxu0 0.0
        %707 = vmatprep.subr.mxu0 0.0
        %708 = vmatpush1.msra.mxu0 0.0
        %709 = vmatprep.subr.mxu0 0.0
        %710 = vmatpush1.msra.mxu0 0.0
        %711 = vmatprep.subr.mxu0 0.0
        %712 = vmatpush1.msra.mxu0 0.0
        %713 = vmatprep.subr.mxu0 0.0
        %714 = vmatpush1.msra.mxu0 0.0
        %715 = vmatprep.subr.mxu0 0.0
        %716 = vmatpush1.msra.mxu0 0.0
        %717 = vmatprep.subr.mxu0 0.0
        %718 = vmatpush1.msra.mxu0 0.0
        %719 = vmatprep.subr.mxu0 0.0
        %720 = vmatpush1.msra.mxu0 0.0
        %721 = vmatprep.subr.mxu0 0.0
        %722 = vmatpush1.msra.mxu0 0.0
        %723 = vmatprep.mubr.f32.mxu0 0.0
        %724 = vmatmul.mubr.f32.gmra.mrb[0].mxu0 %v641
        %v725 = vpop.f32.mrb[0].mxu0
        %v726 = vadd.f32 %v658, %v725
        %v727 = vpop.f32.mrb[0].mxu0
        %728 = vdwg.mxu0
        %v729 = vmax.f32 %v726, 0.0
        %v730 = vld [vmem:[%s6] sm:$0xff]
        %v731 = vld [vmem:[%s6 + $0x8] sm:$0xff]
        %v732 = vld [vmem:[%s6 + $0x10] sm:$0xff]
        %v733 = vld [vmem:[%s6 + $0x18] sm:$0xff]
        %v734 = vld [vmem:[%s6 + $0x20] sm:$0xff]
        %v735 = vld [vmem:[%s6 + $0x28] sm:$0xff]
        %v736 = vld [vmem:[%s6 + $0x30] sm:$0xff]
        %v737 = vld [vmem:[%s6 + $0x38] sm:$0xff]
        %v738 = vld [vmem:[%s6 + $0x40] sm:$0xff]
        %v739 = vld [vmem:[%s6 + $0x48] sm:$0xff]
        %v740 = vld [vmem:[%s6 + $0x50] sm:$0xff]
        %v741 = vld [vmem:[%s6 + $0x58] sm:$0xff]
        %v742 = vld [vmem:[%s6 + $0x60] sm:$0xff]
        %v743 = vld [vmem:[%s6 + $0x68] sm:$0xff]
        %v744 = vld [vmem:[%s6 + $0x70] sm:$0xff]
        %v745 = vld [vmem:[%s6 + $0x78] sm:$0xff]
        %v746 = vld [vmem:[%s7] sm:$0x1]
        %747 = vmatprep.subr.mxu0 0.0
        %748 = vmatpush1.msra.mxu0 %v730
        %749 = vmatprep.subr.mxu0 0.0
        %750 = vmatpush1.msra.mxu0 %v731
        %751 = vmatprep.subr.mxu0 0.0
        %752 = vmatpush1.msra.mxu0 %v732
        %753 = vmatprep.subr.mxu0 0.0
        %754 = vmatpush1.msra.mxu0 %v733
        %755 = vmatprep.subr.mxu0 0.0
        %756 = vmatpush1.msra.mxu0 %v734
        %757 = vmatprep.subr.mxu0 0.0
        %758 = vmatpush1.msra.mxu0 %v735
        %759 = vmatprep.subr.mxu0 0.0
        %760 = vmatpush1.msra.mxu0 %v736
        %761 = vmatprep.subr.mxu0 0.0
        %762 = vmatpush1.msra.mxu0 %v737
        %763 = vmatprep.subr.mxu0 0.0
        %764 = vmatpush1.msra.mxu0 %v738
        %765 = vmatprep.subr.mxu0 0.0
        %766 = vmatpush1.msra.mxu0 %v739
        %767 = vmatprep.subr.mxu0 0.0
        %768 = vmatpush1.msra.mxu0 %v740
        %769 = vmatprep.subr.mxu0 0.0
        %770 = vmatpush1.msra.mxu0 %v741
        %771 = vmatprep.subr.mxu0 0.0
        %772 = vmatpush1.msra.mxu0 %v742
        %773 = vmatprep.subr.mxu0 0.0
        %774 = vmatpush1.msra.mxu0 %v743
        %775 = vmatprep.subr.mxu0 0.0
        %776 = vmatpush1.msra.mxu0 %v744
        %777 = vmatprep.subr.mxu0 0.0
        %778 = vmatpush1.msra.mxu0 %v745
        %779 = vmatprep.subr.mxu0 0.0
        %780 = vmatpush1.msra.mxu0 0.0
        %781 = vmatprep.subr.mxu0 0.0
        %782 = vmatpush1.msra.mxu0 0.0
        %783 = vmatprep.subr.mxu0 0.0
        %784 = vmatpush1.msra.mxu0 0.0
        %785 = vmatprep.subr.mxu0 0.0
        %786 = vmatpush1.msra.mxu0 0.0
        %787 = vmatprep.subr.mxu0 0.0
        %788 = vmatpush1.msra.mxu0 0.0
        %789 = vmatprep.subr.mxu0 0.0
        %790 = vmatpush1.msra.mxu0 0.0
        %791 = vmatprep.subr.mxu0 0.0
        %792 = vmatpush1.msra.mxu0 0.0
        %793 = vmatprep.subr.mxu0 0.0
        %794 = vmatpush1.msra.mxu0 0.0
        %795 = vmatprep.subr.mxu0 0.0
        %796 = vmatpush1.msra.mxu0 0.0
        %797 = vmatprep.subr.mxu0 0.0
        %798 = vmatpush1.msra.mxu0 0.0
        %799 = vmatprep.subr.mxu0 0.0
        %800 = vmatpush1.msra.mxu0 0.0
        %801 = vmatprep.subr.mxu0 0.0
        %802 = vmatpush1.msra.mxu0 0.0
        %803 = vmatprep.subr.mxu0 0.0
        %804 = vmatpush1.msra.mxu0 0.0
        %805 = vmatprep.subr.mxu0 0.0
        %806 = vmatpush1.msra.mxu0 0.0
        %807 = vmatprep.subr.mxu0 0.0
        %808 = vmatpush1.msra.mxu0 0.0
        %809 = vmatprep.subr.mxu0 0.0
        %810 = vmatpush1.msra.mxu0 0.0
        %811 = vmatprep.mubr.f32.mxu0 0.0
        %812 = vmatmul.mubr.f32.gmra.mrb[0].mxu0 %v729
        %v813 = vpop.f32.mrb[0].mxu0
        %v814 = vadd.f32 %v746, %v813
        %v815 = vpop.f32.mrb[0].mxu0
        %816 = vdwg.mxu0
        %v817 = vxor.u32 %v814, 2147483648
        %v818 = vmul.f32 %v817, 1.442695
        %v819 = vpow.pop %v818
        %v820 = vadd.f32 %v819, 1.0
        %v821 = vrcp.pop %v820
        %v822 = vmul.f32 1.0, %v821
        %v823 = vld [vmem:[%s8] sm:$0x1]
        %v824 = vmul.f32 %v822, %v823
        %825 = vst [vmem:[%s407] sm:$0x1] %v824
      $region64: #{_lambda_.6} parent=55 // pred_fallthru
        _
      %s826 = smul.u32 8, %s27
      %p827 = scmp.lt.s32.totalorder %s26, 1
      %s828 = scalar_select %p827, %s26, 1
      %p829 = scmp.lt.s32.totalorder %s826, 7
      %s830 = scalar_select %p829, %s826, 7
      %s831 = smul.addr %s828, 8
      %s832 = sadd.s32 %s830, %s831
      %s833 = smul.addr %s832, 4
      %s834 = scalar_lea.vmem %s9, %s833
      %p835 = scmp.lt.s32.totalorder %s26, 1
      %s836 = scalar_select %p835, %s26, 1
      %s837 = scalar_lea.vmem %s10, %s836
      // Predicated region
      $region65: #{_lambda_.6} parent=55 // pred_check
        %p838 = pneg %p250
      $region66: #{_lambda_.6} parent=55 // pred_check_branch
        %840 = sbr.rel (%p838) target = $region68
      $region67: #{_lambda_.6} parent=55 // pred_region
        %s841 = smul.u32 8, %s27
      $region68: #{_lambda_.6} parent=55 // pred_fallthru
        _
      // Predicated region
      $region69: #{_lambda_.6} parent=55 // pred_check
        %p842 = pneg %p276
      $region70: #{_lambda_.6} parent=55 // pred_check_branch
        %844 = sbr.rel (%p842) target = $region72
      $region71: #{_lambda_.6} parent=55 // pred_region
        _
      $region72: #{_lambda_.6} parent=55 // pred_fallthru
        _
    $region56: #{_lambda_.6} parent=5 // pred_fallthru
      _
    %p845 = scmp.le.s32.totalorder 2, %s17
    // Predicated region
    $region73: #{_lambda_.6} parent=5 // pred_check
      %p846 = pneg %p845
    $region74: #{_lambda_.6} parent=5 // pred_check_branch
      %848 = sbr.rel (%p846) target = $region76
    $region75: #{_lambda_.6} parent=5 // pred_region
      %s849 = ssub.s32 %s17, 2
      // Predicated region
      $region77: #{_lambda_.6} parent=75 // pred_check
        %p850 = pneg %p256
      $region78: #{_lambda_.6} parent=75 // pred_check_branch
        %852 = sbr.rel (%p850) target = $region80
      $region79: #{_lambda_.6} parent=75 // pred_region
        %s853 = smul.u32 8, %s29
        %p854 = scmp.lt.s32.totalorder %s28, 1
        %s855 = scalar_select %p854, %s28, 1
        %p856 = scmp.lt.s32.totalorder %s853, 7
        %s857 = scalar_select %p856, %s853, 7
        %s858 = smul.addr %s855, 8
        %s859 = sadd.s32 %s857, %s858
        %s860 = smul.addr %s859, 4
        %s861 = scalar_lea.vmem %s9, %s860
      $region80: #{_lambda_.6} parent=75 // pred_fallthru
        _
      // Predicated region
      $region81: #{_lambda_.6} parent=75 // pred_check
        %p862 = pneg %p282
      $region82: #{_lambda_.6} parent=75 // pred_check_branch
        %864 = sbr.rel (%p862) target = $region84
      $region83: #{_lambda_.6} parent=75 // pred_region
        %p865 = scmp.lt.s32.totalorder %s28, 1
        %s866 = scalar_select %p865, %s28, 1
        %s867 = scalar_lea.vmem %s10, %s866
      $region84: #{_lambda_.6} parent=75 // pred_fallthru
        _
    $region76: #{_lambda_.6} parent=5 // pred_fallthru
      _
  $region6: #{_lambda_.6} parent=0 // loop_footer
    %s21 = sadd.s32 1, %s17
  $region7: #{_lambda_.6} parent=0 // loop_footer_branch
    %16 = sbr.rel target = $region3
  $region8: #{_lambda_.6} parent=0 // loop_exit
    _

// kernel: _lambda_.5
$region0: #{_lambda_.5}
  #allocation0 [shape = 'u32[]', space=smem, size = 0x4, offset = 0x4, fixed_abs, tag = 'smem constant byte address 0x4 - core index']
  #allocation1 [shape = 'u32[144,128]{1,0:T(1,128)}', space=vmem, size = 0x12000, scoped, tag = 'internal scratch']
  %s0 = inlined_call_operand.vmem [shape: bf16[2,8,16,128], index: 0, kind: input, shape index: {}, may-alias: {0,1,2}]
  %s1 = inlined_call_operand.vmem [shape: bf16[2,8,16,128], index: 1, kind: input, shape index: {}, may-alias: {0,1,2}]
  %s2 = inlined_call_operand.vmem [shape: bf16[2,8,16,128], index: 2, kind: input, shape index: {}, may-alias: {0,1,2}]
  %s3 = inlined_call_operand.hbm [shape: bf16[9,128,128], index: 3, kind: input, shape index: {}]
  %s4 = inlined_call_operand.vmem [shape: f32[1,128], index: 4, kind: input, shape index: {}]
  %s5 = inlined_call_operand.vmem [shape: f32[1,128], index: 5, kind: input, shape index: {}]
  %s6 = inlined_call_operand.vmem [shape: bf16[2,8,8,128], index: 6, kind: output, shape index: {}]
  %s7 = sld [smem:[#allocation0]]
  $region61: #{_lambda_.5} parent=0
    _
  %s9 = ssub.s32 1, %s7
  %s10 = scalar_select 0, %s9, %s7
  $region1: #{_lambda_.5} parent=0
    #allocation2 [shape = 'u8[294912]{0}', space=vmem, size = 0x48000, scoped, tag = 'input window, operand 3, single buffered']
    #allocation3 [shape = 's32[2]{0}', space=sflag, size = 0x8, scoped, tag = 'scoped memory for _lambda_.5']
    %11 = vsyncpa [#allocation3], 0
    loop: start=0, step=1, limit=4
    $region2: #{_lambda_.5} parent=1 // loop_pre_header
      _
    $region3: #{_lambda_.5} parent=1 // loop_header
      %s13 = sphi 0, %s17
      %p14 = scmp.ge.s32.totalorder %s13, 4
      %s20 = sphi 0, %s32
      %s21 = sphi 0, %s28
      %s22 = sphi 0, %s20
      %s23 = sphi 0, %s21
      %s24 = sphi 0, %s22
      %s25 = sphi 0, %s23
      %s37 = sphi 0, %s39
      %s40 = sphi 0, %s37
      %s41 = sphi 0, %s40
      %s57 = sphi 0, %s41
      %s73 = sphi 0, %s75
      %s76 = sphi 0, %s73
      %s77 = sphi 0, %s76
      %s93 = sphi 0, %s77
      %s109 = sphi 0, %s111
      %s112 = sphi 0, %s109
      %s113 = sphi 0, %s112
      %s129 = sphi 0, %s113
      %s133 = sphi 0, %s133
      %s135 = sphi 0, %s133
      %s136 = sphi 0, %s135
      %s150 = sphi 0, %s136
      %s154 = sphi 0, %s154
      %s156 = sphi 0, %s154
      %s157 = sphi 0, %s156
      %s171 = sphi 0, %s157
      %s175 = sphi 0, %s175
      %s177 = sphi 0, %s175
      %s178 = sphi 0, %s177
      %s192 = sphi 0, %s178
      %s200 = sphi 0, %s202
      %s203 = sphi 0, %s200
      %s204 = sphi 0, %s203
      %s220 = sphi 0, %s204
    $region4: #{_lambda_.5} parent=1 // loop_header_branch
      %16 = sbr.rel (%p14) target = $region8
    $region5: #{_lambda_.5} parent=1 // loop_body
      %s18 = ssub.s32 %s13, 1
      %s19 = ssub.s32 %s13, 2
      %s26 = sadd.s32 1, %s21
      %p27 = scmp.ge.s32.totalorder %s26, 1
      %s28 = scalar_select %p27, 0, %s26
      %s29 = sadd.s32 1, %s20
      %s30 = scalar_select %p27, %s29, %s20
      %p31 = scmp.ge.s32.totalorder %s30, 2
      %s32 = scalar_select %p31, 0, %s30
      %s33 = ssub.s32 %s20, %s32
      %s34 = ssub.s32 %s21, %s28
      %s35 = sor.u32 %s33, %s34
      %p36 = scmp.eq.s32.totalorder %s35, 0
      %s38 = sadd.s32 %s37, 1
      %s39 = scalar_select %p36, %s37, %s38
      %p42 = pneg %p36
      %p43 = scmp.eq.s32.totalorder %s13, 1
      %p44 = por %p42, %p43
      %p45 = scmp.ne.s32.totalorder %s37, %s40
      %p46 = scmp.eq.s32.totalorder %s13, 0
      %p47 = por %p45, %p46
      %p48 = scmp.ne.s32.totalorder %s37, %s40
      %p49 = scmp.eq.s32.totalorder %s18, 1
      %p50 = por %p48, %p49
      %p51 = scmp.ne.s32.totalorder %s40, %s41
      %p52 = scmp.eq.s32.totalorder %s18, 0
      %p53 = por %p51, %p52
      %p54 = scmp.ne.s32.totalorder %s40, %s41
      %p55 = scmp.eq.s32.totalorder %s19, 1
      %p56 = por %p54, %p55
      %p58 = scmp.ne.s32.totalorder %s41, %s57
      %p59 = scmp.eq.s32.totalorder %s19, 0
      %p60 = por %p58, %p59
      %s61 = smul.u32 %s21, 8
      %s62 = ssub.s32 %s61, 1
      %p63 = scmp.gt.s32.totalorder %s62, 0
      %s64 = scalar_select %p63, %s62, 0
      %s65 = smul.u32 %s28, 8
      %s66 = ssub.s32 %s65, 1
      %p67 = scmp.gt.s32.totalorder %s66, 0
      %s68 = scalar_select %p67, %s66, 0
      %s69 = ssub.s32 %s20, %s32
      %s70 = ssub.s32 %s64, %s68
      %s71 = sor.u32 %s69, %s70
      %p72 = scmp.eq.s32.totalorder %s71, 0
      %s74 = sadd.s32 %s73, 1
      %s75 = scalar_select %p72, %s73, %s74
      %p78 = pneg %p72
      %p79 = scmp.eq.s32.totalorder %s13, 1
      %p80 = por %p78, %p79
      %p81 = scmp.ne.s32.totalorder %s73, %s76
      %p82 = scmp.eq.s32.totalorder %s13, 0
      %p83 = por %p81, %p82
      %p84 = scmp.ne.s32.totalorder %s73, %s76
      %p85 = scmp.eq.s32.totalorder %s18, 1
      %p86 = por %p84, %p85
      %p87 = scmp.ne.s32.totalorder %s76, %s77
      %p88 = scmp.eq.s32.totalorder %s18, 0
      %p89 = por %p87, %p88
      %p90 = scmp.ne.s32.totalorder %s76, %s77
      %p91 = scmp.eq.s32.totalorder %s19, 1
      %p92 = por %p90, %p91
      %p94 = scmp.ne.s32.totalorder %s77, %s93
      %p95 = scmp.eq.s32.totalorder %s19, 0
      %p96 = por %p94, %p95
      %s97 = smul.u32 %s21, 8
      %s98 = sadd.s32 %s97, 8
      %p99 = scmp.lt.s32.totalorder %s98, 7
      %s100 = scalar_select %p99, %s98, 7
      %s101 = smul.u32 %s28, 8
      %s102 = sadd.s32 %s101, 8
      %p103 = scmp.lt.s32.totalorder %s102, 7
      %s104 = scalar_select %p103, %s102, 7
      %s105 = ssub.s32 %s20, %s32
      %s106 = ssub.s32 %s100, %s104
      %s107 = sor.u32 %s105, %s106
      %p108 = scmp.eq.s32.totalorder %s107, 0
      %s110 = sadd.s32 %s109, 1
      %s111 = scalar_select %p108, %s109, %s110
      %p114 = pneg %p108
      %p115 = scmp.eq.s32.totalorder %s13, 1
      %p116 = por %p114, %p115
      %p117 = scmp.ne.s32.totalorder %s109, %s112
      %p118 = scmp.eq.s32.totalorder %s13, 0
      %p119 = por %p117, %p118
      %p120 = scmp.ne.s32.totalorder %s109, %s112
      %p121 = scmp.eq.s32.totalorder %s18, 1
      %p122 = por %p120, %p121
      %p123 = scmp.ne.s32.totalorder %s112, %s113
      %p124 = scmp.eq.s32.totalorder %s18, 0
      %p125 = por %p123, %p124
      %p126 = scmp.ne.s32.totalorder %s112, %s113
      %p127 = scmp.eq.s32.totalorder %s19, 1
      %p128 = por %p126, %p127
      %p130 = scmp.ne.s32.totalorder %s113, %s129
      %p131 = scmp.eq.s32.totalorder %s19, 0
      %p132 = por %p130, %p131
      %s134 = sadd.s32 %s133, 1
      %p137 = scmp.eq.s32.totalorder %s13, 1
      %p138 = scmp.ne.s32.totalorder %s133, %s135
      %p139 = scmp.eq.s32.totalorder %s13, 0
      %p140 = por %p138, %p139
      %p141 = scmp.ne.s32.totalorder %s133, %s135
      %p142 = scmp.eq.s32.totalorder %s18, 1
      %p143 = por %p141, %p142
      %p144 = scmp.ne.s32.totalorder %s135, %s136
      %p145 = scmp.eq.s32.totalorder %s18, 0
      %p146 = por %p144, %p145
      %p147 = scmp.ne.s32.totalorder %s135, %s136
      %p148 = scmp.eq.s32.totalorder %s19, 1
      %p149 = por %p147, %p148
      %p151 = scmp.ne.s32.totalorder %s136, %s150
      %p152 = scmp.eq.s32.totalorder %s19, 0
      %p153 = por %p151, %p152
      %s155 = sadd.s32 %s154, 1
      %p158 = scmp.eq.s32.totalorder %s13, 1
      %p159 = scmp.ne.s32.totalorder %s154, %s156
      %p160 = scmp.eq.s32.totalorder %s13, 0
      %p161 = por %p159, %p160
      %p162 = scmp.ne.s32.totalorder %s154, %s156
      %p163 = scmp.eq.s32.totalorder %s18, 1
      %p164 = por %p162, %p163
      %p165 = scmp.ne.s32.totalorder %s156, %s157
      %p166 = scmp.eq.s32.totalorder %s18, 0
      %p167 = por %p165, %p166
      %p168 = scmp.ne.s32.totalorder %s156, %s157
      %p169 = scmp.eq.s32.totalorder %s19, 1
      %p170 = por %p168, %p169
      %p172 = scmp.ne.s32.totalorder %s157, %s171
      %p173 = scmp.eq.s32.totalorder %s19, 0
      %p174 = por %p172, %p173
      %s176 = sadd.s32 %s175, 1
      %p179 = scmp.eq.s32.totalorder %s13, 1
      %p180 = scmp.ne.s32.totalorder %s175, %s177
      %p181 = scmp.eq.s32.totalorder %s13, 0
      %p182 = por %p180, %p181
      %p183 = scmp.ne.s32.totalorder %s175, %s177
      %p184 = scmp.eq.s32.totalorder %s18, 1
      %p185 = por %p183, %p184
      %p186 = scmp.ne.s32.totalorder %s177, %s178
      %p187 = scmp.eq.s32.totalorder %s18, 0
      %p188 = por %p186, %p187
      %p189 = scmp.ne.s32.totalorder %s177, %s178
      %p190 = scmp.eq.s32.totalorder %s19, 1
      %p191 = por %p189, %p190
      %p193 = scmp.ne.s32.totalorder %s178, %s192
      %p194 = scmp.eq.s32.totalorder %s19, 0
      %p195 = por %p193, %p194
      %s196 = ssub.s32 %s20, %s32
      %s197 = ssub.s32 %s21, %s28
      %s198 = sor.u32 %s196, %s197
      %p199 = scmp.eq.s32.totalorder %s198, 0
      %s201 = sadd.s32 %s200, 1
      %s202 = scalar_select %p199, %s200, %s201
      %p205 = pneg %p199
      %p206 = scmp.eq.s32.totalorder %s13, 1
      %p207 = por %p205, %p206
      %p208 = scmp.ne.s32.totalorder %s200, %s203
      %p209 = scmp.eq.s32.totalorder %s13, 0
      %p210 = por %p208, %p209
      %p211 = scmp.ne.s32.totalorder %s200, %s203
      %p212 = scmp.eq.s32.totalorder %s18, 1
      %p213 = por %p211, %p212
      %p214 = scmp.ne.s32.totalorder %s203, %s204
      %p215 = scmp.eq.s32.totalorder %s18, 0
      %p216 = por %p214, %p215
      %p217 = scmp.ne.s32.totalorder %s203, %s204
      %p218 = scmp.eq.s32.totalorder %s19, 1
      %p219 = por %p217, %p218
      %p221 = scmp.ne.s32.totalorder %s204, %s220
      %p222 = scmp.eq.s32.totalorder %s19, 0
      %p223 = por %p221, %p222
      %p224 = scmp.le.s32.totalorder 1, %s13
      %p225 = scmp.lt.s32.totalorder %s13, 3
      %p226 = pnand %p224, %p225
      %p227 = pneg %p226
      // Predicated region
      $region9: #{_lambda_.5} parent=5 // pred_check
        _
      $region10: #{_lambda_.5} parent=5 // pred_check_branch
        %229 = sbr.rel (%p226) target = $region12
      $region11: #{_lambda_.5} parent=5 // pred_region
        %s230 = ssub.s32 %s13, 1
        // Predicated region
        $region13: #{_lambda_.5} parent=11 // pred_check
          %p231 = pneg %p146
        $region14: #{_lambda_.5} parent=11 // pred_check_branch
          %233 = sbr.rel (%p231) target = $region16
        $region15: #{_lambda_.5} parent=11 // pred_region
          %s235 = ssub.s32 9216, 9216
          %236 = vsyncadd [#allocation3], %s235
          %s237 = sshll.u32 [#allocation2], 4
          %s238 = int_to_ptr.vmem [resolvable:$true] %s237
          %243 = dma.hbm_to_vmem [thread:$0]  %s3, 9216, %s238, [#allocation3], 64, 64, 4
        $region16: #{_lambda_.5} parent=11 // pred_fallthru
          _
        // Predicated region
        $region17: #{_lambda_.5} parent=11 // pred_check
          %p244 = pneg %p167
        $region18: #{_lambda_.5} parent=11 // pred_check_branch
          %246 = sbr.rel (%p244) target = $region20
        $region19: #{_lambda_.5} parent=11 // pred_region
          _
        $region20: #{_lambda_.5} parent=11 // pred_fallthru
          _
        // Predicated region
        $region21: #{_lambda_.5} parent=11 // pred_check
          %p247 = pneg %p188
        $region22: #{_lambda_.5} parent=11 // pred_check_branch
          %249 = sbr.rel (%p247) target = $region24
        $region23: #{_lambda_.5} parent=11 // pred_region
          _
        $region24: #{_lambda_.5} parent=11 // pred_fallthru
          _
      $region12: #{_lambda_.5} parent=5 // pred_fallthru
        _
      %p250 = scmp.lt.s32.totalorder %s13, 2
      // Predicated region
      $region25: #{_lambda_.5} parent=5 // pred_check
        %p251 = pneg %p250
      $region26: #{_lambda_.5} parent=5 // pred_check_branch
        %253 = sbr.rel (%p251) target = $region28
      $region27: #{_lambda_.5} parent=5 // pred_region
        // Predicated region
        $region29: #{_lambda_.5} parent=27 // pred_check
          %p254 = pneg %p47
        $region30: #{_lambda_.5} parent=27 // pred_check_branch
          %256 = sbr.rel (%p254) target = $region32
        $region31: #{_lambda_.5} parent=27 // pred_region
          %s257 = smul.u32 8, %s21
          %p258 = scmp.lt.s32.totalorder %s20, 1
          %s259 = scalar_select %p258, %s20, 1
          %p260 = scmp.lt.s32.totalorder %s257, 7
          %s261 = scalar_select %p260, %s257, 7
          %s262 = smul.addr %s261, 2
          %s263 = smul.addr %s259, 16
          %s264 = sadd.s32 %s262, %s263
          %s265 = smul.addr %s264, 4
          %s266 = scalar_lea.vmem %s0, %s265
          %s267 = smul.u32 8, %s21
        $region32: #{_lambda_.5} parent=27 // pred_fallthru
          _
        // Predicated region
        $region33: #{_lambda_.5} parent=27 // pred_check
          %p268 = pneg %p83
        $region34: #{_lambda_.5} parent=27 // pred_check_branch
          %270 = sbr.rel (%p268) target = $region36
        $region35: #{_lambda_.5} parent=27 // pred_region
          %s271 = smul.u32 %s21, 8
          %s272 = ssub.s32 %s271, 1
          %p273 = scmp.gt.s32.totalorder %s272, 0
          %s274 = scalar_select %p273, %s272, 0
          %p275 = scmp.lt.s32.totalorder %s20, 1
          %s276 = scalar_select %p275, %s20, 1
          %p277 = scmp.lt.s32.totalorder %s274, 7
          %s278 = scalar_select %p277, %s274, 7
          %s279 = smul.addr %s278, 2
          %s280 = smul.addr %s276, 16
          %s281 = sadd.s32 %s279, %s280
          %s282 = smul.addr %s281, 4
          %s283 = scalar_lea.vmem %s1, %s282
          %s284 = smul.u32 %s21, 8
          %s285 = ssub.s32 %s284, 1
          %p286 = scmp.gt.s32.totalorder %s285, 0
          %s287 = scalar_select %p286, %s285, 0
        $region36: #{_lambda_.5} parent=27 // pred_fallthru
          _
        // Predicated region
        $region37: #{_lambda_.5} parent=27 // pred_check
          %p288 = pneg %p119
        $region38: #{_lambda_.5} parent=27 // pred_check_branch
          %290 = sbr.rel (%p288) target = $region40
        $region39: #{_lambda_.5} parent=27 // pred_region
          %s291 = smul.u32 %s21, 8
          %s292 = sadd.s32 %s291, 8
          %p293 = scmp.lt.s32.totalorder %s292, 7
          %s294 = scalar_select %p293, %s292, 7
          %p295 = scmp.lt.s32.totalorder %s20, 1
          %s296 = scalar_select %p295, %s20, 1
          %p297 = scmp.lt.s32.totalorder %s294, 7
          %s298 = scalar_select %p297, %s294, 7
          %s299 = smul.addr %s298, 2
          %s300 = smul.addr %s296, 16
          %s301 = sadd.s32 %s299, %s300
          %s302 = smul.addr %s301, 4
          %s303 = scalar_lea.vmem %s2, %s302
          %s304 = smul.u32 %s21, 8
          %s305 = sadd.s32 %s304, 8
          %p306 = scmp.lt.s32.totalorder %s305, 7
          %s307 = scalar_select %p306, %s305, 7
        $region40: #{_lambda_.5} parent=27 // pred_fallthru
          _
      $region28: #{_lambda_.5} parent=5 // pred_fallthru
        _
      %p308 = scmp.le.s32.totalorder 1, %s13
      %p309 = scmp.lt.s32.totalorder %s13, 3
      %p310 = pnand %p308, %p309
      %p311 = pneg %p310
      // Predicated region
      $region41: #{_lambda_.5} parent=5 // pred_check
        _
      $region42: #{_lambda_.5} parent=5 // pred_check_branch
        %313 = sbr.rel (%p310) target = $region44
      $region43: #{_lambda_.5} parent=5 // pred_region
        %s314 = ssub.s32 %s13, 1
        // Predicated region
        $region45: #{_lambda_.5} parent=43 // pred_check
          %p315 = pneg %p146
        $region46: #{_lambda_.5} parent=43 // pred_check_branch
          %317 = sbr.rel (%p315) target = $region48
        $region47: #{_lambda_.5} parent=43 // pred_region
          %318 = dma.done [#allocation3], 9216
        $region48: #{_lambda_.5} parent=43 // pred_fallthru
          _
        %s319 = smul.u32 8, %s23
        %p320 = scmp.lt.s32.totalorder %s22, 1
        %s321 = scalar_select %p320, %s22, 1
        %p322 = scmp.lt.s32.totalorder %s319, 7
        %s323 = scalar_select %p322, %s319, 7
        %s324 = smul.addr %s323, 2
        %s325 = smul.addr %s321, 16
        %s326 = sadd.s32 %s324, %s325
        %s327 = smul.addr %s326, 4
        %s328 = scalar_lea.vmem %s0, %s327
        %p329 = pneg %p53
        %p330 = pneg %p50
        %s331 = smul.u32 %s23, 8
        %s332 = ssub.s32 %s331, 1
        %p333 = scmp.gt.s32.totalorder %s332, 0
        %s334 = scalar_select %p333, %s332, 0
        %p335 = scmp.lt.s32.totalorder %s22, 1
        %s336 = scalar_select %p335, %s22, 1
        %p337 = scmp.lt.s32.totalorder %s334, 7
        %s338 = scalar_select %p337, %s334, 7
        %s339 = smul.addr %s338, 2
        %s340 = smul.addr %s336, 16
        %s341 = sadd.s32 %s339, %s340
        %s342 = smul.addr %s341, 4
        %s343 = scalar_lea.vmem %s1, %s342
        %p344 = pneg %p89
        %p345 = pneg %p86
        %s346 = smul.u32 %s23, 8
        %s347 = sadd.s32 %s346, 8
        %p348 = scmp.lt.s32.totalorder %s347, 7
        %s349 = scalar_select %p348, %s347, 7
        %p350 = scmp.lt.s32.totalorder %s22, 1
        %s351 = scalar_select %p350, %s22, 1
        %p352 = scmp.lt.s32.totalorder %s349, 7
        %s353 = scalar_select %p352, %s349, 7
        %s354 = smul.addr %s353, 2
        %s355 = smul.addr %s351, 16
        %s356 = sadd.s32 %s354, %s355
        %s357 = smul.addr %s356, 4
        %s358 = scalar_lea.vmem %s2, %s357
        %p359 = pneg %p125
        %p360 = pneg %p122
        %p361 = pneg %p146
        %p362 = pneg %p143
        %p363 = pneg %p167
        %p364 = pneg %p164
        %p365 = pneg %p188
        %p366 = pneg %p185
        %p367 = pneg %p216
        %p368 = pneg %p213
        %s369 = smul.u32 8, %s23
        %p370 = scmp.lt.s32.totalorder %s22, 1
        %s371 = scalar_select %p370, %s22, 1
        %p372 = scmp.lt.s32.totalorder %s369, 7
        %s373 = scalar_select %p372, %s369, 7
        %s374 = smul.addr %s371, 8
        %s375 = sadd.s32 %s373, %s374
        %s376 = smul.addr %s375, 4
        %s377 = scalar_lea.vmem %s6, %s376
        %s378 = smul.u32 8, %s23
        %p379 = scmp.lt.s32.totalorder %s22, 1
        %s380 = scalar_select %p379, %s22, 1
        %p381 = scmp.lt.s32.totalorder %s378, 7
        %s382 = scalar_select %p381, %s378, 7
        %s383 = smul.addr %s382, 2
        %s384 = smul.addr %s380, 16
        %s385 = sadd.s32 %s383, %s384
        %s386 = smul.addr %s385, 4
        %s387 = scalar_lea.vmem %s0, %s386
        %s388 = smul.u32 8, %s23
        %s389 = smul.u32 %s23, 8
        %s390 = ssub.s32 %s389, 1
        %p391 = scmp.gt.s32.totalorder %s390, 0
        %s392 = scalar_select %p391, %s390, 0
        %p393 = scmp.lt.s32.totalorder %s22, 1
        %s394 = scalar_select %p393, %s22, 1
        %p395 = scmp.lt.s32.totalorder %s392, 7
        %s396 = scalar_select %p395, %s392, 7
        %s397 = smul.addr %s396, 2
        %s398 = smul.addr %s394, 16
        %s399 = sadd.s32 %s397, %s398
        %s400 = smul.addr %s399, 4
        %s401 = scalar_lea.vmem %s1, %s400
        %s402 = smul.u32 %s23, 8
        %s403 = ssub.s32 %s402, 1
        %p404 = scmp.gt.s32.totalorder %s403, 0
        %s405 = scalar_select %p404, %s403, 0
        %s406 = smul.u32 %s23, 8
        %s407 = sadd.s32 %s406, 8
        %p408 = scmp.lt.s32.totalorder %s407, 7
        %s409 = scalar_select %p408, %s407, 7
        %p410 = scmp.lt.s32.totalorder %s22, 1
        %s411 = scalar_select %p410, %s22, 1
        %p412 = scmp.lt.s32.totalorder %s409, 7
        %s413 = scalar_select %p412, %s409, 7
        %s414 = smul.addr %s413, 2
        %s415 = smul.addr %s411, 16
        %s416 = sadd.s32 %s414, %s415
        %s417 = smul.addr %s416, 4
        %s418 = scalar_lea.vmem %s2, %s417
        %s419 = smul.u32 %s23, 8
        %s420 = sadd.s32 %s419, 8
        %p421 = scmp.lt.s32.totalorder %s420, 7
        %s422 = scalar_select %p421, %s420, 7
        %s423 = smul.u32 8, %s23
        %p424 = scmp.lt.s32.totalorder %s22, 1
        %s425 = scalar_select %p424, %s22, 1
        %p426 = scmp.lt.s32.totalorder %s423, 7
        %s427 = scalar_select %p426, %s423, 7
        %s428 = smul.addr %s425, 8
        %s429 = sadd.s32 %s427, %s428
        %s430 = smul.addr %s429, 4
        %s431 = scalar_lea.vmem %s6, %s430
        %s432 = smul.u32 8, %s23
        %v434 = vld [vmem:[%s387] sm:$0xf]
        %v435 = vld [vmem:[%s387 + $0x4] sm:$0xf]
        %v436 = vld [vmem:[%s387 + $0x8] sm:$0xf]
        %v437 = vld [vmem:[%s387 + $0xc] sm:$0xf]
        %v438 = vld [vmem:[%s387 + $0x10] sm:$0xf]
        %v439 = vld [vmem:[%s387 + $0x14] sm:$0xf]
        %v440 = vld [vmem:[%s387 + $0x18] sm:$0xf]
        %v441 = vld [vmem:[%s387 + $0x1c] sm:$0xf]
        %v442 = vld [vmem:[%s387 + $0x20] sm:$0xf]
        %v443 = vld [vmem:[%s387 + $0x24] sm:$0xf]
        %v444 = vld [vmem:[%s387 + $0x28] sm:$0xf]
        %v445 = vld [vmem:[%s387 + $0x2c] sm:$0xf]
        %v446 = vld [vmem:[%s387 + $0x30] sm:$0xf]
        %v447 = vld [vmem:[%s387 + $0x34] sm:$0xf]
        %v448 = vld [vmem:[%s387 + $0x38] sm:$0xf]
        %v449 = vld [vmem:[%s387 + $0x3c] sm:$0xf]
        %p450 = scmp.gt.s32.totalorder %s23, 0
        %v451 = vld [vmem:[%s401] sm:$0xf]
        %v452 = vld [vmem:[%s401 + $0x4] sm:$0xf]
        %s453 = scalar_select %p450, 1, 0
        %v454 = vstv %s453
        %vm455 = vcmp.eq.s32.totalorder %v454, 1
        %v456 = vsel %vm455, %v451, 0
        %v457 = vsel %vm455, %v452, 0
        %p458 = scmp.lt.s32.totalorder %s23, 0
        %v459 = vld [vmem:[%s418] sm:$0xf]
        %v460 = vld [vmem:[%s418 + $0x4] sm:$0xf]
        %s461 = scalar_select %p458, 1, 0
        %v462 = vstv %s461
        %vm463 = vcmp.eq.s32.totalorder %v462, 1
        %v464 = vsel %vm463, %v459, 0
        %v465 = vsel %vm463, %v460, 0
        %v466 = vld [vmem:[#allocation2] sm:$0xf]
        %v467 = vld [vmem:[#allocation2 + $0x4] sm:$0xf]
        %v468 = vld [vmem:[#allocation2 + $0x8] sm:$0xf]
        %v469 = vld [vmem:[#allocation2 + $0xc] sm:$0xf]
        %v470 = vld [vmem:[#allocation2 + $0x10] sm:$0xf]
        %v471 = vld [vmem:[#allocation2 + $0x14] sm:$0xf]
        %v472 = vld [vmem:[#allocation2 + $0x18] sm:$0xf]
        %v473 = vld [vmem:[#allocation2 + $0x1c] sm:$0xf]
        %v474 = vld [vmem:[#allocation2 + $0x20] sm:$0xf]
        %v475 = vld [vmem:[#allocation2 + $0x24] sm:$0xf]
        %v476 = vld [vmem:[#allocation2 + $0x28] sm:$0xf]
        %v477 = vld [vmem:[#allocation2 + $0x2c] sm:$0xf]
        %v478 = vld [vmem:[#allocation2 + $0x30] sm:$0xf]
        %v479 = vld [vmem:[#allocation2 + $0x34] sm:$0xf]
        %v480 = vld [vmem:[#allocation2 + $0x38] sm:$0xf]
        %v481 = vld [vmem:[#allocation2 + $0x3c] sm:$0xf]
        %s482 = scalar_lea.vmem [#allocation2], 192
        %v483 = vld [vmem:[%s482] sm:$0xf]
        %v484 = vld [vmem:[%s482 + $0x4] sm:$0xf]
        %v485 = vld [vmem:[%s482 + $0x8] sm:$0xf]
        %v486 = vld [vmem:[%s482 + $0xc] sm:$0xf]
        %v487 = vld [vmem:[%s482 + $0x10] sm:$0xf]
        %v488 = vld [vmem:[%s482 + $0x14] sm:$0xf]
        %v489 = vld [vmem:[%s482 + $0x18] sm:$0xf]
        %v490 = vld [vmem:[%s482 + $0x1c] sm:$0xf]
        %v491 = vld [vmem:[%s482 + $0x20] sm:$0xf]
        %v492 = vld [vmem:[%s482 + $0x24] sm:$0xf]
        %v493 = vld [vmem:[%s482 + $0x28] sm:$0xf]
        %v494 = vld [vmem:[%s482 + $0x2c] sm:$0xf]
        %v495 = vld [vmem:[%s482 + $0x30] sm:$0xf]
        %v496 = vld [vmem:[%s482 + $0x34] sm:$0xf]
        %v497 = vld [vmem:[%s482 + $0x38] sm:$0xf]
        %v498 = vld [vmem:[%s482 + $0x3c] sm:$0xf]
        %v515 = vunpack.c.l.b16 %v434
        %v516 = vunpack.c.l.b16 %v435
        %v517 = vunpack.c.l.b16 %v436
        %v518 = vunpack.c.l.b16 %v437
        %v519 = vunpack.c.l.b16 %v438
        %v520 = vunpack.c.l.b16 %v439
        %v521 = vunpack.c.l.b16 %v440
        %v522 = vunpack.c.l.b16 %v441
        %v523 = vunpack.c.l.b16 %v442
        %v524 = vunpack.c.l.b16 %v443
        %v525 = vunpack.c.l.b16 %v444
        %v526 = vunpack.c.l.b16 %v445
        %v527 = vunpack.c.l.b16 %v446
        %v528 = vunpack.c.l.b16 %v447
        %v529 = vunpack.c.l.b16 %v448
        %v530 = vunpack.c.l.b16 %v449
        %v531 = vpack.c.b16 %v516, %v515
        %v532 = vpack.c.b16 %v518, %v517
        %v533 = vpack.c.b16 %v520, %v519
        %v534 = vpack.c.b16 %v522, %v521
        %v535 = vpack.c.b16 %v524, %v523
        %v536 = vpack.c.b16 %v526, %v525
        %v537 = vpack.c.b16 %v528, %v527
        %v538 = vpack.c.b16 %v530, %v529
        %v563 = vunpack.c.l.b16 %v483
        %v564 = vunpack.c.l.b16 %v484
        %v565 = vunpack.c.l.b16 %v485
        %v566 = vunpack.c.l.b16 %v486
        %v567 = vunpack.c.l.b16 %v487
        %v568 = vunpack.c.l.b16 %v488
        %v569 = vunpack.c.l.b16 %v489
        %v570 = vunpack.c.l.b16 %v490
        %v571 = vunpack.c.l.b16 %v491
        %v572 = vunpack.c.l.b16 %v492
        %v573 = vunpack.c.l.b16 %v493
        %v574 = vunpack.c.l.b16 %v494
        %v575 = vunpack.c.l.b16 %v495
        %v576 = vunpack.c.l.b16 %v496
        %v577 = vunpack.c.l.b16 %v497
        %v578 = vunpack.c.l.b16 %v498
        %v579 = vpack.c.b16 %v564, %v563
        %v580 = vpack.c.b16 %v566, %v565
        %v581 = vpack.c.b16 %v568, %v567
        %v582 = vpack.c.b16 %v570, %v569
        %v583 = vpack.c.b16 %v572, %v571
        %v584 = vpack.c.b16 %v574, %v573
        %v585 = vpack.c.b16 %v576, %v575
        %v586 = vpack.c.b16 %v578, %v577
        %595 = vmatprep.subr.bf16.mxu0 0
        %596 = vmatpush1.bf16.msra.mxu0 %v579
        %597 = vmatprep.subr.bf16.mxu0 0
        %598 = vmatpush1.bf16.msra.mxu0 %v580
        %599 = vmatprep.subr.bf16.mxu0 0
        %600 = vmatpush1.bf16.msra.mxu0 %v581
        %601 = vmatprep.subr.bf16.mxu0 0
        %602 = vmatpush1.bf16.msra.mxu0 %v582
        %603 = vmatprep.subr.bf16.mxu0 0
        %604 = vmatpush1.bf16.msra.mxu0 %v583
        %605 = vmatprep.subr.bf16.mxu0 0
        %606 = vmatpush1.bf16.msra.mxu0 %v584
        %607 = vmatprep.subr.bf16.mxu0 0
        %608 = vmatpush1.bf16.msra.mxu0 %v585
        %609 = vmatprep.subr.bf16.mxu0 0
        %610 = vmatpush1.bf16.msra.mxu0 %v586
        %611 = vmatprep.subr.bf16.mxu0 0
        %612 = vmatpush1.bf16.msra.mxu0 0
        %613 = vmatprep.subr.bf16.mxu0 0
        %614 = vmatpush1.bf16.msra.mxu0 0
        %615 = vmatprep.subr.bf16.mxu0 0
        %616 = vmatpush1.bf16.msra.mxu0 0
        %617 = vmatprep.subr.bf16.mxu0 0
        %618 = vmatpush1.bf16.msra.mxu0 0
        %619 = vmatprep.subr.bf16.mxu0 0
        %620 = vmatpush1.bf16.msra.mxu0 0
        %621 = vmatprep.subr.bf16.mxu0 0
        %622 = vmatpush1.bf16.msra.mxu0 0
        %623 = vmatprep.subr.bf16.mxu0 0
        %624 = vmatpush1.bf16.msra.mxu0 0
        %625 = vmatprep.subr.bf16.mxu0 0
        %626 = vmatpush1.bf16.msra.mxu0 0
        %627 = vmatprep.mubr.bf16.mxu0 0
        %628 = vmatmul.mubr.bf16.gmra.mrb[0].mxu0 %v531
        %v629 = vpop.f32.mrb[0].mxu0
        %v630 = vadd.f32 0.0, %v629
        %v631 = vpop.f32.mrb[0].mxu0
        %v632 = vpop.f32.mrb[0].mxu0
        %v633 = vpop.f32.mrb[0].mxu0
        %634 = vmatprep.mubr.bf16.mxu0 0
        %635 = vmatmul.mubr.bf16.gmra.mrb[0].mxu0 %v532
        %v636 = vpop.f32.mrb[0].mxu0
        %v637 = vadd.f32 0.0, %v636
        %v638 = vpop.f32.mrb[0].mxu0
        %v639 = vpop.f32.mrb[0].mxu0
        %v640 = vpop.f32.mrb[0].mxu0
        %641 = vmatprep.mubr.bf16.mxu0 0
        %642 = vmatmul.mubr.bf16.gmra.mrb[0].mxu0 %v533
        %v643 = vpop.f32.mrb[0].mxu0
        %v644 = vadd.f32 0.0, %v643
        %v645 = vpop.f32.mrb[0].mxu0
        %v646 = vpop.f32.mrb[0].mxu0
        %v647 = vpop.f32.mrb[0].mxu0
        %648 = vmatprep.mubr.bf16.mxu0 0
        %649 = vmatmul.mubr.bf16.gmra.mrb[0].mxu0 %v534
        %v650 = vpop.f32.mrb[0].mxu0
        %v651 = vadd.f32 0.0, %v650
        %v652 = vpop.f32.mrb[0].mxu0
        %v653 = vpop.f32.mrb[0].mxu0
        %v654 = vpop.f32.mrb[0].mxu0
        %655 = vmatprep.mubr.bf16.mxu0 0
        %656 = vmatmul.mubr.bf16.gmra.mrb[0].mxu0 %v535
        %v657 = vpop.f32.mrb[0].mxu0
        %v658 = vadd.f32 0.0, %v657
        %v659 = vpop.f32.mrb[0].mxu0
        %v660 = vpop.f32.mrb[0].mxu0
        %v661 = vpop.f32.mrb[0].mxu0
        %662 = vmatprep.mubr.bf16.mxu0 0
        %663 = vmatmul.mubr.bf16.gmra.mrb[0].mxu0 %v536
        %v664 = vpop.f32.mrb[0].mxu0
        %v665 = vadd.f32 0.0, %v664
        %v666 = vpop.f32.mrb[0].mxu0
        %v667 = vpop.f32.mrb[0].mxu0
        %v668 = vpop.f32.mrb[0].mxu0
        %669 = vmatprep.mubr.bf16.mxu0 0
        %670 = vmatmul.mubr.bf16.gmra.mrb[0].mxu0 %v537
        %v671 = vpop.f32.mrb[0].mxu0
        %v672 = vadd.f32 0.0, %v671
        %v673 = vpop.f32.mrb[0].mxu0
        %v674 = vpop.f32.mrb[0].mxu0
        %v675 = vpop.f32.mrb[0].mxu0
        %676 = vmatprep.mubr.bf16.mxu0 0
        %677 = vmatmul.mubr.bf16.gmra.mrb[0].mxu0 %v538
        %v678 = vpop.f32.mrb[0].mxu0
        %v679 = vadd.f32 0.0, %v678
        %v680 = vpop.f32.mrb[0].mxu0
        %v681 = vpop.f32.mrb[0].mxu0
        %v682 = vpop.f32.mrb[0].mxu0
        %683 = vdwg.mxu0
        %v686 = vunpack.c.l.b16 %v456
        %v687 = vunpack.c.l.b16 %v457
        %v688 = vpack.c.b16 %v687, %v686
        %v706 = vunpack.c.l.b16 %v466
        %v707 = vunpack.c.l.b16 %v467
        %v708 = vunpack.c.l.b16 %v468
        %v709 = vunpack.c.l.b16 %v469
        %v710 = vunpack.c.l.b16 %v470
        %v711 = vunpack.c.l.b16 %v471
        %v712 = vunpack.c.l.b16 %v472
        %v713 = vunpack.c.l.b16 %v473
        %v714 = vunpack.c.l.b16 %v474
        %v715 = vunpack.c.l.b16 %v475
        %v716 = vunpack.c.l.b16 %v476
        %v717 = vunpack.c.l.b16 %v477
        %v718 = vunpack.c.l.b16 %v478
        %v719 = vunpack.c.l.b16 %v479
        %v720 = vunpack.c.l.b16 %v480
        %v721 = vunpack.c.l.b16 %v481
        %v722 = vpack.c.b16 %v707, %v706
        %v723 = vpack.c.b16 %v709, %v708
        %v724 = vpack.c.b16 %v711, %v710
        %v725 = vpack.c.b16 %v713, %v712
        %v726 = vpack.c.b16 %v715, %v714
        %v727 = vpack.c.b16 %v717, %v716
        %v728 = vpack.c.b16 %v719, %v718
        %v729 = vpack.c.b16 %v721, %v720
        %738 = vmatprep.subr.bf16.mxu0 0
        %739 = vmatpush1.bf16.msra.mxu0 %v722
        %740 = vmatprep.subr.bf16.mxu0 0
        %741 = vmatpush1.bf16.msra.mxu0 %v723
        %742 = vmatprep.subr.bf16.mxu0 0
        %743 = vmatpush1.bf16.msra.mxu0 %v724
        %744 = vmatprep.subr.bf16.mxu0 0
        %745 = vmatpush1.bf16.msra.mxu0 %v725
        %746 = vmatprep.subr.bf16.mxu0 0
        %747 = vmatpush1.bf16.msra.mxu0 %v726
        %748 = vmatprep.subr.bf16.mxu0 0
        %749 = vmatpush1.bf16.msra.mxu0 %v727
        %750 = vmatprep.subr.bf16.mxu0 0
        %751 = vmatpush1.bf16.msra.mxu0 %v728
        %752 = vmatprep.subr.bf16.mxu0 0
        %753 = vmatpush1.bf16.msra.mxu0 %v729
        %754 = vmatprep.subr.bf16.mxu0 0
        %755 = vmatpush1.bf16.msra.mxu0 0
        %756 = vmatprep.subr.bf16.mxu0 0
        %757 = vmatpush1.bf16.msra.mxu0 0
        %758 = vmatprep.subr.bf16.mxu0 0
        %759 = vmatpush1.bf16.msra.mxu0 0
        %760 = vmatprep.subr.bf16.mxu0 0
        %761 = vmatpush1.bf16.msra.mxu0 0
        %762 = vmatprep.subr.bf16.mxu0 0
        %763 = vmatpush1.bf16.msra.mxu0 0
        %764 = vmatprep.subr.bf16.mxu0 0
        %765 = vmatpush1.bf16.msra.mxu0 0
        %766 = vmatprep.subr.bf16.mxu0 0
        %767 = vmatpush1.bf16.msra.mxu0 0
        %768 = vmatprep.subr.bf16.mxu0 0
        %769 = vmatpush1.bf16.msra.mxu0 0
        %770 = vmatprep.mubr.bf16.mxu0 0
        %771 = vmatmul.mubr.bf16.gmra.mrb[0].mxu0 %v688
        %v772 = vpop.f32.mrb[0].mxu0
        %v773 = vadd.f32 %v630, %v772
        %v774 = vpop.f32.mrb[0].mxu0
        %v775 = vpop.f32.mrb[0].mxu0
        %v776 = vpop.f32.mrb[0].mxu0
        %777 = vmatprep.mubr.bf16.mxu0 0
        %778 = vmatmul.mubr.bf16.gmra.mrb[0].mxu0 %v531
        %v779 = vpop.f32.mrb[0].mxu0
        %v780 = vadd.f32 %v637, %v779
        %v781 = vpop.f32.mrb[0].mxu0
        %v782 = vpop.f32.mrb[0].mxu0
        %v783 = vpop.f32.mrb[0].mxu0
        %784 = vmatprep.mubr.bf16.mxu0 0
        %785 = vmatmul.mubr.bf16.gmra.mrb[0].mxu0 %v532
        %v786 = vpop.f32.mrb[0].mxu0
        %v787 = vadd.f32 %v644, %v786
        %v788 = vpop.f32.mrb[0].mxu0
        %v789 = vpop.f32.mrb[0].mxu0
        %v790 = vpop.f32.mrb[0].mxu0
        %791 = vmatprep.mubr.bf16.mxu0 0
        %792 = vmatmul.mubr.bf16.gmra.mrb[0].mxu0 %v533
        %v793 = vpop.f32.mrb[0].mxu0
        %v794 = vadd.f32 %v651, %v793
        %v795 = vpop.f32.mrb[0].mxu0
        %v796 = vpop.f32.mrb[0].mxu0
        %v797 = vpop.f32.mrb[0].mxu0
        %798 = vmatprep.mubr.bf16.mxu0 0
        %799 = vmatmul.mubr.bf16.gmra.mrb[0].mxu0 %v534
        %v800 = vpop.f32.mrb[0].mxu0
        %v801 = vadd.f32 %v658, %v800
        %v802 = vpop.f32.mrb[0].mxu0
        %v803 = vpop.f32.mrb[0].mxu0
        %v804 = vpop.f32.mrb[0].mxu0
        %805 = vmatprep.mubr.bf16.mxu0 0
        %806 = vmatmul.mubr.bf16.gmra.mrb[0].mxu0 %v535
        %v807 = vpop.f32.mrb[0].mxu0
        %v808 = vadd.f32 %v665, %v807
        %v809 = vpop.f32.mrb[0].mxu0
        %v810 = vpop.f32.mrb[0].mxu0
        %v811 = vpop.f32.mrb[0].mxu0
        %812 = vmatprep.mubr.bf16.mxu0 0
        %813 = vmatmul.mubr.bf16.gmra.mrb[0].mxu0 %v536
        %v814 = vpop.f32.mrb[0].mxu0
        %v815 = vadd.f32 %v672, %v814
        %v816 = vpop.f32.mrb[0].mxu0
        %v817 = vpop.f32.mrb[0].mxu0
        %v818 = vpop.f32.mrb[0].mxu0
        %819 = vmatprep.mubr.bf16.mxu0 0
        %820 = vmatmul.mubr.bf16.gmra.mrb[0].mxu0 %v537
        %v821 = vpop.f32.mrb[0].mxu0
        %v822 = vadd.f32 %v679, %v821
        %v823 = vpop.f32.mrb[0].mxu0
        %v824 = vpop.f32.mrb[0].mxu0
        %v825 = vpop.f32.mrb[0].mxu0
        %826 = vdwg.mxu0
        %s827 = scalar_lea.vmem [#allocation2], 384
        %v828 = vld [vmem:[%s827] sm:$0xf]
        %v829 = vld [vmem:[%s827 + $0x4] sm:$0xf]
        %v830 = vld [vmem:[%s827 + $0x8] sm:$0xf]
        %v831 = vld [vmem:[%s827 + $0xc] sm:$0xf]
        %v832 = vld [vmem:[%s827 + $0x10] sm:$0xf]
        %v833 = vld [vmem:[%s827 + $0x14] sm:$0xf]
        %v834 = vld [vmem:[%s827 + $0x18] sm:$0xf]
        %v835 = vld [vmem:[%s827 + $0x1c] sm:$0xf]
        %v836 = vld [vmem:[%s827 + $0x20] sm:$0xf]
        %v837 = vld [vmem:[%s827 + $0x24] sm:$0xf]
        %v838 = vld [vmem:[%s827 + $0x28] sm:$0xf]
        %v839 = vld [vmem:[%s827 + $0x2c] sm:$0xf]
        %v840 = vld [vmem:[%s827 + $0x30] sm:$0xf]
        %v841 = vld [vmem:[%s827 + $0x34] sm:$0xf]
        %v842 = vld [vmem:[%s827 + $0x38] sm:$0xf]
        %v843 = vld [vmem:[%s827 + $0x3c] sm:$0xf]
        %v846 = vunpack.c.l.b16 %v464
        %v847 = vunpack.c.l.b16 %v465
        %v848 = vpack.c.b16 %v847, %v846
        %v866 = vunpack.c.l.b16 %v828
        %v867 = vunpack.c.l.b16 %v829
        %v868 = vunpack.c.l.b16 %v830
        %v869 = vunpack.c.l.b16 %v831
        %v870 = vunpack.c.l.b16 %v832
        %v871 = vunpack.c.l.b16 %v833
        %v872 = vunpack.c.l.b16 %v834
        %v873 = vunpack.c.l.b16 %v835
        %v874 = vunpack.c.l.b16 %v836
        %v875 = vunpack.c.l.b16 %v837
        %v876 = vunpack.c.l.b16 %v838
        %v877 = vunpack.c.l.b16 %v839
        %v878 = vunpack.c.l.b16 %v840
        %v879 = vunpack.c.l.b16 %v841
        %v880 = vunpack.c.l.b16 %v842
        %v881 = vunpack.c.l.b16 %v843
        %v882 = vpack.c.b16 %v867, %v866
        %v883 = vpack.c.b16 %v869, %v868
        %v884 = vpack.c.b16 %v871, %v870
        %v885 = vpack.c.b16 %v873, %v872
        %v886 = vpack.c.b16 %v875, %v874
        %v887 = vpack.c.b16 %v877, %v876
        %v888 = vpack.c.b16 %v879, %v878
        %v889 = vpack.c.b16 %v881, %v880
        %898 = vmatprep.subr.bf16.mxu0 0
        %899 = vmatpush1.bf16.msra.mxu0 %v882
        %900 = vmatprep.subr.bf16.mxu0 0
        %901 = vmatpush1.bf16.msra.mxu0 %v883
        %902 = vmatprep.subr.bf16.mxu0 0
        %903 = vmatpush1.bf16.msra.mxu0 %v884
        %904 = vmatprep.subr.bf16.mxu0 0
        %905 = vmatpush1.bf16.msra.mxu0 %v885
        %906 = vmatprep.subr.bf16.mxu0 0
        %907 = vmatpush1.bf16.msra.mxu0 %v886
        %908 = vmatprep.subr.bf16.mxu0 0
        %909 = vmatpush1.bf16.msra.mxu0 %v887
        %910 = vmatprep.subr.bf16.mxu0 0
        %911 = vmatpush1.bf16.msra.mxu0 %v888
        %912 = vmatprep.subr.bf16.mxu0 0
        %913 = vmatpush1.bf16.msra.mxu0 %v889
        %914 = vmatprep.subr.bf16.mxu0 0
        %915 = vmatpush1.bf16.msra.mxu0 0
        %916 = vmatprep.subr.bf16.mxu0 0
        %917 = vmatpush1.bf16.msra.mxu0 0
        %918 = vmatprep.subr.bf16.mxu0 0
        %919 = vmatpush1.bf16.msra.mxu0 0
        %920 = vmatprep.subr.bf16.mxu0 0
        %921 = vmatpush1.bf16.msra.mxu0 0
        %922 = vmatprep.subr.bf16.mxu0 0
        %923 = vmatpush1.bf16.msra.mxu0 0
        %924 = vmatprep.subr.bf16.mxu0 0
        %925 = vmatpush1.bf16.msra.mxu0 0
        %926 = vmatprep.subr.bf16.mxu0 0
        %927 = vmatpush1.bf16.msra.mxu0 0
        %928 = vmatprep.subr.bf16.mxu0 0
        %929 = vmatpush1.bf16.msra.mxu0 0
        %930 = vmatprep.mubr.bf16.mxu0 0
        %931 = vmatmul.mubr.bf16.gmra.mrb[0].mxu0 %v532
        %v932 = vpop.f32.mrb[0].mxu0
        %v933 = vadd.f32 0.0, %v932
        %v934 = vpop.f32.mrb[0].mxu0
        %v935 = vpop.f32.mrb[0].mxu0
        %v936 = vpop.f32.mrb[0].mxu0
        %937 = vmatprep.mubr.bf16.mxu0 0
        %938 = vmatmul.mubr.bf16.gmra.mrb[0].mxu0 %v533
        %v939 = vpop.f32.mrb[0].mxu0
        %v940 = vadd.f32 0.0, %v939
        %v941 = vpop.f32.mrb[0].mxu0
        %v942 = vpop.f32.mrb[0].mxu0
        %v943 = vpop.f32.mrb[0].mxu0
        %944 = vmatprep.mubr.bf16.mxu0 0
        %945 = vmatmul.mubr.bf16.gmra.mrb[0].mxu0 %v534
        %v946 = vpop.f32.mrb[0].mxu0
        %v947 = vadd.f32 0.0, %v946
        %v948 = vpop.f32.mrb[0].mxu0
        %v949 = vpop.f32.mrb[0].mxu0
        %v950 = vpop.f32.mrb[0].mxu0
        %951 = vmatprep.mubr.bf16.mxu0 0
        %952 = vmatmul.mubr.bf16.gmra.mrb[0].mxu0 %v535
        %v953 = vpop.f32.mrb[0].mxu0
        %v954 = vadd.f32 0.0, %v953
        %v955 = vpop.f32.mrb[0].mxu0
        %v956 = vpop.f32.mrb[0].mxu0
        %v957 = vpop.f32.mrb[0].mxu0
        %958 = vmatprep.mubr.bf16.mxu0 0
        %959 = vmatmul.mubr.bf16.gmra.mrb[0].mxu0 %v536
        %v960 = vpop.f32.mrb[0].mxu0
        %v961 = vadd.f32 0.0, %v960
        %v962 = vpop.f32.mrb[0].mxu0
        %v963 = vpop.f32.mrb[0].mxu0
        %v964 = vpop.f32.mrb[0].mxu0
        %965 = vmatprep.mubr.bf16.mxu0 0
        %966 = vmatmul.mubr.bf16.gmra.mrb[0].mxu0 %v537
        %v967 = vpop.f32.mrb[0].mxu0
        %v968 = vadd.f32 0.0, %v967
        %v969 = vpop.f32.mrb[0].mxu0
        %v970 = vpop.f32.mrb[0].mxu0
        %v971 = vpop.f32.mrb[0].mxu0
        %972 = vmatprep.mubr.bf16.mxu0 0
        %973 = vmatmul.mubr.bf16.gmra.mrb[0].mxu0 %v538
        %v974 = vpop.f32.mrb[0].mxu0
        %v975 = vadd.f32 0.0, %v974
        %v976 = vpop.f32.mrb[0].mxu0
        %v977 = vpop.f32.mrb[0].mxu0
        %v978 = vpop.f32.mrb[0].mxu0
        %979 = vmatprep.mubr.bf16.mxu0 0
        %980 = vmatmul.mubr.bf16.gmra.mrb[0].mxu0 %v848
        %v981 = vpop.f32.mrb[0].mxu0
        %v982 = vadd.f32 0.0, %v981
        %v983 = vpop.f32.mrb[0].mxu0
        %v984 = vpop.f32.mrb[0].mxu0
        %v985 = vpop.f32.mrb[0].mxu0
        %986 = vdwg.mxu0
        %v987 = vadd.f32 %v773, %v933
        %v988 = vadd.f32 %v780, %v940
        %v989 = vadd.f32 %v787, %v947
        %v990 = vadd.f32 %v794, %v954
        %v991 = vadd.f32 %v801, %v961
        %v992 = vadd.f32 %v808, %v968
        %v993 = vadd.f32 %v815, %v975
        %v994 = vadd.f32 %v822, %v982
        %v995 = vadd.f32 %v987, 0.0
        %v996 = vadd.f32 %v988, 0.0
        %v997 = vadd.f32 %v989, 0.0
        %v998 = vadd.f32 %v990, 0.0
        %v999 = vadd.f32 %v991, 0.0
        %v1000 = vadd.f32 %v992, 0.0
        %v1001 = vadd.f32 %v993, 0.0
        %v1002 = vadd.f32 %v994, 0.0
        %s1003 = scalar_lea.vmem [#allocation2], 64
        %v1004 = vld [vmem:[%s1003] sm:$0xf]
        %v1005 = vld [vmem:[%s1003 + $0x4] sm:$0xf]
        %v1006 = vld [vmem:[%s1003 + $0x8] sm:$0xf]
        %v1007 = vld [vmem:[%s1003 + $0xc] sm:$0xf]
        %v1008 = vld [vmem:[%s1003 + $0x10] sm:$0xf]
        %v1009 = vld [vmem:[%s1003 + $0x14] sm:$0xf]
        %v1010 = vld [vmem:[%s1003 + $0x18] sm:$0xf]
        %v1011 = vld [vmem:[%s1003 + $0x1c] sm:$0xf]
        %v1012 = vld [vmem:[%s1003 + $0x20] sm:$0xf]
        %v1013 = vld [vmem:[%s1003 + $0x24] sm:$0xf]
        %v1014 = vld [vmem:[%s1003 + $0x28] sm:$0xf]
        %v1015 = vld [vmem:[%s1003 + $0x2c] sm:$0xf]
        %v1016 = vld [vmem:[%s1003 + $0x30] sm:$0xf]
        %v1017 = vld [vmem:[%s1003 + $0x34] sm:$0xf]
        %v1018 = vld [vmem:[%s1003 + $0x38] sm:$0xf]
        %v1019 = vld [vmem:[%s1003 + $0x3c] sm:$0xf]
        %s1020 = scalar_lea.vmem [#allocation2], 256
        %v1021 = vld [vmem:[%s1020] sm:$0xf]
        %v1022 = vld [vmem:[%s1020 + $0x4] sm:$0xf]
        %v1023 = vld [vmem:[%s1020 + $0x8] sm:$0xf]
        %v1024 = vld [vmem:[%s1020 + $0xc] sm:$0xf]
        %v1025 = vld [vmem:[%s1020 + $0x10] sm:$0xf]
        %v1026 = vld [vmem:[%s1020 + $0x14] sm:$0xf]
        %v1027 = vld [vmem:[%s1020 + $0x18] sm:$0xf]
        %v1028 = vld [vmem:[%s1020 + $0x1c] sm:$0xf]
        %v1029 = vld [vmem:[%s1020 + $0x20] sm:$0xf]
        %v1030 = vld [vmem:[%s1020 + $0x24] sm:$0xf]
        %v1031 = vld [vmem:[%s1020 + $0x28] sm:$0xf]
        %v1032 = vld [vmem:[%s1020 + $0x2c] sm:$0xf]
        %v1033 = vld [vmem:[%s1020 + $0x30] sm:$0xf]
        %v1034 = vld [vmem:[%s1020 + $0x34] sm:$0xf]
        %v1035 = vld [vmem:[%s1020 + $0x38] sm:$0xf]
        %v1036 = vld [vmem:[%s1020 + $0x3c] sm:$0xf]
        %v1053 = vunpack.c.l.b16 %v1021
        %v1054 = vunpack.c.l.b16 %v1022
        %v1055 = vunpack.c.l.b16 %v1023
        %v1056 = vunpack.c.l.b16 %v1024
        %v1057 = vunpack.c.l.b16 %v1025
        %v1058 = vunpack.c.l.b16 %v1026
        %v1059 = vunpack.c.l.b16 %v1027
        %v1060 = vunpack.c.l.b16 %v1028
        %v1061 = vunpack.c.l.b16 %v1029
        %v1062 = vunpack.c.l.b16 %v1030
        %v1063 = vunpack.c.l.b16 %v1031
        %v1064 = vunpack.c.l.b16 %v1032
        %v1065 = vunpack.c.l.b16 %v1033
        %v1066 = vunpack.c.l.b16 %v1034
        %v1067 = vunpack.c.l.b16 %v1035
        %v1068 = vunpack.c.l.b16 %v1036
        %v1069 = vpack.c.b16 %v1054, %v1053
        %v1070 = vpack.c.b16 %v1056, %v1055
        %v1071 = vpack.c.b16 %v1058, %v1057
        %v1072 = vpack.c.b16 %v1060, %v1059
        %v1073 = vpack.c.b16 %v1062, %v1061
        %v1074 = vpack.c.b16 %v1064, %v1063
        %v1075 = vpack.c.b16 %v1066, %v1065
        %v1076 = vpack.c.b16 %v1068, %v1067
        %1085 = vmatprep.subr.bf16.mxu0 0
        %1086 = vmatpush1.bf16.msra.mxu0 %v1069
        %1087 = vmatprep.subr.bf16.mxu0 0
        %1088 = vmatpush1.bf16.msra.mxu0 %v1070
        %1089 = vmatprep.subr.bf16.mxu0 0
        %1090 = vmatpush1.bf16.msra.mxu0 %v1071
        %1091 = vmatprep.subr.bf16.mxu0 0
        %1092 = vmatpush1.bf16.msra.mxu0 %v1072
        %1093 = vmatprep.subr.bf16.mxu0 0
        %1094 = vmatpush1.bf16.msra.mxu0 %v1073
        %1095 = vmatprep.subr.bf16.mxu0 0
        %1096 = vmatpush1.bf16.msra.mxu0 %v1074
        %1097 = vmatprep.subr.bf16.mxu0 0
        %1098 = vmatpush1.bf16.msra.mxu0 %v1075
        %1099 = vmatprep.subr.bf16.mxu0 0
        %1100 = vmatpush1.bf16.msra.mxu0 %v1076
        %1101 = vmatprep.subr.bf16.mxu0 0
        %1102 = vmatpush1.bf16.msra.mxu0 0
        %1103 = vmatprep.subr.bf16.mxu0 0
        %1104 = vmatpush1.bf16.msra.mxu0 0
        %1105 = vmatprep.subr.bf16.mxu0 0
        %1106 = vmatpush1.bf16.msra.mxu0 0
        %1107 = vmatprep.subr.bf16.mxu0 0
        %1108 = vmatpush1.bf16.msra.mxu0 0
        %1109 = vmatprep.subr.bf16.mxu0 0
        %1110 = vmatpush1.bf16.msra.mxu0 0
        %1111 = vmatprep.subr.bf16.mxu0 0
        %1112 = vmatpush1.bf16.msra.mxu0 0
        %1113 = vmatprep.subr.bf16.mxu0 0
        %1114 = vmatpush1.bf16.msra.mxu0 0
        %1115 = vmatprep.subr.bf16.mxu0 0
        %1116 = vmatpush1.bf16.msra.mxu0 0
        %1117 = vmatprep.mubr.bf16.mxu0 0
        %1118 = vmatmul.mubr.bf16.gmra.mrb[0].mxu0 %v531
        %v1119 = vpop.f32.mrb[0].mxu0
        %v1120 = vadd.f32 0.0, %v1119
        %v1121 = vpop.f32.mrb[0].mxu0
        %v1122 = vpop.f32.mrb[0].mxu0
        %v1123 = vadd.f32 0.0, %v1122
        %v1124 = vpop.f32.mrb[0].mxu0
        %1125 = vmatprep.mubr.bf16.mxu0 0
        %1126 = vmatmul.mubr.bf16.gmra.mrb[0].mxu0 %v532
        %v1127 = vpop.f32.mrb[0].mxu0
        %v1128 = vadd.f32 0.0, %v1127
        %v1129 = vpop.f32.mrb[0].mxu0
        %v1130 = vpop.f32.mrb[0].mxu0
        %v1131 = vadd.f32 0.0, %v1130
        %v1132 = vpop.f32.mrb[0].mxu0
        %1133 = vmatprep.mubr.bf16.mxu0 0
        %1134 = vmatmul.mubr.bf16.gmra.mrb[0].mxu0 %v533
        %v1135 = vpop.f32.mrb[0].mxu0
        %v1136 = vadd.f32 0.0, %v1135
        %v1137 = vpop.f32.mrb[0].mxu0
        %v1138 = vpop.f32.mrb[0].mxu0
        %v1139 = vadd.f32 0.0, %v1138
        %v1140 = vpop.f32.mrb[0].mxu0
        %1141 = vmatprep.mubr.bf16.mxu0 0
        %1142 = vmatmul.mubr.bf16.gmra.mrb[0].mxu0 %v534
        %v1143 = vpop.f32.mrb[0].mxu0
        %v1144 = vadd.f32 0.0, %v1143
        %v1145 = vpop.f32.mrb[0].mxu0
        %v1146 = vpop.f32.mrb[0].mxu0
        %v1147 = vadd.f32 0.0, %v1146
        %v1148 = vpop.f32.mrb[0].mxu0
        %1149 = vmatprep.mubr.bf16.mxu0 0
        %1150 = vmatmul.mubr.bf16.gmra.mrb[0].mxu0 %v535
        %v1151 = vpop.f32.mrb[0].mxu0
        %v1152 = vadd.f32 0.0, %v1151
        %v1153 = vpop.f32.mrb[0].mxu0
        %v1154 = vpop.f32.mrb[0].mxu0
        %v1155 = vadd.f32 0.0, %v1154
        %v1156 = vpop.f32.mrb[0].mxu0
        %1157 = vmatprep.mubr.bf16.mxu0 0
        %1158 = vmatmul.mubr.bf16.gmra.mrb[0].mxu0 %v536
        %v1159 = vpop.f32.mrb[0].mxu0
        %v1160 = vadd.f32 0.0, %v1159
        %v1161 = vpop.f32.mrb[0].mxu0
        %v1162 = vpop.f32.mrb[0].mxu0
        %v1163 = vadd.f32 0.0, %v1162
        %v1164 = vpop.f32.mrb[0].mxu0
        %1165 = vmatprep.mubr.bf16.mxu0 0
        %1166 = vmatmul.mubr.bf16.gmra.mrb[0].mxu0 %v537
        %v1167 = vpop.f32.mrb[0].mxu0
        %v1168 = vadd.f32 0.0, %v1167
        %v1169 = vpop.f32.mrb[0].mxu0
        %v1170 = vpop.f32.mrb[0].mxu0
        %v1171 = vadd.f32 0.0, %v1170
        %v1172 = vpop.f32.mrb[0].mxu0
        %1173 = vmatprep.mubr.bf16.mxu0 0
        %1174 = vmatmul.mubr.bf16.gmra.mrb[0].mxu0 %v538
        %v1175 = vpop.f32.mrb[0].mxu0
        %v1176 = vadd.f32 0.0, %v1175
        %v1177 = vpop.f32.mrb[0].mxu0
        %v1178 = vpop.f32.mrb[0].mxu0
        %v1179 = vadd.f32 0.0, %v1178
        %v1180 = vpop.f32.mrb[0].mxu0
        %1181 = vdwg.mxu0
        %v1198 = vunpack.c.l.b16 %v1004
        %v1199 = vunpack.c.l.b16 %v1005
        %v1200 = vunpack.c.l.b16 %v1006
        %v1201 = vunpack.c.l.b16 %v1007
        %v1202 = vunpack.c.l.b16 %v1008
        %v1203 = vunpack.c.l.b16 %v1009
        %v1204 = vunpack.c.l.b16 %v1010
        %v1205 = vunpack.c.l.b16 %v1011
        %v1206 = vunpack.c.l.b16 %v1012
        %v1207 = vunpack.c.l.b16 %v1013
        %v1208 = vunpack.c.l.b16 %v1014
        %v1209 = vunpack.c.l.b16 %v1015
        %v1210 = vunpack.c.l.b16 %v1016
        %v1211 = vunpack.c.l.b16 %v1017
        %v1212 = vunpack.c.l.b16 %v1018
        %v1213 = vunpack.c.l.b16 %v1019
        %v1214 = vpack.c.b16 %v1199, %v1198
        %v1215 = vpack.c.b16 %v1201, %v1200
        %v1216 = vpack.c.b16 %v1203, %v1202
        %v1217 = vpack.c.b16 %v1205, %v1204
        %v1218 = vpack.c.b16 %v1207, %v1206
        %v1219 = vpack.c.b16 %v1209, %v1208
        %v1220 = vpack.c.b16 %v1211, %v1210
        %v1221 = vpack.c.b16 %v1213, %v1212
        %1230 = vmatprep.subr.bf16.mxu0 0
        %1231 = vmatpush1.bf16.msra.mxu0 %v1214
        %1232 = vmatprep.subr.bf16.mxu0 0
        %1233 = vmatpush1.bf16.msra.mxu0 %v1215
        %1234 = vmatprep.subr.bf16.mxu0 0
        %1235 = vmatpush1.bf16.msra.mxu0 %v1216
        %1236 = vmatprep.subr.bf16.mxu0 0
        %1237 = vmatpush1.bf16.msra.mxu0 %v1217
        %1238 = vmatprep.subr.bf16.mxu0 0
        %1239 = vmatpush1.bf16.msra.mxu0 %v1218
        %1240 = vmatprep.subr.bf16.mxu0 0
        %1241 = vmatpush1.bf16.msra.mxu0 %v1219
        %1242 = vmatprep.subr.bf16.mxu0 0
        %1243 = vmatpush1.bf16.msra.mxu0 %v1220
        %1244 = vmatprep.subr.bf16.mxu0 0
        %1245 = vmatpush1.bf16.msra.mxu0 %v1221
        %1246 = vmatprep.subr.bf16.mxu0 0
        %1247 = vmatpush1.bf16.msra.mxu0 0
        %1248 = vmatprep.subr.bf16.mxu0 0
        %1249 = vmatpush1.bf16.msra.mxu0 0
        %1250 = vmatprep.subr.bf16.mxu0 0
        %1251 = vmatpush1.bf16.msra.mxu0 0
        %1252 = vmatprep.subr.bf16.mxu0 0
        %1253 = vmatpush1.bf16.msra.mxu0 0
        %1254 = vmatprep.subr.bf16.mxu0 0
        %1255 = vmatpush1.bf16.msra.mxu0 0
        %1256 = vmatprep.subr.bf16.mxu0 0
        %1257 = vmatpush1.bf16.msra.mxu0 0
        %1258 = vmatprep.subr.bf16.mxu0 0
        %1259 = vmatpush1.bf16.msra.mxu0 0
        %1260 = vmatprep.subr.bf16.mxu0 0
        %1261 = vmatpush1.bf16.msra.mxu0 0
        %1262 = vmatprep.mubr.bf16.mxu0 0
        %1263 = vmatmul.mubr.bf16.gmra.mrb[0].mxu0 %v688
        %v1264 = vpop.f32.mrb[0].mxu0
        %v1265 = vadd.f32 %v1120, %v1264
        %v1266 = vpop.f32.mrb[0].mxu0
        %v1267 = vpop.f32.mrb[0].mxu0
        %v1268 = vadd.f32 %v1123, %v1267
        %v1269 = vpop.f32.mrb[0].mxu0
        %1270 = vmatprep.mubr.bf16.mxu0 0
        %1271 = vmatmul.mubr.bf16.gmra.mrb[0].mxu0 %v531
        %v1272 = vpop.f32.mrb[0].mxu0
        %v1273 = vadd.f32 %v1128, %v1272
        %v1274 = vpop.f32.mrb[0].mxu0
        %v1275 = vpop.f32.mrb[0].mxu0
        %v1276 = vadd.f32 %v1131, %v1275
        %v1277 = vpop.f32.mrb[0].mxu0
        %1278 = vmatprep.mubr.bf16.mxu0 0
        %1279 = vmatmul.mubr.bf16.gmra.mrb[0].mxu0 %v532
        %v1280 = vpop.f32.mrb[0].mxu0
        %v1281 = vadd.f32 %v1136, %v1280
        %v1282 = vpop.f32.mrb[0].mxu0
        %v1283 = vpop.f32.mrb[0].mxu0
        %v1284 = vadd.f32 %v1139, %v1283
        %v1285 = vpop.f32.mrb[0].mxu0
        %1286 = vmatprep.mubr.bf16.mxu0 0
        %1287 = vmatmul.mubr.bf16.gmra.mrb[0].mxu0 %v533
        %v1288 = vpop.f32.mrb[0].mxu0
        %v1289 = vadd.f32 %v1144, %v1288
        %v1290 = vpop.f32.mrb[0].mxu0
        %v1291 = vpop.f32.mrb[0].mxu0
        %v1292 = vadd.f32 %v1147, %v1291
        %v1293 = vpop.f32.mrb[0].mxu0
        %1294 = vmatprep.mubr.bf16.mxu0 0
        %1295 = vmatmul.mubr.bf16.gmra.mrb[0].mxu0 %v534
        %v1296 = vpop.f32.mrb[0].mxu0
        %v1297 = vadd.f32 %v1152, %v1296
        %v1298 = vpop.f32.mrb[0].mxu0
        %v1299 = vpop.f32.mrb[0].mxu0
        %v1300 = vadd.f32 %v1155, %v1299
        %v1301 = vpop.f32.mrb[0].mxu0
        %1302 = vmatprep.mubr.bf16.mxu0 0
        %1303 = vmatmul.mubr.bf16.gmra.mrb[0].mxu0 %v535
        %v1304 = vpop.f32.mrb[0].mxu0
        %v1305 = vadd.f32 %v1160, %v1304
        %v1306 = vpop.f32.mrb[0].mxu0
        %v1307 = vpop.f32.mrb[0].mxu0
        %v1308 = vadd.f32 %v1163, %v1307
        %v1309 = vpop.f32.mrb[0].mxu0
        %1310 = vmatprep.mubr.bf16.mxu0 0
        %1311 = vmatmul.mubr.bf16.gmra.mrb[0].mxu0 %v536
        %v1312 = vpop.f32.mrb[0].mxu0
        %v1313 = vadd.f32 %v1168, %v1312
        %v1314 = vpop.f32.mrb[0].mxu0
        %v1315 = vpop.f32.mrb[0].mxu0
        %v1316 = vadd.f32 %v1171, %v1315
        %v1317 = vpop.f32.mrb[0].mxu0
        %1318 = vmatprep.mubr.bf16.mxu0 0
        %1319 = vmatmul.mubr.bf16.gmra.mrb[0].mxu0 %v537
        %v1320 = vpop.f32.mrb[0].mxu0
        %v1321 = vadd.f32 %v1176, %v1320
        %v1322 = vpop.f32.mrb[0].mxu0
        %v1323 = vpop.f32.mrb[0].mxu0
        %v1324 = vadd.f32 %v1179, %v1323
        %v1325 = vpop.f32.mrb[0].mxu0
        %1326 = vdwg.mxu0
        %s1327 = scalar_lea.vmem [#allocation2], 448
        %v1328 = vld [vmem:[%s1327] sm:$0xf]
        %v1329 = vld [vmem:[%s1327 + $0x4] sm:$0xf]
        %v1330 = vld [vmem:[%s1327 + $0x8] sm:$0xf]
        %v1331 = vld [vmem:[%s1327 + $0xc] sm:$0xf]
        %v1332 = vld [vmem:[%s1327 + $0x10] sm:$0xf]
        %v1333 = vld [vmem:[%s1327 + $0x14] sm:$0xf]
        %v1334 = vld [vmem:[%s1327 + $0x18] sm:$0xf]
        %v1335 = vld [vmem:[%s1327 + $0x1c] sm:$0xf]
        %v1336 = vld [vmem:[%s1327 + $0x20] sm:$0xf]
        %v1337 = vld [vmem:[%s1327 + $0x24] sm:$0xf]
        %v1338 = vld [vmem:[%s1327 + $0x28] sm:$0xf]
        %v1339 = vld [vmem:[%s1327 + $0x2c] sm:$0xf]
        %v1340 = vld [vmem:[%s1327 + $0x30] sm:$0xf]
        %v1341 = vld [vmem:[%s1327 + $0x34] sm:$0xf]
        %v1342 = vld [vmem:[%s1327 + $0x38] sm:$0xf]
        %v1343 = vld [vmem:[%s1327 + $0x3c] sm:$0xf]
        %v1360 = vunpack.c.l.b16 %v1328
        %v1361 = vunpack.c.l.b16 %v1329
        %v1362 = vunpack.c.l.b16 %v1330
        %v1363 = vunpack.c.l.b16 %v1331
        %v1364 = vunpack.c.l.b16 %v1332
        %v1365 = vunpack.c.l.b16 %v1333
        %v1366 = vunpack.c.l.b16 %v1334
        %v1367 = vunpack.c.l.b16 %v1335
        %v1368 = vunpack.c.l.b16 %v1336
        %v1369 = vunpack.c.l.b16 %v1337
        %v1370 = vunpack.c.l.b16 %v1338
        %v1371 = vunpack.c.l.b16 %v1339
        %v1372 = vunpack.c.l.b16 %v1340
        %v1373 = vunpack.c.l.b16 %v1341
        %v1374 = vunpack.c.l.b16 %v1342
        %v1375 = vunpack.c.l.b16 %v1343
        %v1376 = vpack.c.b16 %v1361, %v1360
        %v1377 = vpack.c.b16 %v1363, %v1362
        %v1378 = vpack.c.b16 %v1365, %v1364
        %v1379 = vpack.c.b16 %v1367, %v1366
        %v1380 = vpack.c.b16 %v1369, %v1368
        %v1381 = vpack.c.b16 %v1371, %v1370
        %v1382 = vpack.c.b16 %v1373, %v1372
        %v1383 = vpack.c.b16 %v1375, %v1374
        %1392 = vmatprep.subr.bf16.mxu0 0
        %1393 = vmatpush1.bf16.msra.mxu0 %v1376
        %1394 = vmatprep.subr.bf16.mxu0 0
        %1395 = vmatpush1.bf16.msra.mxu0 %v1377
        %1396 = vmatprep.subr.bf16.mxu0 0
        %1397 = vmatpush1.bf16.msra.mxu0 %v1378
        %1398 = vmatprep.subr.bf16.mxu0 0
        %1399 = vmatpush1.bf16.msra.mxu0 %v1379
        %1400 = vmatprep.subr.bf16.mxu0 0
        %1401 = vmatpush1.bf16.msra.mxu0 %v1380
        %1402 = vmatprep.subr.bf16.mxu0 0
        %1403 = vmatpush1.bf16.msra.mxu0 %v1381
        %1404 = vmatprep.subr.bf16.mxu0 0
        %1405 = vmatpush1.bf16.msra.mxu0 %v1382
        %1406 = vmatprep.subr.bf16.mxu0 0
        %1407 = vmatpush1.bf16.msra.mxu0 %v1383
        %1408 = vmatprep.subr.bf16.mxu0 0
        %1409 = vmatpush1.bf16.msra.mxu0 0
        %1410 = vmatprep.subr.bf16.mxu0 0
        %1411 = vmatpush1.bf16.msra.mxu0 0
        %1412 = vmatprep.subr.bf16.mxu0 0
        %1413 = vmatpush1.bf16.msra.mxu0 0
        %1414 = vmatprep.subr.bf16.mxu0 0
        %1415 = vmatpush1.bf16.msra.mxu0 0
        %1416 = vmatprep.subr.bf16.mxu0 0
        %1417 = vmatpush1.bf16.msra.mxu0 0
        %1418 = vmatprep.subr.bf16.mxu0 0
        %1419 = vmatpush1.bf16.msra.mxu0 0
        %1420 = vmatprep.subr.bf16.mxu0 0
        %1421 = vmatpush1.bf16.msra.mxu0 0
        %1422 = vmatprep.subr.bf16.mxu0 0
        %1423 = vmatpush1.bf16.msra.mxu0 0
        %1424 = vmatprep.mubr.bf16.mxu0 0
        %1425 = vmatmul.mubr.bf16.gmra.mrb[0].mxu0 %v532
        %v1426 = vpop.f32.mrb[0].mxu0
        %v1427 = vadd.f32 0.0, %v1426
        %v1428 = vpop.f32.mrb[0].mxu0
        %v1429 = vpop.f32.mrb[0].mxu0
        %v1430 = vadd.f32 0.0, %v1429
        %v1431 = vpop.f32.mrb[0].mxu0
        %1432 = vmatprep.mubr.bf16.mxu0 0
        %1433 = vmatmul.mubr.bf16.gmra.mrb[0].mxu0 %v533
        %v1434 = vpop.f32.mrb[0].mxu0
        %v1435 = vadd.f32 0.0, %v1434
        %v1436 = vpop.f32.mrb[0].mxu0
        %v1437 = vpop.f32.mrb[0].mxu0
        %v1438 = vadd.f32 0.0, %v1437
        %v1439 = vpop.f32.mrb[0].mxu0
        %1440 = vmatprep.mubr.bf16.mxu0 0
        %1441 = vmatmul.mubr.bf16.gmra.mrb[0].mxu0 %v534
        %v1442 = vpop.f32.mrb[0].mxu0
        %v1443 = vadd.f32 0.0, %v1442
        %v1444 = vpop.f32.mrb[0].mxu0
        %v1445 = vpop.f32.mrb[0].mxu0
        %v1446 = vadd.f32 0.0, %v1445
        %v1447 = vpop.f32.mrb[0].mxu0
        %1448 = vmatprep.mubr.bf16.mxu0 0
        %1449 = vmatmul.mubr.bf16.gmra.mrb[0].mxu0 %v535
        %v1450 = vpop.f32.mrb[0].mxu0
        %v1451 = vadd.f32 0.0, %v1450
        %v1452 = vpop.f32.mrb[0].mxu0
        %v1453 = vpop.f32.mrb[0].mxu0
        %v1454 = vadd.f32 0.0, %v1453
        %v1455 = vpop.f32.mrb[0].mxu0
        %1456 = vmatprep.mubr.bf16.mxu0 0
        %1457 = vmatmul.mubr.bf16.gmra.mrb[0].mxu0 %v536
        %v1458 = vpop.f32.mrb[0].mxu0
        %v1459 = vadd.f32 0.0, %v1458
        %v1460 = vpop.f32.mrb[0].mxu0
        %v1461 = vpop.f32.mrb[0].mxu0
        %v1462 = vadd.f32 0.0, %v1461
        %v1463 = vpop.f32.mrb[0].mxu0
        %1464 = vmatprep.mubr.bf16.mxu0 0
        %1465 = vmatmul.mubr.bf16.gmra.mrb[0].mxu0 %v537
        %v1466 = vpop.f32.mrb[0].mxu0
        %v1467 = vadd.f32 0.0, %v1466
        %v1468 = vpop.f32.mrb[0].mxu0
        %v1469 = vpop.f32.mrb[0].mxu0
        %v1470 = vadd.f32 0.0, %v1469
        %v1471 = vpop.f32.mrb[0].mxu0
        %1472 = vmatprep.mubr.bf16.mxu0 0
        %1473 = vmatmul.mubr.bf16.gmra.mrb[0].mxu0 %v538
        %v1474 = vpop.f32.mrb[0].mxu0
        %v1475 = vadd.f32 0.0, %v1474
        %v1476 = vpop.f32.mrb[0].mxu0
        %v1477 = vpop.f32.mrb[0].mxu0
        %v1478 = vadd.f32 0.0, %v1477
        %v1479 = vpop.f32.mrb[0].mxu0
        %1480 = vmatprep.mubr.bf16.mxu0 0
        %1481 = vmatmul.mubr.bf16.gmra.mrb[0].mxu0 %v848
        %v1482 = vpop.f32.mrb[0].mxu0
        %v1483 = vadd.f32 0.0, %v1482
        %v1484 = vpop.f32.mrb[0].mxu0
        %v1485 = vpop.f32.mrb[0].mxu0
        %v1486 = vadd.f32 0.0, %v1485
        %v1487 = vpop.f32.mrb[0].mxu0
        %1488 = vdwg.mxu0
        %v1489 = vadd.f32 %v1265, %v1427
        %v1490 = vadd.f32 %v1268, %v1430
        %v1491 = vadd.f32 %v1273, %v1435
        %v1492 = vadd.f32 %v1276, %v1438
        %v1493 = vadd.f32 %v1281, %v1443
        %v1494 = vadd.f32 %v1284, %v1446
        %v1495 = vadd.f32 %v1289, %v1451
        %v1496 = vadd.f32 %v1292, %v1454
        %v1497 = vadd.f32 %v1297, %v1459
        %v1498 = vadd.f32 %v1300, %v1462
        %v1499 = vadd.f32 %v1305, %v1467
        %v1500 = vadd.f32 %v1308, %v1470
        %v1501 = vadd.f32 %v1313, %v1475
        %v1502 = vadd.f32 %v1316, %v1478
        %v1503 = vadd.f32 %v1321, %v1483
        %v1504 = vadd.f32 %v1324, %v1486
        %vm1521 = vcmask 1046528
        %v1522 = vrot.slane %v1489, 1
        %v1523 = vrot.slane %v1490, 1
        %v1524 = vsel %vm1521, %v1522, %v1523
        %v1525 = vrot.slane %v1491, 1
        %v1526 = vrot.slane %v1492, 1
        %v1527 = vsel %vm1521, %v1525, %v1526
        %v1528 = vrot.slane %v1493, 1
        %v1529 = vrot.slane %v1494, 1
        %v1530 = vsel %vm1521, %v1528, %v1529
        %v1531 = vrot.slane %v1495, 1
        %v1532 = vrot.slane %v1496, 1
        %v1533 = vsel %vm1521, %v1531, %v1532
        %v1534 = vrot.slane %v1497, 1
        %v1535 = vrot.slane %v1498, 1
        %v1536 = vsel %vm1521, %v1534, %v1535
        %v1537 = vrot.slane %v1499, 1
        %v1538 = vrot.slane %v1500, 1
        %v1539 = vsel %vm1521, %v1537, %v1538
        %v1540 = vrot.slane %v1501, 1
        %v1541 = vrot.slane %v1502, 1
        %v1542 = vsel %vm1521, %v1540, %v1541
        %v1543 = vrot.slane %v1503, 1
        %v1544 = vrot.slane %v1504, 1
        %v1545 = vsel %vm1521, %v1543, %v1544
        %v1554 = vadd.f32 %v995, %v1524
        %v1555 = vadd.f32 %v996, %v1527
        %v1556 = vadd.f32 %v997, %v1530
        %v1557 = vadd.f32 %v998, %v1533
        %v1558 = vadd.f32 %v999, %v1536
        %v1559 = vadd.f32 %v1000, %v1539
        %v1560 = vadd.f32 %v1001, %v1542
        %v1561 = vadd.f32 %v1002, %v1545
        %s1562 = scalar_lea.vmem [#allocation2], 128
        %v1563 = vld [vmem:[%s1562] sm:$0xf]
        %v1564 = vld [vmem:[%s1562 + $0x4] sm:$0xf]
        %v1565 = vld [vmem:[%s1562 + $0x8] sm:$0xf]
        %v1566 = vld [vmem:[%s1562 + $0xc] sm:$0xf]
        %v1567 = vld [vmem:[%s1562 + $0x10] sm:$0xf]
        %v1568 = vld [vmem:[%s1562 + $0x14] sm:$0xf]
        %v1569 = vld [vmem:[%s1562 + $0x18] sm:$0xf]
        %v1570 = vld [vmem:[%s1562 + $0x1c] sm:$0xf]
        %v1571 = vld [vmem:[%s1562 + $0x20] sm:$0xf]
        %v1572 = vld [vmem:[%s1562 + $0x24] sm:$0xf]
        %v1573 = vld [vmem:[%s1562 + $0x28] sm:$0xf]
        %v1574 = vld [vmem:[%s1562 + $0x2c] sm:$0xf]
        %v1575 = vld [vmem:[%s1562 + $0x30] sm:$0xf]
        %v1576 = vld [vmem:[%s1562 + $0x34] sm:$0xf]
        %v1577 = vld [vmem:[%s1562 + $0x38] sm:$0xf]
        %v1578 = vld [vmem:[%s1562 + $0x3c] sm:$0xf]
        %s1579 = scalar_lea.vmem [#allocation2], 320
        %v1580 = vld [vmem:[%s1579] sm:$0xf]
        %v1581 = vld [vmem:[%s1579 + $0x4] sm:$0xf]
        %v1582 = vld [vmem:[%s1579 + $0x8] sm:$0xf]
        %v1583 = vld [vmem:[%s1579 + $0xc] sm:$0xf]
        %v1584 = vld [vmem:[%s1579 + $0x10] sm:$0xf]
        %v1585 = vld [vmem:[%s1579 + $0x14] sm:$0xf]
        %v1586 = vld [vmem:[%s1579 + $0x18] sm:$0xf]
        %v1587 = vld [vmem:[%s1579 + $0x1c] sm:$0xf]
        %v1588 = vld [vmem:[%s1579 + $0x20] sm:$0xf]
        %v1589 = vld [vmem:[%s1579 + $0x24] sm:$0xf]
        %v1590 = vld [vmem:[%s1579 + $0x28] sm:$0xf]
        %v1591 = vld [vmem:[%s1579 + $0x2c] sm:$0xf]
        %v1592 = vld [vmem:[%s1579 + $0x30] sm:$0xf]
        %v1593 = vld [vmem:[%s1579 + $0x34] sm:$0xf]
        %v1594 = vld [vmem:[%s1579 + $0x38] sm:$0xf]
        %v1595 = vld [vmem:[%s1579 + $0x3c] sm:$0xf]
        %v1612 = vunpack.c.l.b16 %v1580
        %v1613 = vunpack.c.l.b16 %v1581
        %v1614 = vunpack.c.l.b16 %v1582
        %v1615 = vunpack.c.l.b16 %v1583
        %v1616 = vunpack.c.l.b16 %v1584
        %v1617 = vunpack.c.l.b16 %v1585
        %v1618 = vunpack.c.l.b16 %v1586
        %v1619 = vunpack.c.l.b16 %v1587
        %v1620 = vunpack.c.l.b16 %v1588
        %v1621 = vunpack.c.l.b16 %v1589
        %v1622 = vunpack.c.l.b16 %v1590
        %v1623 = vunpack.c.l.b16 %v1591
        %v1624 = vunpack.c.l.b16 %v1592
        %v1625 = vunpack.c.l.b16 %v1593
        %v1626 = vunpack.c.l.b16 %v1594
        %v1627 = vunpack.c.l.b16 %v1595
        %v1628 = vpack.c.b16 %v1613, %v1612
        %v1629 = vpack.c.b16 %v1615, %v1614
        %v1630 = vpack.c.b16 %v1617, %v1616
        %v1631 = vpack.c.b16 %v1619, %v1618
        %v1632 = vpack.c.b16 %v1621, %v1620
        %v1633 = vpack.c.b16 %v1623, %v1622
        %v1634 = vpack.c.b16 %v1625, %v1624
        %v1635 = vpack.c.b16 %v1627, %v1626
        %1644 = vmatprep.subr.bf16.mxu0 0
        %1645 = vmatpush1.bf16.msra.mxu0 %v1628
        %1646 = vmatprep.subr.bf16.mxu0 0
        %1647 = vmatpush1.bf16.msra.mxu0 %v1629
        %1648 = vmatprep.subr.bf16.mxu0 0
        %1649 = vmatpush1.bf16.msra.mxu0 %v1630
        %1650 = vmatprep.subr.bf16.mxu0 0
        %1651 = vmatpush1.bf16.msra.mxu0 %v1631
        %1652 = vmatprep.subr.bf16.mxu0 0
        %1653 = vmatpush1.bf16.msra.mxu0 %v1632
        %1654 = vmatprep.subr.bf16.mxu0 0
        %1655 = vmatpush1.bf16.msra.mxu0 %v1633
        %1656 = vmatprep.subr.bf16.mxu0 0
        %1657 = vmatpush1.bf16.msra.mxu0 %v1634
        %1658 = vmatprep.subr.bf16.mxu0 0
        %1659 = vmatpush1.bf16.msra.mxu0 %v1635
        %1660 = vmatprep.subr.bf16.mxu0 0
        %1661 = vmatpush1.bf16.msra.mxu0 0
        %1662 = vmatprep.subr.bf16.mxu0 0
        %1663 = vmatpush1.bf16.msra.mxu0 0
        %1664 = vmatprep.subr.bf16.mxu0 0
        %1665 = vmatpush1.bf16.msra.mxu0 0
        %1666 = vmatprep.subr.bf16.mxu0 0
        %1667 = vmatpush1.bf16.msra.mxu0 0
        %1668 = vmatprep.subr.bf16.mxu0 0
        %1669 = vmatpush1.bf16.msra.mxu0 0
        %1670 = vmatprep.subr.bf16.mxu0 0
        %1671 = vmatpush1.bf16.msra.mxu0 0
        %1672 = vmatprep.subr.bf16.mxu0 0
        %1673 = vmatpush1.bf16.msra.mxu0 0
        %1674 = vmatprep.subr.bf16.mxu0 0
        %1675 = vmatpush1.bf16.msra.mxu0 0
        %1676 = vmatprep.mubr.bf16.mxu0 0
        %1677 = vmatmul.mubr.bf16.gmra.mrb[0].mxu0 %v531
        %v1678 = vpop.f32.mrb[0].mxu0
        %v1679 = vadd.f32 0.0, %v1678
        %v1680 = vpop.f32.mrb[0].mxu0
        %v1681 = vpop.f32.mrb[0].mxu0
        %v1682 = vadd.f32 0.0, %v1681
        %v1683 = vpop.f32.mrb[0].mxu0
        %1684 = vmatprep.mubr.bf16.mxu0 0
        %1685 = vmatmul.mubr.bf16.gmra.mrb[0].mxu0 %v532
        %v1686 = vpop.f32.mrb[0].mxu0
        %v1687 = vadd.f32 0.0, %v1686
        %v1688 = vpop.f32.mrb[0].mxu0
        %v1689 = vpop.f32.mrb[0].mxu0
        %v1690 = vadd.f32 0.0, %v1689
        %v1691 = vpop.f32.mrb[0].mxu0
        %1692 = vmatprep.mubr.bf16.mxu0 0
        %1693 = vmatmul.mubr.bf16.gmra.mrb[0].mxu0 %v533
        %v1694 = vpop.f32.mrb[0].mxu0
        %v1695 = vadd.f32 0.0, %v1694
        %v1696 = vpop.f32.mrb[0].mxu0
        %v1697 = vpop.f32.mrb[0].mxu0
        %v1698 = vadd.f32 0.0, %v1697
        %v1699 = vpop.f32.mrb[0].mxu0
        %1700 = vmatprep.mubr.bf16.mxu0 0
        %1701 = vmatmul.mubr.bf16.gmra.mrb[0].mxu0 %v534
        %v1702 = vpop.f32.mrb[0].mxu0
        %v1703 = vadd.f32 0.0, %v1702
        %v1704 = vpop.f32.mrb[0].mxu0
        %v1705 = vpop.f32.mrb[0].mxu0
        %v1706 = vadd.f32 0.0, %v1705
        %v1707 = vpop.f32.mrb[0].mxu0
        %1708 = vmatprep.mubr.bf16.mxu0 0
        %1709 = vmatmul.mubr.bf16.gmra.mrb[0].mxu0 %v535
        %v1710 = vpop.f32.mrb[0].mxu0
        %v1711 = vadd.f32 0.0, %v1710
        %v1712 = vpop.f32.mrb[0].mxu0
        %v1713 = vpop.f32.mrb[0].mxu0
        %v1714 = vadd.f32 0.0, %v1713
        %v1715 = vpop.f32.mrb[0].mxu0
        %1716 = vmatprep.mubr.bf16.mxu0 0
        %1717 = vmatmul.mubr.bf16.gmra.mrb[0].mxu0 %v536
        %v1718 = vpop.f32.mrb[0].mxu0
        %v1719 = vadd.f32 0.0, %v1718
        %v1720 = vpop.f32.mrb[0].mxu0
        %v1721 = vpop.f32.mrb[0].mxu0
        %v1722 = vadd.f32 0.0, %v1721
        %v1723 = vpop.f32.mrb[0].mxu0
        %1724 = vmatprep.mubr.bf16.mxu0 0
        %1725 = vmatmul.mubr.bf16.gmra.mrb[0].mxu0 %v537
        %v1726 = vpop.f32.mrb[0].mxu0
        %v1727 = vadd.f32 0.0, %v1726
        %v1728 = vpop.f32.mrb[0].mxu0
        %v1729 = vpop.f32.mrb[0].mxu0
        %v1730 = vadd.f32 0.0, %v1729
        %v1731 = vpop.f32.mrb[0].mxu0
        %1732 = vmatprep.mubr.bf16.mxu0 0
        %1733 = vmatmul.mubr.bf16.gmra.mrb[0].mxu0 %v538
        %v1734 = vpop.f32.mrb[0].mxu0
        %v1735 = vadd.f32 0.0, %v1734
        %v1736 = vpop.f32.mrb[0].mxu0
        %v1737 = vpop.f32.mrb[0].mxu0
        %v1738 = vadd.f32 0.0, %v1737
        %v1739 = vpop.f32.mrb[0].mxu0
        %1740 = vdwg.mxu0
        %v1757 = vunpack.c.l.b16 %v1563
        %v1758 = vunpack.c.l.b16 %v1564
        %v1759 = vunpack.c.l.b16 %v1565
        %v1760 = vunpack.c.l.b16 %v1566
        %v1761 = vunpack.c.l.b16 %v1567
        %v1762 = vunpack.c.l.b16 %v1568
        %v1763 = vunpack.c.l.b16 %v1569
        %v1764 = vunpack.c.l.b16 %v1570
        %v1765 = vunpack.c.l.b16 %v1571
        %v1766 = vunpack.c.l.b16 %v1572
        %v1767 = vunpack.c.l.b16 %v1573
        %v1768 = vunpack.c.l.b16 %v1574
        %v1769 = vunpack.c.l.b16 %v1575
        %v1770 = vunpack.c.l.b16 %v1576
        %v1771 = vunpack.c.l.b16 %v1577
        %v1772 = vunpack.c.l.b16 %v1578
        %v1773 = vpack.c.b16 %v1758, %v1757
        %v1774 = vpack.c.b16 %v1760, %v1759
        %v1775 = vpack.c.b16 %v1762, %v1761
        %v1776 = vpack.c.b16 %v1764, %v1763
        %v1777 = vpack.c.b16 %v1766, %v1765
        %v1778 = vpack.c.b16 %v1768, %v1767
        %v1779 = vpack.c.b16 %v1770, %v1769
        %v1780 = vpack.c.b16 %v1772, %v1771
        %1789 = vmatprep.subr.bf16.mxu0 0
        %1790 = vmatpush1.bf16.msra.mxu0 %v1773
        %1791 = vmatprep.subr.bf16.mxu0 0
        %1792 = vmatpush1.bf16.msra.mxu0 %v1774
        %1793 = vmatprep.subr.bf16.mxu0 0
        %1794 = vmatpush1.bf16.msra.mxu0 %v1775
        %1795 = vmatprep.subr.bf16.mxu0 0
        %1796 = vmatpush1.bf16.msra.mxu0 %v1776
        %1797 = vmatprep.subr.bf16.mxu0 0
        %1798 = vmatpush1.bf16.msra.mxu0 %v1777
        %1799 = vmatprep.subr.bf16.mxu0 0
        %1800 = vmatpush1.bf16.msra.mxu0 %v1778
        %1801 = vmatprep.subr.bf16.mxu0 0
        %1802 = vmatpush1.bf16.msra.mxu0 %v1779
        %1803 = vmatprep.subr.bf16.mxu0 0
        %1804 = vmatpush1.bf16.msra.mxu0 %v1780
        %1805 = vmatprep.subr.bf16.mxu0 0
        %1806 = vmatpush1.bf16.msra.mxu0 0
        %1807 = vmatprep.subr.bf16.mxu0 0
        %1808 = vmatpush1.bf16.msra.mxu0 0
        %1809 = vmatprep.subr.bf16.mxu0 0
        %1810 = vmatpush1.bf16.msra.mxu0 0
        %1811 = vmatprep.subr.bf16.mxu0 0
        %1812 = vmatpush1.bf16.msra.mxu0 0
        %1813 = vmatprep.subr.bf16.mxu0 0
        %1814 = vmatpush1.bf16.msra.mxu0 0
        %1815 = vmatprep.subr.bf16.mxu0 0
        %1816 = vmatpush1.bf16.msra.mxu0 0
        %1817 = vmatprep.subr.bf16.mxu0 0
        %1818 = vmatpush1.bf16.msra.mxu0 0
        %1819 = vmatprep.subr.bf16.mxu0 0
        %1820 = vmatpush1.bf16.msra.mxu0 0
        %1821 = vmatprep.mubr.bf16.mxu0 0
        %1822 = vmatmul.mubr.bf16.gmra.mrb[0].mxu0 %v688
        %v1823 = vpop.f32.mrb[0].mxu0
        %v1824 = vadd.f32 %v1679, %v1823
        %v1825 = vpop.f32.mrb[0].mxu0
        %v1826 = vpop.f32.mrb[0].mxu0
        %v1827 = vadd.f32 %v1682, %v1826
        %v1828 = vpop.f32.mrb[0].mxu0
        %1829 = vmatprep.mubr.bf16.mxu0 0
        %1830 = vmatmul.mubr.bf16.gmra.mrb[0].mxu0 %v531
        %v1831 = vpop.f32.mrb[0].mxu0
        %v1832 = vadd.f32 %v1687, %v1831
        %v1833 = vpop.f32.mrb[0].mxu0
        %v1834 = vpop.f32.mrb[0].mxu0
        %v1835 = vadd.f32 %v1690, %v1834
        %v1836 = vpop.f32.mrb[0].mxu0
        %1837 = vmatprep.mubr.bf16.mxu0 0
        %1838 = vmatmul.mubr.bf16.gmra.mrb[0].mxu0 %v532
        %v1839 = vpop.f32.mrb[0].mxu0
        %v1840 = vadd.f32 %v1695, %v1839
        %v1841 = vpop.f32.mrb[0].mxu0
        %v1842 = vpop.f32.mrb[0].mxu0
        %v1843 = vadd.f32 %v1698, %v1842
        %v1844 = vpop.f32.mrb[0].mxu0
        %1845 = vmatprep.mubr.bf16.mxu0 0
        %1846 = vmatmul.mubr.bf16.gmra.mrb[0].mxu0 %v533
        %v1847 = vpop.f32.mrb[0].mxu0
        %v1848 = vadd.f32 %v1703, %v1847
        %v1849 = vpop.f32.mrb[0].mxu0
        %v1850 = vpop.f32.mrb[0].mxu0
        %v1851 = vadd.f32 %v1706, %v1850
        %v1852 = vpop.f32.mrb[0].mxu0
        %1853 = vmatprep.mubr.bf16.mxu0 0
        %1854 = vmatmul.mubr.bf16.gmra.mrb[0].mxu0 %v534
        %v1855 = vpop.f32.mrb[0].mxu0
        %v1856 = vadd.f32 %v1711, %v1855
        %v1857 = vpop.f32.mrb[0].mxu0
        %v1858 = vpop.f32.mrb[0].mxu0
        %v1859 = vadd.f32 %v1714, %v1858
        %v1860 = vpop.f32.mrb[0].mxu0
        %1861 = vmatprep.mubr.bf16.mxu0 0
        %1862 = vmatmul.mubr.bf16.gmra.mrb[0].mxu0 %v535
        %v1863 = vpop.f32.mrb[0].mxu0
        %v1864 = vadd.f32 %v1719, %v1863
        %v1865 = vpop.f32.mrb[0].mxu0
        %v1866 = vpop.f32.mrb[0].mxu0
        %v1867 = vadd.f32 %v1722, %v1866
        %v1868 = vpop.f32.mrb[0].mxu0
        %1869 = vmatprep.mubr.bf16.mxu0 0
        %1870 = vmatmul.mubr.bf16.gmra.mrb[0].mxu0 %v536
        %v1871 = vpop.f32.mrb[0].mxu0
        %v1872 = vadd.f32 %v1727, %v1871
        %v1873 = vpop.f32.mrb[0].mxu0
        %v1874 = vpop.f32.mrb[0].mxu0
        %v1875 = vadd.f32 %v1730, %v1874
        %v1876 = vpop.f32.mrb[0].mxu0
        %1877 = vmatprep.mubr.bf16.mxu0 0
        %1878 = vmatmul.mubr.bf16.gmra.mrb[0].mxu0 %v537
        %v1879 = vpop.f32.mrb[0].mxu0
        %v1880 = vadd.f32 %v1735, %v1879
        %v1881 = vpop.f32.mrb[0].mxu0
        %v1882 = vpop.f32.mrb[0].mxu0
        %v1883 = vadd.f32 %v1738, %v1882
        %v1884 = vpop.f32.mrb[0].mxu0
        %1885 = vdwg.mxu0
        %s1886 = scalar_lea.vmem [#allocation2], 512
        %v1887 = vld [vmem:[%s1886] sm:$0xf]
        %v1888 = vld [vmem:[%s1886 + $0x4] sm:$0xf]
        %v1889 = vld [vmem:[%s1886 + $0x8] sm:$0xf]
        %v1890 = vld [vmem:[%s1886 + $0xc] sm:$0xf]
        %v1891 = vld [vmem:[%s1886 + $0x10] sm:$0xf]
        %v1892 = vld [vmem:[%s1886 + $0x14] sm:$0xf]
        %v1893 = vld [vmem:[%s1886 + $0x18] sm:$0xf]
        %v1894 = vld [vmem:[%s1886 + $0x1c] sm:$0xf]
        %v1895 = vld [vmem:[%s1886 + $0x20] sm:$0xf]
        %v1896 = vld [vmem:[%s1886 + $0x24] sm:$0xf]
        %v1897 = vld [vmem:[%s1886 + $0x28] sm:$0xf]
        %v1898 = vld [vmem:[%s1886 + $0x2c] sm:$0xf]
        %v1899 = vld [vmem:[%s1886 + $0x30] sm:$0xf]
        %v1900 = vld [vmem:[%s1886 + $0x34] sm:$0xf]
        %v1901 = vld [vmem:[%s1886 + $0x38] sm:$0xf]
        %v1902 = vld [vmem:[%s1886 + $0x3c] sm:$0xf]
        %v1919 = vunpack.c.l.b16 %v1887
        %v1920 = vunpack.c.l.b16 %v1888
        %v1921 = vunpack.c.l.b16 %v1889
        %v1922 = vunpack.c.l.b16 %v1890
        %v1923 = vunpack.c.l.b16 %v1891
        %v1924 = vunpack.c.l.b16 %v1892
        %v1925 = vunpack.c.l.b16 %v1893
        %v1926 = vunpack.c.l.b16 %v1894
        %v1927 = vunpack.c.l.b16 %v1895
        %v1928 = vunpack.c.l.b16 %v1896
        %v1929 = vunpack.c.l.b16 %v1897
        %v1930 = vunpack.c.l.b16 %v1898
        %v1931 = vunpack.c.l.b16 %v1899
        %v1932 = vunpack.c.l.b16 %v1900
        %v1933 = vunpack.c.l.b16 %v1901
        %v1934 = vunpack.c.l.b16 %v1902
        %v1935 = vpack.c.b16 %v1920, %v1919
        %v1936 = vpack.c.b16 %v1922, %v1921
        %v1937 = vpack.c.b16 %v1924, %v1923
        %v1938 = vpack.c.b16 %v1926, %v1925
        %v1939 = vpack.c.b16 %v1928, %v1927
        %v1940 = vpack.c.b16 %v1930, %v1929
        %v1941 = vpack.c.b16 %v1932, %v1931
        %v1942 = vpack.c.b16 %v1934, %v1933
        %1951 = vmatprep.subr.bf16.mxu0 0
        %1952 = vmatpush1.bf16.msra.mxu0 %v1935
        %1953 = vmatprep.subr.bf16.mxu0 0
        %1954 = vmatpush1.bf16.msra.mxu0 %v1936
        %1955 = vmatprep.subr.bf16.mxu0 0
        %1956 = vmatpush1.bf16.msra.mxu0 %v1937
        %1957 = vmatprep.subr.bf16.mxu0 0
        %1958 = vmatpush1.bf16.msra.mxu0 %v1938
        %1959 = vmatprep.subr.bf16.mxu0 0
        %1960 = vmatpush1.bf16.msra.mxu0 %v1939
        %1961 = vmatprep.subr.bf16.mxu0 0
        %1962 = vmatpush1.bf16.msra.mxu0 %v1940
        %1963 = vmatprep.subr.bf16.mxu0 0
        %1964 = vmatpush1.bf16.msra.mxu0 %v1941
        %1965 = vmatprep.subr.bf16.mxu0 0
        %1966 = vmatpush1.bf16.msra.mxu0 %v1942
        %1967 = vmatprep.subr.bf16.mxu0 0
        %1968 = vmatpush1.bf16.msra.mxu0 0
        %1969 = vmatprep.subr.bf16.mxu0 0
        %1970 = vmatpush1.bf16.msra.mxu0 0
        %1971 = vmatprep.subr.bf16.mxu0 0
        %1972 = vmatpush1.bf16.msra.mxu0 0
        %1973 = vmatprep.subr.bf16.mxu0 0
        %1974 = vmatpush1.bf16.msra.mxu0 0
        %1975 = vmatprep.subr.bf16.mxu0 0
        %1976 = vmatpush1.bf16.msra.mxu0 0
        %1977 = vmatprep.subr.bf16.mxu0 0
        %1978 = vmatpush1.bf16.msra.mxu0 0
        %1979 = vmatprep.subr.bf16.mxu0 0
        %1980 = vmatpush1.bf16.msra.mxu0 0
        %1981 = vmatprep.subr.bf16.mxu0 0
        %1982 = vmatpush1.bf16.msra.mxu0 0
        %1983 = vmatprep.mubr.bf16.mxu0 0
        %1984 = vmatmul.mubr.bf16.gmra.mrb[0].mxu0 %v532
        %v1985 = vpop.f32.mrb[0].mxu0
        %v1986 = vadd.f32 0.0, %v1985
        %v1987 = vpop.f32.mrb[0].mxu0
        %v1988 = vpop.f32.mrb[0].mxu0
        %v1989 = vadd.f32 0.0, %v1988
        %v1990 = vpop.f32.mrb[0].mxu0
        %1991 = vmatprep.mubr.bf16.mxu0 0
        %1992 = vmatmul.mubr.bf16.gmra.mrb[0].mxu0 %v533
        %v1993 = vpop.f32.mrb[0].mxu0
        %v1994 = vadd.f32 0.0, %v1993
        %v1995 = vpop.f32.mrb[0].mxu0
        %v1996 = vpop.f32.mrb[0].mxu0
        %v1997 = vadd.f32 0.0, %v1996
        %v1998 = vpop.f32.mrb[0].mxu0
        %1999 = vmatprep.mubr.bf16.mxu0 0
        %2000 = vmatmul.mubr.bf16.gmra.mrb[0].mxu0 %v534
        %v2001 = vpop.f32.mrb[0].mxu0
        %v2002 = vadd.f32 0.0, %v2001
        %v2003 = vpop.f32.mrb[0].mxu0
        %v2004 = vpop.f32.mrb[0].mxu0
        %v2005 = vadd.f32 0.0, %v2004
        %v2006 = vpop.f32.mrb[0].mxu0
        %2007 = vmatprep.mubr.bf16.mxu0 0
        %2008 = vmatmul.mubr.bf16.gmra.mrb[0].mxu0 %v535
        %v2009 = vpop.f32.mrb[0].mxu0
        %v2010 = vadd.f32 0.0, %v2009
        %v2011 = vpop.f32.mrb[0].mxu0
        %v2012 = vpop.f32.mrb[0].mxu0
        %v2013 = vadd.f32 0.0, %v2012
        %v2014 = vpop.f32.mrb[0].mxu0
        %2015 = vmatprep.mubr.bf16.mxu0 0
        %2016 = vmatmul.mubr.bf16.gmra.mrb[0].mxu0 %v536
        %v2017 = vpop.f32.mrb[0].mxu0
        %v2018 = vadd.f32 0.0, %v2017
        %v2019 = vpop.f32.mrb[0].mxu0
        %v2020 = vpop.f32.mrb[0].mxu0
        %v2021 = vadd.f32 0.0, %v2020
        %v2022 = vpop.f32.mrb[0].mxu0
        %2023 = vmatprep.mubr.bf16.mxu0 0
        %2024 = vmatmul.mubr.bf16.gmra.mrb[0].mxu0 %v537
        %v2025 = vpop.f32.mrb[0].mxu0
        %v2026 = vadd.f32 0.0, %v2025
        %v2027 = vpop.f32.mrb[0].mxu0
        %v2028 = vpop.f32.mrb[0].mxu0
        %v2029 = vadd.f32 0.0, %v2028
        %v2030 = vpop.f32.mrb[0].mxu0
        %2031 = vmatprep.mubr.bf16.mxu0 0
        %2032 = vmatmul.mubr.bf16.gmra.mrb[0].mxu0 %v538
        %v2033 = vpop.f32.mrb[0].mxu0
        %v2034 = vadd.f32 0.0, %v2033
        %v2035 = vpop.f32.mrb[0].mxu0
        %v2036 = vpop.f32.mrb[0].mxu0
        %v2037 = vadd.f32 0.0, %v2036
        %v2038 = vpop.f32.mrb[0].mxu0
        %2039 = vmatprep.mubr.bf16.mxu0 0
        %2040 = vmatmul.mubr.bf16.gmra.mrb[0].mxu0 %v848
        %v2041 = vpop.f32.mrb[0].mxu0
        %v2042 = vadd.f32 0.0, %v2041
        %v2043 = vpop.f32.mrb[0].mxu0
        %v2044 = vpop.f32.mrb[0].mxu0
        %v2045 = vadd.f32 0.0, %v2044
        %v2046 = vpop.f32.mrb[0].mxu0
        %2047 = vdwg.mxu0
        %v2048 = vadd.f32 %v1824, %v1986
        %v2049 = vadd.f32 %v1827, %v1989
        %v2050 = vadd.f32 %v1832, %v1994
        %v2051 = vadd.f32 %v1835, %v1997
        %v2052 = vadd.f32 %v1840, %v2002
        %v2053 = vadd.f32 %v1843, %v2005
        %v2054 = vadd.f32 %v1848, %v2010
        %v2055 = vadd.f32 %v1851, %v2013
        %v2056 = vadd.f32 %v1856, %v2018
        %v2057 = vadd.f32 %v1859, %v2021
        %v2058 = vadd.f32 %v1864, %v2026
        %v2059 = vadd.f32 %v1867, %v2029
        %v2060 = vadd.f32 %v1872, %v2034
        %v2061 = vadd.f32 %v1875, %v2037
        %v2062 = vadd.f32 %v1880, %v2042
        %v2063 = vadd.f32 %v1883, %v2045
        %vm2080 = vcmask 1045504
        %v2081 = vrot.slane %v2048, 2
        %v2082 = vrot.slane %v2049, 2
        %v2083 = vsel %vm2080, %v2081, %v2082
        %v2084 = vrot.slane %v2050, 2
        %v2085 = vrot.slane %v2051, 2
        %v2086 = vsel %vm2080, %v2084, %v2085
        %v2087 = vrot.slane %v2052, 2
        %v2088 = vrot.slane %v2053, 2
        %v2089 = vsel %vm2080, %v2087, %v2088
        %v2090 = vrot.slane %v2054, 2
        %v2091 = vrot.slane %v2055, 2
        %v2092 = vsel %vm2080, %v2090, %v2091
        %v2093 = vrot.slane %v2056, 2
        %v2094 = vrot.slane %v2057, 2
        %v2095 = vsel %vm2080, %v2093, %v2094
        %v2096 = vrot.slane %v2058, 2
        %v2097 = vrot.slane %v2059, 2
        %v2098 = vsel %vm2080, %v2096, %v2097
        %v2099 = vrot.slane %v2060, 2
        %v2100 = vrot.slane %v2061, 2
        %v2101 = vsel %vm2080, %v2099, %v2100
        %v2102 = vrot.slane %v2062, 2
        %v2103 = vrot.slane %v2063, 2
        %v2104 = vsel %vm2080, %v2102, %v2103
        %v2113 = vadd.f32 %v1554, %v2083
        %v2114 = vadd.f32 %v1555, %v2086
        %v2115 = vadd.f32 %v1556, %v2089
        %v2116 = vadd.f32 %v1557, %v2092
        %v2117 = vadd.f32 %v1558, %v2095
        %v2118 = vadd.f32 %v1559, %v2098
        %v2119 = vadd.f32 %v1560, %v2101
        %v2120 = vadd.f32 %v1561, %v2104
        %v2121 = vld [vmem:[%s4] sm:$0x1]
        %v2123 = vlaneseq
        %v2124 = vshrl.u32 %v2123, 7
        %v2125 = vsub.s32 0, %v2124
        %v2126 = vrot.slane %v2121, %v2125
        %v2128 = vmul.f32 %v2113, %v2126
        %v2129 = vmul.f32 %v2114, %v2126
        %v2130 = vmul.f32 %v2115, %v2126
        %v2131 = vmul.f32 %v2116, %v2126
        %v2132 = vmul.f32 %v2117, %v2126
        %v2133 = vmul.f32 %v2118, %v2126
        %v2134 = vmul.f32 %v2119, %v2126
        %v2135 = vmul.f32 %v2120, %v2126
        %v2136 = vld [vmem:[%s5] sm:$0x1]
        %v2138 = vlaneseq
        %v2139 = vshrl.u32 %v2138, 7
        %v2140 = vsub.s32 0, %v2139
        %v2141 = vrot.slane %v2136, %v2140
        %v2143 = vadd.f32 %v2128, %v2141
        %v2144 = vadd.f32 %v2129, %v2141
        %v2145 = vadd.f32 %v2130, %v2141
        %v2146 = vadd.f32 %v2131, %v2141
        %v2147 = vadd.f32 %v2132, %v2141
        %v2148 = vadd.f32 %v2133, %v2141
        %v2149 = vadd.f32 %v2134, %v2141
        %v2150 = vadd.f32 %v2135, %v2141
        %v2151 = vmax.f32 %v2143, 0.0
        %v2152 = vmax.f32 %v2144, 0.0
        %v2153 = vmax.f32 %v2145, 0.0
        %v2154 = vmax.f32 %v2146, 0.0
        %v2155 = vmax.f32 %v2147, 0.0
        %v2156 = vmax.f32 %v2148, 0.0
        %v2157 = vmax.f32 %v2149, 0.0
        %v2158 = vmax.f32 %v2150, 0.0
        %v2159 = vpack.c.bf16 %v2151, %v2151
        %v2160 = vpack.c.bf16 %v2152, %v2152
        %v2161 = vpack.c.bf16 %v2153, %v2153
        %v2162 = vpack.c.bf16 %v2154, %v2154
        %v2163 = vpack.c.bf16 %v2155, %v2155
        %v2164 = vpack.c.bf16 %v2156, %v2156
        %v2165 = vpack.c.bf16 %v2157, %v2157
        %v2166 = vpack.c.bf16 %v2158, %v2158
        %2167 = vst [vmem:[%s431] sm:$0xf] %v2159
        %2168 = vst [vmem:[%s431 + $0x4] sm:$0xf] %v2160
        %2169 = vst [vmem:[%s431 + $0x8] sm:$0xf] %v2161
        %2170 = vst [vmem:[%s431 + $0xc] sm:$0xf] %v2162
        %2171 = vst [vmem:[%s431 + $0x10] sm:$0xf] %v2163
        %2172 = vst [vmem:[%s431 + $0x14] sm:$0xf] %v2164
        %2173 = vst [vmem:[%s431 + $0x18] sm:$0xf] %v2165
        %2174 = vst [vmem:[%s431 + $0x1c] sm:$0xf] %v2166
        %s2175 = smul.u32 8, %s23
        %p2176 = scmp.lt.s32.totalorder %s22, 1
        %s2177 = scalar_select %p2176, %s22, 1
        %p2178 = scmp.lt.s32.totalorder %s2175, 7
        %s2179 = scalar_select %p2178, %s2175, 7
        %s2180 = smul.addr %s2177, 8
        %s2181 = sadd.s32 %s2179, %s2180
        %s2182 = smul.addr %s2181, 4
        %s2183 = scalar_lea.vmem %s6, %s2182
        // Predicated region
        $region49: #{_lambda_.5} parent=43 // pred_check
          %p2184 = pneg %p213
        $region50: #{_lambda_.5} parent=43 // pred_check_branch
          %2186 = sbr.rel (%p2184) target = $region52
        $region51: #{_lambda_.5} parent=43 // pred_region
          %s2187 = smul.u32 8, %s23
        $region52: #{_lambda_.5} parent=43 // pred_fallthru
          _
      $region44: #{_lambda_.5} parent=5 // pred_fallthru
        _
      %p2188 = scmp.le.s32.totalorder 2, %s13
      // Predicated region
      $region53: #{_lambda_.5} parent=5 // pred_check
        %p2189 = pneg %p2188
      $region54: #{_lambda_.5} parent=5 // pred_check_branch
        %2191 = sbr.rel (%p2189) target = $region56
      $region55: #{_lambda_.5} parent=5 // pred_region
        %s2192 = ssub.s32 %s13, 2
        // Predicated region
        $region57: #{_lambda_.5} parent=55 // pred_check
          %p2193 = pneg %p219
        $region58: #{_lambda_.5} parent=55 // pred_check_branch
          %2195 = sbr.rel (%p2193) target = $region60
        $region59: #{_lambda_.5} parent=55 // pred_region
          %s2196 = smul.u32 8, %s25
          %p2197 = scmp.lt.s32.totalorder %s24, 1
          %s2198 = scalar_select %p2197, %s24, 1
          %p2199 = scmp.lt.s32.totalorder %s2196, 7
          %s2200 = scalar_select %p2199, %s2196, 7
          %s2201 = smul.addr %s2198, 8
          %s2202 = sadd.s32 %s2200, %s2201
          %s2203 = smul.addr %s2202, 4
          %s2204 = scalar_lea.vmem %s6, %s2203
        $region60: #{_lambda_.5} parent=55 // pred_fallthru
          _
      $region56: #{_lambda_.5} parent=5 // pred_fallthru
        _
    $region6: #{_lambda_.5} parent=1 // loop_footer
      %s17 = sadd.s32 1, %s13
    $region7: #{_lambda_.5} parent=1 // loop_footer_branch
      %12 = sbr.rel target = $region3
    $region8: #{_lambda_.5} parent=1 // loop_exit
      _
    %2205 = vsyncpa [#allocation3], 1
    %s2206 = scalar_lea.sflag [#allocation3], 1
    %2207 = vsyncpa %s2206, 1

</llo_original>
